<compile_context>
chip_gen: v7x
topology: tpu7x:2x2x1
jax: 0.10.0
libtpu: 0.0.40
codegen_flags: <defaults>
</compile_context>

<pallas_src>
import functools

import jax
import jax.numpy as jnp
from jax.experimental import pallas as pl
from jax.experimental.pallas import tpu as pltpu  # noqa: F401  (TPU backend)

LANES = 128  # lane-dense padded width for all channel / feature axes


def _pad_lanes(a, axis, size=LANES):
    pad = [(0, 0)] * a.ndim
    pad[axis] = (0, size - a.shape[axis])
    return jnp.pad(a, pad)


# ----------------------------------------------------------------------------
# Kernel A: conv1 matmul + bias + ReLU + 2x2 max-pool (fused)
# ----------------------------------------------------------------------------
def _conv1_pool_kernel(q0_ref, q1_ref, q2_ref, q3_ref, w_ref, b_ref, o_ref):
    w = w_ref[...]
    b = b_ref[...]

    def conv(q_ref):
        y = jnp.dot(q_ref[...], w, preferred_element_type=jnp.float32)
        return jnp.maximum(y + b, 0.0)

    o_ref[...] = jnp.maximum(jnp.maximum(conv(q0_ref), conv(q1_ref)),
                             jnp.maximum(conv(q2_ref), conv(q3_ref)))


def conv1_pool(patches4, w1, b1):
    """patches4: four (B*14*14, 25) im2col matrices (one per pool position)."""
    m, k = patches4[0].shape
    spec_p = pl.BlockSpec((m, k), lambda: (0, 0))
    return pl.pallas_call(
        _conv1_pool_kernel,
        out_shape=jax.ShapeDtypeStruct((m, LANES), jnp.float32),
        in_specs=[spec_p, spec_p, spec_p, spec_p,
                  pl.BlockSpec((k, LANES), lambda: (0, 0)),
                  pl.BlockSpec((1, LANES), lambda: (0, 0))],
        out_specs=pl.BlockSpec((m, LANES), lambda: (0, 0)),
        cost_estimate=pl.CostEstimate(
            flops=4 * 2 * m * k * LANES,
            transcendentals=0,
            bytes_accessed=4 * (4 * m * k + k * LANES + LANES + m * LANES)),
    )(*patches4, w1, b1)


# ----------------------------------------------------------------------------
# Kernel B: conv2+pool2 + fc1 + fc2 + fc3 + masked log_softmax (fused)
# ----------------------------------------------------------------------------
def _conv2_fc_kernel(q0_ref, q1_ref, q2_ref, q3_ref,
                     w2_ref, b2_ref, wf1_ref, bf1_ref,
                     wf2_ref, bf2_ref, wf3_ref, bf3_ref,
                     pool2_ref, h1_ref, h2_ref, logits_ref, logp_ref,
                     *, batch, num_pos, num_classes):
    w2 = w2_ref[...]
    b2 = b2_ref[...]

    def conv(q_ref):
        y = jnp.dot(q_ref[...], w2, preferred_element_type=jnp.float32)
        return jnp.maximum(y + b2, 0.0)

    # conv2 + ReLU evaluated at the four pool-window positions, then max.
    pooled2 = jnp.maximum(jnp.maximum(conv(q0_ref), conv(q1_ref)),
                          jnp.maximum(conv(q2_ref), conv(q3_ref)))
    pool2_ref[...] = pooled2                      # rows = (p, b), 128 lanes

    # fc1: y[b, o] = sum_{p, c} pooled2[p*batch + b, c] * Wf1[p, c, o]
    acc = jnp.zeros((batch, LANES), jnp.float32)
    for p in range(num_pos):                      # static unrolled loop
        blk = pool2_ref[pl.ds(p * batch, batch), :]          # (batch, 128)
        acc = acc + jnp.dot(blk, wf1_ref[p],
                            preferred_element_type=jnp.float32)
    h1 = jnp.maximum(acc + bf1_ref[...], 0.0)
    h1_ref[...] = h1

    h2 = jnp.maximum(
        jnp.dot(h1, wf2_ref[...], preferred_element_type=jnp.float32)
        + bf2_ref[...], 0.0)
    h2_ref[...] = h2

    logits = (jnp.dot(h2, wf3_ref[...], preferred_element_type=jnp.float32)
              + bf3_ref[...])
    logits_ref[...] = logits

    # masked log_softmax over the first `num_classes` lanes (rest is padding)
    col = jax.lax.broadcasted_iota(jnp.int32, logits.shape, 1)
    valid = col < num_classes
    neg = jnp.float32(-1e30)
    m = jnp.max(jnp.where(valid, logits, neg), axis=-1, keepdims=True)
    s = logits - m
    e = jnp.where(valid, jnp.exp(s), 0.0)
    lse = jnp.log(jnp.sum(e, axis=-1, keepdims=True))
    logp_ref[...] = s - lse


def conv2_fc_head(patches4, prepped, batch):
    m, k = patches4[0].shape                 # (25*B, 150)
    num_pos = m // batch                     # 25 spatial positions (5x5)
    spec_p = pl.BlockSpec((m, k), lambda: (0, 0))
    spec_w2 = pl.BlockSpec((k, LANES), lambda: (0, 0))
    spec_b = pl.BlockSpec((1, LANES), lambda: (0, 0))
    spec_wf1 = pl.BlockSpec((num_pos, LANES, LANES), lambda: (0, 0, 0))
    spec_wsq = pl.BlockSpec((LANES, LANES), lambda: (0, 0))
    spec_small = pl.BlockSpec((batch, LANES), lambda: (0, 0))

    kernel = functools.partial(_conv2_fc_kernel, batch=batch,
                               num_pos=num_pos, num_classes=10)
    out_shape = (
        jax.ShapeDtypeStruct((m, LANES), jnp.float32),       # pooled conv2
        jax.ShapeDtypeStruct((batch, LANES), jnp.float32),   # fc1
        jax.ShapeDtypeStruct((batch, LANES), jnp.float32),   # fc2
        jax.ShapeDtypeStruct((batch, LANES), jnp.float32),   # fc3 logits
        jax.ShapeDtypeStruct((batch, LANES), jnp.float32),   # log_softmax
    )
    out_specs = (pl.BlockSpec((m, LANES), lambda: (0, 0)),
                 spec_small, spec_small, spec_small, spec_small)
    flops = (4 * 2 * m * k * LANES
             + num_pos * 2 * batch * LANES * LANES
             + 2 * 2 * batch * LANES * LANES)
    byts = 4 * (4 * m * k + k * LANES + (num_pos + 2) * LANES * LANES
                + m * LANES + 10 * batch * LANES)
    return pl.pallas_call(
        kernel,
        out_shape=out_shape,
        in_specs=[spec_p, spec_p, spec_p, spec_p,
                  spec_w2, spec_b, spec_wf1, spec_b,
                  spec_wsq, spec_b, spec_wsq, spec_b],
        out_specs=out_specs,
        cost_estimate=pl.CostEstimate(flops=flops,
                                      transcendentals=batch * LANES,
                                      bytes_accessed=byts),
    )(patches4[0], patches4[1], patches4[2], patches4[3],
      prepped["conv2_w"], prepped["conv2_b"],
      prepped["fc1_w"], prepped["fc1_b"],
      prepped["fc2_w"], prepped["fc2_b"],
      prepped["fc3_w"], prepped["fc3_b"])


# ----------------------------------------------------------------------------
# XLA-side glue: im2col patch matrices (one per 2x2 pool-window position)
# ----------------------------------------------------------------------------
def _conv1_patches(x_pad, ey, ex, batch):
    # rows = (b, Y, X) with Y,X in 0..13 ; features = i*5 + j
    cols = []
    for i in range(5):
        for j in range(5):
            cols.append(x_pad[:, 0, ey + i: ey + i + 28: 2,
                              ex + j: ex + j + 28: 2])       # (B, 14, 14)
    pt = jnp.stack(cols, axis=-1)                            # (B, 14, 14, 25)
    return pt.reshape(batch * 14 * 14, 25)


def _conv2_patches(p1_nhwc, dy, dx, batch):
    # rows = (p = y*5+x, b) ; features = (i*5 + j)*6 + c
    cols = []
    for i in range(5):
        for j in range(5):
            cols.append(p1_nhwc[:, dy + i: dy + i + 9: 2,
                                dx + j: dx + j + 9: 2, :])   # (B, 5, 5, 6)
    pt = jnp.stack(cols, axis=3)                             # (B, 5, 5, 25, 6)
    pt = pt.reshape(batch, 25, 25 * 6)
    return pt.transpose(1, 0, 2).reshape(25 * batch, 25 * 6)


# ----------------------------------------------------------------------------
# Parameters
# ----------------------------------------------------------------------------
def init_params(key):
    ks = jax.random.split(key, 10)

    def unif(k, shape, fan_in):
        bound = 1.0 / jnp.sqrt(fan_in)
        return jax.random.uniform(k, shape, jnp.float32, -bound, bound)

    return {
        "conv1_w": unif(ks[0], (6, 1, 5, 5), 1 * 5 * 5),
        "conv1_b": unif(ks[1], (6,), 1 * 5 * 5),
        "conv2_w": unif(ks[2], (16, 6, 5, 5), 6 * 5 * 5),
        "conv2_b": unif(ks[3], (16,), 6 * 5 * 5),
        "fc1_w": unif(ks[4], (120, 400), 400),
        "fc1_b": unif(ks[5], (120,), 400),
        "fc2_w": unif(ks[6], (84, 120), 120),
        "fc2_b": unif(ks[7], (84,), 120),
        "fc3_w": unif(ks[8], (10, 84), 84),
        "fc3_b": unif(ks[9], (10,), 84),
    }


def prepare_params(params):
    """One-time (outside jit) conversion of PyTorch-layout params to K-major,
    128-lane zero-padded matmul operands (hoisted out of the hot path)."""
    p = {}
    # conv1 (6,1,5,5) -> (25, 128): row = i*5+j, col = out channel
    w1 = params["conv1_w"].transpose(2, 3, 1, 0).reshape(25, 6)
    p["conv1_w"] = _pad_lanes(w1, 1)
    p["conv1_b"] = _pad_lanes(params["conv1_b"].reshape(1, 6), 1)
    # conv2 (16,6,5,5) -> (150, 128): row = (i*5+j)*6 + c, col = out channel
    w2 = params["conv2_w"].transpose(2, 3, 1, 0).reshape(150, 16)
    p["conv2_w"] = _pad_lanes(w2, 1)
    p["conv2_b"] = _pad_lanes(params["conv2_b"].reshape(1, 16), 1)
    # fc1 (120,400) -> (25, 128, 128): [p][c, o] = fc1_w[o, c*25 + p]
    wf1 = params["fc1_w"].reshape(120, 16, 25).transpose(2, 1, 0)
    p["fc1_w"] = _pad_lanes(_pad_lanes(wf1, 1), 2)
    p["fc1_b"] = _pad_lanes(params["fc1_b"].reshape(1, 120), 1)
    # fc2 / fc3 -> K-major (128, 128)
    p["fc2_w"] = _pad_lanes(_pad_lanes(params["fc2_w"].T, 0), 1)
    p["fc2_b"] = _pad_lanes(params["fc2_b"].reshape(1, 84), 1)
    p["fc3_w"] = _pad_lanes(_pad_lanes(params["fc3_w"].T, 0), 1)
    p["fc3_b"] = _pad_lanes(params["fc3_b"].reshape(1, 10), 1)
    return p


# ----------------------------------------------------------------------------
# LeNet5 forward (two pallas_calls total)
# ----------------------------------------------------------------------------
def lenet5_forward(prepped, x):
    """x: (B, 1, 28, 28) float32 NCHW. Returns (log_probs, embeddings)."""
    batch = x.shape[0]
    embeddings = {}

    # stage 1: conv1 + ReLU + 2x2 maxpool -> (B, 6, 14, 14), one kernel
    x_pad = jnp.pad(x, ((0, 0), (0, 0), (2, 2), (2, 2)))     # (B, 1, 32, 32)
    patches1 = [_conv1_patches(x_pad, ey, ex, batch)
                for ey in (0, 1) for ex in (0, 1)]
    pooled1 = conv1_pool(patches1, prepped["conv1_w"], prepped["conv1_b"])
    p1_nhwc = pooled1[:, :6].reshape(batch, 14, 14, 6)
    embeddings["conv1"] = p1_nhwc.transpose(0, 3, 1, 2)      # (B, 6, 14, 14)

    # stage 2: conv2+pool + fc1 + fc2 + fc3 + log_softmax, one kernel
    patches2 = [_conv2_patches(p1_nhwc, dy, dx, batch)
                for dy in (0, 1) for dx in (0, 1)]
    pooled2, h1, h2, logits, logp = conv2_fc_head(patches2, prepped, batch)

    embeddings["conv2"] = (pooled2[:, :16].reshape(25, batch, 16)
                           .transpose(1, 2, 0).reshape(batch, 16, 5, 5))
    embeddings["fc1"] = h1[:, :120]
    embeddings["fc2"] = h2[:, :84]
    out = logits[:, :10]
    embeddings["out"] = out
    embeddings["fc3"] = out
    return logp[:, :10], embeddings


# ----------------------------------------------------------------------------
# Pure-JAX reference (for self-validation)
# ----------------------------------------------------------------------------
def lenet5_reference(params, x):
    dn = ("NCHW", "OIHW", "NCHW")
    y = jax.lax.conv_general_dilated(x, params["conv1_w"], (1, 1),
                                     ((2, 2), (2, 2)), dimension_numbers=dn)
    y = jnp.maximum(y + params["conv1_b"][None, :, None, None], 0.0)
    y = jax.lax.reduce_window(y, -jnp.inf, jax.lax.max,
                              (1, 1, 2, 2), (1, 1, 2, 2), "VALID")
    c1 = y
    y = jax.lax.conv_general_dilated(y, params["conv2_w"], (1, 1), "VALID",
                                     dimension_numbers=dn)
    y = jnp.maximum(y + params["conv2_b"][None, :, None, None], 0.0)
    y = jax.lax.reduce_window(y, -jnp.inf, jax.lax.max,
                              (1, 1, 2, 2), (1, 1, 2, 2), "VALID")
    c2 = y
    f = y.reshape(y.shape[0], -1)
    h1 = jnp.maximum(f @ params["fc1_w"].T + params["fc1_b"], 0.0)
    h2 = jnp.maximum(h1 @ params["fc2_w"].T + params["fc2_b"], 0.0)
    lg = h2 @ params["fc3_w"].T + params["fc3_b"]
    return jax.nn.log_softmax(lg, axis=1), c1, c2, h1, h2, lg


if __name__ == "__main__":
    key = jax.random.PRNGKey(0)
    pkey, xkey = jax.random.split(key)
    params = init_params(pkey)
    prepped = prepare_params(params)          # one-time layout prep (not jitted)

    # LeNet5's fc1 (16*5*5 inputs) implies 28x28 single-channel images.
    x = jax.random.normal(xkey, (2, 1, 28, 28), dtype=jnp.float32)

    logp, emb = jax.jit(lenet5_forward)(prepped, x)
    jax.block_until_ready(logp)
    jax.block_until_ready(emb)

    assert logp.shape == (2, 10)
    assert emb["conv1"].shape == (2, 6, 14, 14)
    assert emb["conv2"].shape == (2, 16, 5, 5)
    assert emb["fc1"].shape == (2, 120)
    assert emb["fc2"].shape == (2, 84)
    assert emb["fc3"].shape == (2, 10)
    assert bool(jnp.allclose(jnp.exp(logp).sum(axis=1), 1.0, atol=1e-4))

    # cross-check against a pure-JAX/XLA reference
    ref_logp, rc1, rc2, rh1, rh2, rlg = lenet5_reference(params, x)
    tol = dict(atol=5e-2, rtol=5e-2)
    assert bool(jnp.allclose(emb["conv1"], rc1, **tol))
    assert bool(jnp.allclose(emb["conv2"], rc2, **tol))
    assert bool(jnp.allclose(emb["fc1"], rh1, **tol))
    assert bool(jnp.allclose(emb["fc2"], rh2, **tol))
    assert bool(jnp.allclose(emb["fc3"], rlg, **tol))
    assert bool(jnp.allclose(logp, ref_logp, **tol))

    print("KERNEL_OK")
</pallas_src>

<mosaic_0001>
module attributes {stable_mosaic.version = 11 : i64} {
  func.func @_conv1_pool_kernel(%arg0: memref<392x25xf32, #tpu.memory_space<vmem>>, %arg1: memref<392x25xf32, #tpu.memory_space<vmem>>, %arg2: memref<392x25xf32, #tpu.memory_space<vmem>>, %arg3: memref<392x25xf32, #tpu.memory_space<vmem>>, %arg4: memref<25x128xf32, #tpu.memory_space<vmem>>, %arg5: memref<1x128xf32, #tpu.memory_space<vmem>>, %arg6: memref<392x128xf32, #tpu.memory_space<vmem>>) attributes {dimension_semantics = [], scalar_prefetch = 0 : i64, scratch_operands = 0 : i64, tpu.core_type = #tpu.core_type<tc>} {
    %c0 = arith.constant 0 : index
    %c0_0 = arith.constant 0 : index
    %0 = vector.load %arg4[%c0, %c0_0] : memref<25x128xf32, #tpu.memory_space<vmem>>, vector<25x128xf32>
    %c0_1 = arith.constant 0 : index
    %c0_2 = arith.constant 0 : index
    %1 = vector.load %arg5[%c0_1, %c0_2] : memref<1x128xf32, #tpu.memory_space<vmem>>, vector<1x128xf32>
    %c0_3 = arith.constant 0 : index
    %c0_4 = arith.constant 0 : index
    %2 = vector.load %arg0[%c0_3, %c0_4] : memref<392x25xf32, #tpu.memory_space<vmem>>, vector<392x25xf32>
    %cst = arith.constant dense<0.000000e+00> : vector<392x128xf32>
    %3 = tpu.matmul %2, %0, %cst {dimension_numbers = #tpu.dot_dimension_numbers<[1], [0], [0], [1], [0, 0, 1, 1], [], []>} : vector<392x25xf32>, vector<25x128xf32>, vector<392x128xf32> -> vector<392x128xf32>
    %4 = vector.broadcast %1 : vector<1x128xf32> to vector<392x128xf32>
    %5 = arith.addf %3, %4 : vector<392x128xf32>
    %cst_5 = arith.constant 0.000000e+00 : f32
    %6 = vector.broadcast %cst_5 : f32 to vector<392x128xf32>
    %7 = arith.maximumf %5, %6 : vector<392x128xf32>
    %c0_6 = arith.constant 0 : index
    %c0_7 = arith.constant 0 : index
    %8 = vector.load %arg1[%c0_6, %c0_7] : memref<392x25xf32, #tpu.memory_space<vmem>>, vector<392x25xf32>
    %cst_8 = arith.constant dense<0.000000e+00> : vector<392x128xf32>
    %9 = tpu.matmul %8, %0, %cst_8 {dimension_numbers = #tpu.dot_dimension_numbers<[1], [0], [0], [1], [0, 0, 1, 1], [], []>} : vector<392x25xf32>, vector<25x128xf32>, vector<392x128xf32> -> vector<392x128xf32>
    %10 = vector.broadcast %1 : vector<1x128xf32> to vector<392x128xf32>
    %11 = arith.addf %9, %10 : vector<392x128xf32>
    %cst_9 = arith.constant 0.000000e+00 : f32
    %12 = vector.broadcast %cst_9 : f32 to vector<392x128xf32>
    %13 = arith.maximumf %11, %12 : vector<392x128xf32>
    %14 = arith.maximumf %7, %13 : vector<392x128xf32>
    %c0_10 = arith.constant 0 : index
    %c0_11 = arith.constant 0 : index
    %15 = vector.load %arg2[%c0_10, %c0_11] : memref<392x25xf32, #tpu.memory_space<vmem>>, vector<392x25xf32>
    %cst_12 = arith.constant dense<0.000000e+00> : vector<392x128xf32>
    %16 = tpu.matmul %15, %0, %cst_12 {dimension_numbers = #tpu.dot_dimension_numbers<[1], [0], [0], [1], [0, 0, 1, 1], [], []>} : vector<392x25xf32>, vector<25x128xf32>, vector<392x128xf32> -> vector<392x128xf32>
    %17 = vector.broadcast %1 : vector<1x128xf32> to vector<392x128xf32>
    %18 = arith.addf %16, %17 : vector<392x128xf32>
    %cst_13 = arith.constant 0.000000e+00 : f32
    %19 = vector.broadcast %cst_13 : f32 to vector<392x128xf32>
    %20 = arith.maximumf %18, %19 : vector<392x128xf32>
    %c0_14 = arith.constant 0 : index
    %c0_15 = arith.constant 0 : index
    %21 = vector.load %arg3[%c0_14, %c0_15] : memref<392x25xf32, #tpu.memory_space<vmem>>, vector<392x25xf32>
    %cst_16 = arith.constant dense<0.000000e+00> : vector<392x128xf32>
    %22 = tpu.matmul %21, %0, %cst_16 {dimension_numbers = #tpu.dot_dimension_numbers<[1], [0], [0], [1], [0, 0, 1, 1], [], []>} : vector<392x25xf32>, vector<25x128xf32>, vector<392x128xf32> -> vector<392x128xf32>
    %23 = vector.broadcast %1 : vector<1x128xf32> to vector<392x128xf32>
    %24 = arith.addf %22, %23 : vector<392x128xf32>
    %cst_17 = arith.constant 0.000000e+00 : f32
    %25 = vector.broadcast %cst_17 : f32 to vector<392x128xf32>
    %26 = arith.maximumf %24, %25 : vector<392x128xf32>
    %27 = arith.maximumf %20, %26 : vector<392x128xf32>
    %28 = arith.maximumf %14, %27 : vector<392x128xf32>
    %c0_18 = arith.constant 0 : index
    %c0_19 = arith.constant 0 : index
    %29 = vector.load %arg6[%c0_18, %c0_19] : memref<392x128xf32, #tpu.memory_space<vmem>>, vector<392x128xf32>
    tpu.vector_store %arg6[%c0_18, %c0_19], %28 {strides = array<i32>} : memref<392x128xf32, #tpu.memory_space<vmem>>, vector<392x128xf32>,
    return
  }
}

module attributes {stable_mosaic.version = 11 : i64} {
  func.func @_conv2_fc_kernel(%arg0: memref<50x150xf32, #tpu.memory_space<vmem>>, %arg1: memref<50x150xf32, #tpu.memory_space<vmem>>, %arg2: memref<50x150xf32, #tpu.memory_space<vmem>>, %arg3: memref<50x150xf32, #tpu.memory_space<vmem>>, %arg4: memref<150x128xf32, #tpu.memory_space<vmem>>, %arg5: memref<1x128xf32, #tpu.memory_space<vmem>>, %arg6: memref<25x128x128xf32, #tpu.memory_space<vmem>>, %arg7: memref<1x128xf32, #tpu.memory_space<vmem>>, %arg8: memref<128x128xf32, #tpu.memory_space<vmem>>, %arg9: memref<1x128xf32, #tpu.memory_space<vmem>>, %arg10: memref<128x128xf32, #tpu.memory_space<vmem>>, %arg11: memref<1x128xf32, #tpu.memory_space<vmem>>, %arg12: memref<50x128xf32, #tpu.memory_space<vmem>>, %arg13: memref<2x128xf32, #tpu.memory_space<vmem>>, %arg14: memref<2x128xf32, #tpu.memory_space<vmem>>, %arg15: memref<2x128xf32, #tpu.memory_space<vmem>>, %arg16: memref<2x128xf32, #tpu.memory_space<vmem>>) attributes {dimension_semantics = [], scalar_prefetch = 0 : i64, scratch_operands = 0 : i64, tpu.core_type = #tpu.core_type<tc>} {
    %c0 = arith.constant 0 : index
    %c0_0 = arith.constant 0 : index
    %0 = vector.load %arg4[%c0, %c0_0] : memref<150x128xf32, #tpu.memory_space<vmem>>, vector<150x128xf32>
    %c0_1 = arith.constant 0 : index
    %c0_2 = arith.constant 0 : index
    %1 = vector.load %arg5[%c0_1, %c0_2] : memref<1x128xf32, #tpu.memory_space<vmem>>, vector<1x128xf32>
    %c0_3 = arith.constant 0 : index
    %c0_4 = arith.constant 0 : index
    %2 = vector.load %arg0[%c0_3, %c0_4] : memref<50x150xf32, #tpu.memory_space<vmem>>, vector<50x150xf32>
    %cst = arith.constant dense<0.000000e+00> : vector<50x128xf32>
    %3 = tpu.matmul %2, %0, %cst {dimension_numbers = #tpu.dot_dimension_numbers<[1], [0], [0], [1], [0, 0, 1, 1], [], []>} : vector<50x150xf32>, vector<150x128xf32>, vector<50x128xf32> -> vector<50x128xf32>
    %4 = vector.broadcast %1 : vector<1x128xf32> to vector<50x128xf32>
    %5 = arith.addf %3, %4 : vector<50x128xf32>
    %cst_5 = arith.constant 0.000000e+00 : f32
    %6 = vector.broadcast %cst_5 : f32 to vector<50x128xf32>
    %7 = arith.maximumf %5, %6 : vector<50x128xf32>
    %c0_6 = arith.constant 0 : index
    %c0_7 = arith.constant 0 : index
    %8 = vector.load %arg1[%c0_6, %c0_7] : memref<50x150xf32, #tpu.memory_space<vmem>>, vector<50x150xf32>
    %cst_8 = arith.constant dense<0.000000e+00> : vector<50x128xf32>
    %9 = tpu.matmul %8, %0, %cst_8 {dimension_numbers = #tpu.dot_dimension_numbers<[1], [0], [0], [1], [0, 0, 1, 1], [], []>} : vector<50x150xf32>, vector<150x128xf32>, vector<50x128xf32> -> vector<50x128xf32>
    %10 = vector.broadcast %1 : vector<1x128xf32> to vector<50x128xf32>
    %11 = arith.addf %9, %10 : vector<50x128xf32>
    %cst_9 = arith.constant 0.000000e+00 : f32
    %12 = vector.broadcast %cst_9 : f32 to vector<50x128xf32>
    %13 = arith.maximumf %11, %12 : vector<50x128xf32>
    %14 = arith.maximumf %7, %13 : vector<50x128xf32>
    %c0_10 = arith.constant 0 : index
    %c0_11 = arith.constant 0 : index
    %15 = vector.load %arg2[%c0_10, %c0_11] : memref<50x150xf32, #tpu.memory_space<vmem>>, vector<50x150xf32>
    %cst_12 = arith.constant dense<0.000000e+00> : vector<50x128xf32>
    %16 = tpu.matmul %15, %0, %cst_12 {dimension_numbers = #tpu.dot_dimension_numbers<[1], [0], [0], [1], [0, 0, 1, 1], [], []>} : vector<50x150xf32>, vector<150x128xf32>, vector<50x128xf32> -> vector<50x128xf32>
    %17 = vector.broadcast %1 : vector<1x128xf32> to vector<50x128xf32>
    %18 = arith.addf %16, %17 : vector<50x128xf32>
    %cst_13 = arith.constant 0.000000e+00 : f32
    %19 = vector.broadcast %cst_13 : f32 to vector<50x128xf32>
    %20 = arith.maximumf %18, %19 : vector<50x128xf32>
    %c0_14 = arith.constant 0 : index
    %c0_15 = arith.constant 0 : index
    %21 = vector.load %arg3[%c0_14, %c0_15] : memref<50x150xf32, #tpu.memory_space<vmem>>, vector<50x150xf32>
    %cst_16 = arith.constant dense<0.000000e+00> : vector<50x128xf32>
    %22 = tpu.matmul %21, %0, %cst_16 {dimension_numbers = #tpu.dot_dimension_numbers<[1], [0], [0], [1], [0, 0, 1, 1], [], []>} : vector<50x150xf32>, vector<150x128xf32>, vector<50x128xf32> -> vector<50x128xf32>
    %23 = vector.broadcast %1 : vector<1x128xf32> to vector<50x128xf32>
    %24 = arith.addf %22, %23 : vector<50x128xf32>
    %cst_17 = arith.constant 0.000000e+00 : f32
    %25 = vector.broadcast %cst_17 : f32 to vector<50x128xf32>
    %26 = arith.maximumf %24, %25 : vector<50x128xf32>
    %27 = arith.maximumf %20, %26 : vector<50x128xf32>
    %28 = arith.maximumf %14, %27 : vector<50x128xf32>
    %c0_18 = arith.constant 0 : index
    %c0_19 = arith.constant 0 : index
    %29 = vector.load %arg12[%c0_18, %c0_19] : memref<50x128xf32, #tpu.memory_space<vmem>>, vector<50x128xf32>
    tpu.vector_store %arg12[%c0_18, %c0_19], %28 {strides = array<i32>} : memref<50x128xf32, #tpu.memory_space<vmem>>, vector<50x128xf32>,
    %cst_20 = arith.constant 0.000000e+00 : f32
    %30 = vector.broadcast %cst_20 : f32 to vector<2x128xf32>
    %c0_21 = arith.constant 0 : index
    %c0_22 = arith.constant 0 : index
    %31 = vector.load %arg12[%c0_21, %c0_22] : memref<50x128xf32, #tpu.memory_space<vmem>>, vector<2x128xf32>
    %c0_23 = arith.constant 0 : index
    %c0_24 = arith.constant 0 : index
    %c0_25 = arith.constant 0 : index
    %32 = vector.load %arg6[%c0_23, %c0_24, %c0_25] : memref<25x128x128xf32, #tpu.memory_space<vmem>>, vector<1x128x128xf32>
    %33 = vector.shape_cast %32 : vector<1x128x128xf32> to vector<128x128xf32>
    %cst_26 = arith.constant dense<0.000000e+00> : vector<2x128xf32>
    %34 = tpu.matmul %31, %33, %cst_26 {dimension_numbers = #tpu.dot_dimension_numbers<[1], [0], [0], [1], [0, 0, 1, 1], [], []>} : vector<2x128xf32>, vector<128x128xf32>, vector<2x128xf32> -> vector<2x128xf32>
    %35 = arith.addf %30, %34 : vector<2x128xf32>
    %c2 = arith.constant 2 : index
    %c0_27 = arith.constant 0 : index
    %36 = vector.load %arg12[%c2, %c0_27] : memref<50x128xf32, #tpu.memory_space<vmem>>, vector<2x128xf32>
    %c1 = arith.constant 1 : index
    %c0_28 = arith.constant 0 : index
    %c0_29 = arith.constant 0 : index
    %37 = vector.load %arg6[%c1, %c0_28, %c0_29] : memref<25x128x128xf32, #tpu.memory_space<vmem>>, vector<1x128x128xf32>
    %38 = vector.shape_cast %37 : vector<1x128x128xf32> to vector<128x128xf32>
    %cst_30 = arith.constant dense<0.000000e+00> : vector<2x128xf32>
    %39 = tpu.matmul %36, %38, %cst_30 {dimension_numbers = #tpu.dot_dimension_numbers<[1], [0], [0], [1], [0, 0, 1, 1], [], []>} : vector<2x128xf32>, vector<128x128xf32>, vector<2x128xf32> -> vector<2x128xf32>
    %40 = arith.addf %35, %39 : vector<2x128xf32>
    %c4 = arith.constant 4 : index
    %c0_31 = arith.constant 0 : index
    %41 = vector.load %arg12[%c4, %c0_31] : memref<50x128xf32, #tpu.memory_space<vmem>>, vector<2x128xf32>
    %c2_32 = arith.constant 2 : index
    %c0_33 = arith.constant 0 : index
    %c0_34 = arith.constant 0 : index
    %42 = vector.load %arg6[%c2_32, %c0_33, %c0_34] : memref<25x128x128xf32, #tpu.memory_space<vmem>>, vector<1x128x128xf32>
    %43 = vector.shape_cast %42 : vector<1x128x128xf32> to vector<128x128xf32>
    %cst_35 = arith.constant dense<0.000000e+00> : vector<2x128xf32>
    %44 = tpu.matmul %41, %43, %cst_35 {dimension_numbers = #tpu.dot_dimension_numbers<[1], [0], [0], [1], [0, 0, 1, 1], [], []>} : vector<2x128xf32>, vector<128x128xf32>, vector<2x128xf32> -> vector<2x128xf32>
    %45 = arith.addf %40, %44 : vector<2x128xf32>
    %c6 = arith.constant 6 : index
    %c0_36 = arith.constant 0 : index
    %46 = vector.load %arg12[%c6, %c0_36] : memref<50x128xf32, #tpu.memory_space<vmem>>, vector<2x128xf32>
    %c3 = arith.constant 3 : index
    %c0_37 = arith.constant 0 : index
    %c0_38 = arith.constant 0 : index
    %47 = vector.load %arg6[%c3, %c0_37, %c0_38] : memref<25x128x128xf32, #tpu.memory_space<vmem>>, vector<1x128x128xf32>
    %48 = vector.shape_cast %47 : vector<1x128x128xf32> to vector<128x128xf32>
    %cst_39 = arith.constant dense<0.000000e+00> : vector<2x128xf32>
    %49 = tpu.matmul %46, %48, %cst_39 {dimension_numbers = #tpu.dot_dimension_numbers<[1], [0], [0], [1], [0, 0, 1, 1], [], []>} : vector<2x128xf32>, vector<128x128xf32>, vector<2x128xf32> -> vector<2x128xf32>
    %50 = arith.addf %45, %49 : vector<2x128xf32>
    %c8 = arith.constant 8 : index
    %c0_40 = arith.constant 0 : index
    %51 = vector.load %arg12[%c8, %c0_40] : memref<50x128xf32, #tpu.memory_space<vmem>>, vector<2x128xf32>
    %c4_41 = arith.constant 4 : index
    %c0_42 = arith.constant 0 : index
    %c0_43 = arith.constant 0 : index
    %52 = vector.load %arg6[%c4_41, %c0_42, %c0_43] : memref<25x128x128xf32, #tpu.memory_space<vmem>>, vector<1x128x128xf32>
    %53 = vector.shape_cast %52 : vector<1x128x128xf32> to vector<128x128xf32>
    %cst_44 = arith.constant dense<0.000000e+00> : vector<2x128xf32>
    %54 = tpu.matmul %51, %53, %cst_44 {dimension_numbers = #tpu.dot_dimension_numbers<[1], [0], [0], [1], [0, 0, 1, 1], [], []>} : vector<2x128xf32>, vector<128x128xf32>, vector<2x128xf32> -> vector<2x128xf32>
    %55 = arith.addf %50, %54 : vector<2x128xf32>
    %c10 = arith.constant 10 : index
    %c0_45 = arith.constant 0 : index
    %56 = vector.load %arg12[%c10, %c0_45] : memref<50x128xf32, #tpu.memory_space<vmem>>, vector<2x128xf32>
    %c5 = arith.constant 5 : index
    %c0_46 = arith.constant 0 : index
    %c0_47 = arith.constant 0 : index
    %57 = vector.load %arg6[%c5, %c0_46, %c0_47] : memref<25x128x128xf32, #tpu.memory_space<vmem>>, vector<1x128x128xf32>
    %58 = vector.shape_cast %57 : vector<1x128x128xf32> to vector<128x128xf32>
    %cst_48 = arith.constant dense<0.000000e+00> : vector<2x128xf32>
    %59 = tpu.matmul %56, %58, %cst_48 {dimension_numbers = #tpu.dot_dimension_numbers<[1], [0], [0], [1], [0, 0, 1, 1], [], []>} : vector<2x128xf32>, vector<128x128xf32>, vector<2x128xf32> -> vector<2x128xf32>
    %60 = arith.addf %55, %59 : vector<2x128xf32>
    %c12 = arith.constant 12 : index
    %c0_49 = arith.constant 0 : index
    %61 = vector.load %arg12[%c12, %c0_49] : memref<50x128xf32, #tpu.memory_space<vmem>>, vector<2x128xf32>
    %c6_50 = arith.constant 6 : index
    %c0_51 = arith.constant 0 : index
    %c0_52 = arith.constant 0 : index
    %62 = vector.load %arg6[%c6_50, %c0_51, %c0_52] : memref<25x128x128xf32, #tpu.memory_space<vmem>>, vector<1x128x128xf32>
    %63 = vector.shape_cast %62 : vector<1x128x128xf32> to vector<128x128xf32>
    %cst_53 = arith.constant dense<0.000000e+00> : vector<2x128xf32>
    %64 = tpu.matmul %61, %63, %cst_53 {dimension_numbers = #tpu.dot_dimension_numbers<[1], [0], [0], [1], [0, 0, 1, 1], [], []>} : vector<2x128xf32>, vector<128x128xf32>, vector<2x128xf32> -> vector<2x128xf32>
    %65 = arith.addf %60, %64 : vector<2x128xf32>
    %c14 = arith.constant 14 : index
    %c0_54 = arith.constant 0 : index
    %66 = vector.load %arg12[%c14, %c0_54] : memref<50x128xf32, #tpu.memory_space<vmem>>, vector<2x128xf32>
    %c7 = arith.constant 7 : index
    %c0_55 = arith.constant 0 : index
    %c0_56 = arith.constant 0 : index
    %67 = vector.load %arg6[%c7, %c0_55, %c0_56] : memref<25x128x128xf32, #tpu.memory_space<vmem>>, vector<1x128x128xf32>
    %68 = vector.shape_cast %67 : vector<1x128x128xf32> to vector<128x128xf32>
    %cst_57 = arith.constant dense<0.000000e+00> : vector<2x128xf32>
    %69 = tpu.matmul %66, %68, %cst_57 {dimension_numbers = #tpu.dot_dimension_numbers<[1], [0], [0], [1], [0, 0, 1, 1], [], []>} : vector<2x128xf32>, vector<128x128xf32>, vector<2x128xf32> -> vector<2x128xf32>
    %70 = arith.addf %65, %69 : vector<2x128xf32>
    %c16 = arith.constant 16 : index
    %c0_58 = arith.constant 0 : index
    %71 = vector.load %arg12[%c16, %c0_58] : memref<50x128xf32, #tpu.memory_space<vmem>>, vector<2x128xf32>
    %c8_59 = arith.constant 8 : index
    %c0_60 = arith.constant 0 : index
    %c0_61 = arith.constant 0 : index
    %72 = vector.load %arg6[%c8_59, %c0_60, %c0_61] : memref<25x128x128xf32, #tpu.memory_space<vmem>>, vector<1x128x128xf32>
    %73 = vector.shape_cast %72 : vector<1x128x128xf32> to vector<128x128xf32>
    %cst_62 = arith.constant dense<0.000000e+00> : vector<2x128xf32>
    %74 = tpu.matmul %71, %73, %cst_62 {dimension_numbers = #tpu.dot_dimension_numbers<[1], [0], [0], [1], [0, 0, 1, 1], [], []>} : vector<2x128xf32>, vector<128x128xf32>, vector<2x128xf32> -> vector<2x128xf32>
    %75 = arith.addf %70, %74 : vector<2x128xf32>
    %c18 = arith.constant 18 : index
    %c0_63 = arith.constant 0 : index
    %76 = vector.load %arg12[%c18, %c0_63] : memref<50x128xf32, #tpu.memory_space<vmem>>, vector<2x128xf32>
    %c9 = arith.constant 9 : index
    %c0_64 = arith.constant 0 : index
    %c0_65 = arith.constant 0 : index
    %77 = vector.load %arg6[%c9, %c0_64, %c0_65] : memref<25x128x128xf32, #tpu.memory_space<vmem>>, vector<1x128x128xf32>
    %78 = vector.shape_cast %77 : vector<1x128x128xf32> to vector<128x128xf32>
    %cst_66 = arith.constant dense<0.000000e+00> : vector<2x128xf32>
    %79 = tpu.matmul %76, %78, %cst_66 {dimension_numbers = #tpu.dot_dimension_numbers<[1], [0], [0], [1], [0, 0, 1, 1], [], []>} : vector<2x128xf32>, vector<128x128xf32>, vector<2x128xf32> -> vector<2x128xf32>
    %80 = arith.addf %75, %79 : vector<2x128xf32>
    %c20 = arith.constant 20 : index
    %c0_67 = arith.constant 0 : index
    %81 = vector.load %arg12[%c20, %c0_67] : memref<50x128xf32, #tpu.memory_space<vmem>>, vector<2x128xf32>
    %c10_68 = arith.constant 10 : index
    %c0_69 = arith.constant 0 : index
    %c0_70 = arith.constant 0 : index
    %82 = vector.load %arg6[%c10_68, %c0_69, %c0_70] : memref<25x128x128xf32, #tpu.memory_space<vmem>>, vector<1x128x128xf32>
    %83 = vector.shape_cast %82 : vector<1x128x128xf32> to vector<128x128xf32>
    %cst_71 = arith.constant dense<0.000000e+00> : vector<2x128xf32>
    %84 = tpu.matmul %81, %83, %cst_71 {dimension_numbers = #tpu.dot_dimension_numbers<[1], [0], [0], [1], [0, 0, 1, 1], [], []>} : vector<2x128xf32>, vector<128x128xf32>, vector<2x128xf32> -> vector<2x128xf32>
    %85 = arith.addf %80, %84 : vector<2x128xf32>
    %c22 = arith.constant 22 : index
    %c0_72 = arith.constant 0 : index
    %86 = vector.load %arg12[%c22, %c0_72] : memref<50x128xf32, #tpu.memory_space<vmem>>, vector<2x128xf32>
    %c11 = arith.constant 11 : index
    %c0_73 = arith.constant 0 : index
    %c0_74 = arith.constant 0 : index
    %87 = vector.load %arg6[%c11, %c0_73, %c0_74] : memref<25x128x128xf32, #tpu.memory_space<vmem>>, vector<1x128x128xf32>
    %88 = vector.shape_cast %87 : vector<1x128x128xf32> to vector<128x128xf32>
    %cst_75 = arith.constant dense<0.000000e+00> : vector<2x128xf32>
    %89 = tpu.matmul %86, %88, %cst_75 {dimension_numbers = #tpu.dot_dimension_numbers<[1], [0], [0], [1], [0, 0, 1, 1], [], []>} : vector<2x128xf32>, vector<128x128xf32>, vector<2x128xf32> -> vector<2x128xf32>
    %90 = arith.addf %85, %89 : vector<2x128xf32>
    %c24 = arith.constant 24 : index
    %c0_76 = arith.constant 0 : index
    %91 = vector.load %arg12[%c24, %c0_76] : memref<50x128xf32, #tpu.memory_space<vmem>>, vector<2x128xf32>
    %c12_77 = arith.constant 12 : index
    %c0_78 = arith.constant 0 : index
    %c0_79 = arith.constant 0 : index
    %92 = vector.load %arg6[%c12_77, %c0_78, %c0_79] : memref<25x128x128xf32, #tpu.memory_space<vmem>>, vector<1x128x128xf32>
    %93 = vector.shape_cast %92 : vector<1x128x128xf32> to vector<128x128xf32>
    %cst_80 = arith.constant dense<0.000000e+00> : vector<2x128xf32>
    %94 = tpu.matmul %91, %93, %cst_80 {dimension_numbers = #tpu.dot_dimension_numbers<[1], [0], [0], [1], [0, 0, 1, 1], [], []>} : vector<2x128xf32>, vector<128x128xf32>, vector<2x128xf32> -> vector<2x128xf32>
    %95 = arith.addf %90, %94 : vector<2x128xf32>
    %c26 = arith.constant 26 : index
    %c0_81 = arith.constant 0 : index
    %96 = vector.load %arg12[%c26, %c0_81] : memref<50x128xf32, #tpu.memory_space<vmem>>, vector<2x128xf32>
    %c13 = arith.constant 13 : index
    %c0_82 = arith.constant 0 : index
    %c0_83 = arith.constant 0 : index
    %97 = vector.load %arg6[%c13, %c0_82, %c0_83] : memref<25x128x128xf32, #tpu.memory_space<vmem>>, vector<1x128x128xf32>
    %98 = vector.shape_cast %97 : vector<1x128x128xf32> to vector<128x128xf32>
    %cst_84 = arith.constant dense<0.000000e+00> : vector<2x128xf32>
    %99 = tpu.matmul %96, %98, %cst_84 {dimension_numbers = #tpu.dot_dimension_numbers<[1], [0], [0], [1], [0, 0, 1, 1], [], []>} : vector<2x128xf32>, vector<128x128xf32>, vector<2x128xf32> -> vector<2x128xf32>
    %100 = arith.addf %95, %99 : vector<2x128xf32>
    %c28 = arith.constant 28 : index
    %c0_85 = arith.constant 0 : index
    %101 = vector.load %arg12[%c28, %c0_85] : memref<50x128xf32, #tpu.memory_space<vmem>>, vector<2x128xf32>
    %c14_86 = arith.constant 14 : index
    %c0_87 = arith.constant 0 : index
    %c0_88 = arith.constant 0 : index
    %102 = vector.load %arg6[%c14_86, %c0_87, %c0_88] : memref<25x128x128xf32, #tpu.memory_space<vmem>>, vector<1x128x128xf32>
    %103 = vector.shape_cast %102 : vector<1x128x128xf32> to vector<128x128xf32>
    %cst_89 = arith.constant dense<0.000000e+00> : vector<2x128xf32>
    %104 = tpu.matmul %101, %103, %cst_89 {dimension_numbers = #tpu.dot_dimension_numbers<[1], [0], [0], [1], [0, 0, 1, 1], [], []>} : vector<2x128xf32>, vector<128x128xf32>, vector<2x128xf32> -> vector<2x128xf32>
    %105 = arith.addf %100, %104 : vector<2x128xf32>
    %c30 = arith.constant 30 : index
    %c0_90 = arith.constant 0 : index
    %106 = vector.load %arg12[%c30, %c0_90] : memref<50x128xf32, #tpu.memory_space<vmem>>, vector<2x128xf32>
    %c15 = arith.constant 15 : index
    %c0_91 = arith.constant 0 : index
    %c0_92 = arith.constant 0 : index
    %107 = vector.load %arg6[%c15, %c0_91, %c0_92] : memref<25x128x128xf32, #tpu.memory_space<vmem>>, vector<1x128x128xf32>
    %108 = vector.shape_cast %107 : vector<1x128x128xf32> to vector<128x128xf32>
    %cst_93 = arith.constant dense<0.000000e+00> : vector<2x128xf32>
    %109 = tpu.matmul %106, %108, %cst_93 {dimension_numbers = #tpu.dot_dimension_numbers<[1], [0], [0], [1], [0, 0, 1, 1], [], []>} : vector<2x128xf32>, vector<128x128xf32>, vector<2x128xf32> -> vector<2x128xf32>
    %110 = arith.addf %105, %109 : vector<2x128xf32>
    %c32 = arith.constant 32 : index
    %c0_94 = arith.constant 0 : index
    %111 = vector.load %arg12[%c32, %c0_94] : memref<50x128xf32, #tpu.memory_space<vmem>>, vector<2x128xf32>
    %c16_95 = arith.constant 16 : index
    %c0_96 = arith.constant 0 : index
    %c0_97 = arith.constant 0 : index
    %112 = vector.load %arg6[%c16_95, %c0_96, %c0_97] : memref<25x128x128xf32, #tpu.memory_space<vmem>>, vector<1x128x128xf32>
    %113 = vector.shape_cast %112 : vector<1x128x128xf32> to vector<128x128xf32>
    %cst_98 = arith.constant dense<0.000000e+00> : vector<2x128xf32>
    %114 = tpu.matmul %111, %113, %cst_98 {dimension_numbers = #tpu.dot_dimension_numbers<[1], [0], [0], [1], [0, 0, 1, 1], [], []>} : vector<2x128xf32>, vector<128x128xf32>, vector<2x128xf32> -> vector<2x128xf32>
    %115 = arith.addf %110, %114 : vector<2x128xf32>
    %c34 = arith.constant 34 : index
    %c0_99 = arith.constant 0 : index
    %116 = vector.load %arg12[%c34, %c0_99] : memref<50x128xf32, #tpu.memory_space<vmem>>, vector<2x128xf32>
    %c17 = arith.constant 17 : index
    %c0_100 = arith.constant 0 : index
    %c0_101 = arith.constant 0 : index
    %117 = vector.load %arg6[%c17, %c0_100, %c0_101] : memref<25x128x128xf32, #tpu.memory_space<vmem>>, vector<1x128x128xf32>
    %118 = vector.shape_cast %117 : vector<1x128x128xf32> to vector<128x128xf32>
    %cst_102 = arith.constant dense<0.000000e+00> : vector<2x128xf32>
    %119 = tpu.matmul %116, %118, %cst_102 {dimension_numbers = #tpu.dot_dimension_numbers<[1], [0], [0], [1], [0, 0, 1, 1], [], []>} : vector<2x128xf32>, vector<128x128xf32>, vector<2x128xf32> -> vector<2x128xf32>
    %120 = arith.addf %115, %119 : vector<2x128xf32>
    %c36 = arith.constant 36 : index
    %c0_103 = arith.constant 0 : index
    %121 = vector.load %arg12[%c36, %c0_103] : memref<50x128xf32, #tpu.memory_space<vmem>>, vector<2x128xf32>
    %c18_104 = arith.constant 18 : index
    %c0_105 = arith.constant 0 : index
    %c0_106 = arith.constant 0 : index
    %122 = vector.load %arg6[%c18_104, %c0_105, %c0_106] : memref<25x128x128xf32, #tpu.memory_space<vmem>>, vector<1x128x128xf32>
    %123 = vector.shape_cast %122 : vector<1x128x128xf32> to vector<128x128xf32>
    %cst_107 = arith.constant dense<0.000000e+00> : vector<2x128xf32>
    %124 = tpu.matmul %121, %123, %cst_107 {dimension_numbers = #tpu.dot_dimension_numbers<[1], [0], [0], [1], [0, 0, 1, 1], [], []>} : vector<2x128xf32>, vector<128x128xf32>, vector<2x128xf32> -> vector<2x128xf32>
    %125 = arith.addf %120, %124 : vector<2x128xf32>
    %c38 = arith.constant 38 : index
    %c0_108 = arith.constant 0 : index
    %126 = vector.load %arg12[%c38, %c0_108] : memref<50x128xf32, #tpu.memory_space<vmem>>, vector<2x128xf32>
    %c19 = arith.constant 19 : index
    %c0_109 = arith.constant 0 : index
    %c0_110 = arith.constant 0 : index
    %127 = vector.load %arg6[%c19, %c0_109, %c0_110] : memref<25x128x128xf32, #tpu.memory_space<vmem>>, vector<1x128x128xf32>
    %128 = vector.shape_cast %127 : vector<1x128x128xf32> to vector<128x128xf32>
    %cst_111 = arith.constant dense<0.000000e+00> : vector<2x128xf32>
    %129 = tpu.matmul %126, %128, %cst_111 {dimension_numbers = #tpu.dot_dimension_numbers<[1], [0], [0], [1], [0, 0, 1, 1], [], []>} : vector<2x128xf32>, vector<128x128xf32>, vector<2x128xf32> -> vector<2x128xf32>
    %130 = arith.addf %125, %129 : vector<2x128xf32>
    %c40 = arith.constant 40 : index
    %c0_112 = arith.constant 0 : index
    %131 = vector.load %arg12[%c40, %c0_112] : memref<50x128xf32, #tpu.memory_space<vmem>>, vector<2x128xf32>
    %c20_113 = arith.constant 20 : index
    %c0_114 = arith.constant 0 : index
    %c0_115 = arith.constant 0 : index
    %132 = vector.load %arg6[%c20_113, %c0_114, %c0_115] : memref<25x128x128xf32, #tpu.memory_space<vmem>>, vector<1x128x128xf32>
    %133 = vector.shape_cast %132 : vector<1x128x128xf32> to vector<128x128xf32>
    %cst_116 = arith.constant dense<0.000000e+00> : vector<2x128xf32>
    %134 = tpu.matmul %131, %133, %cst_116 {dimension_numbers = #tpu.dot_dimension_numbers<[1], [0], [0], [1], [0, 0, 1, 1], [], []>} : vector<2x128xf32>, vector<128x128xf32>, vector<2x128xf32> -> vector<2x128xf32>
    %135 = arith.addf %130, %134 : vector<2x128xf32>
    %c42 = arith.constant 42 : index
    %c0_117 = arith.constant 0 : index
    %136 = vector.load %arg12[%c42, %c0_117] : memref<50x128xf32, #tpu.memory_space<vmem>>, vector<2x128xf32>
    %c21 = arith.constant 21 : index
    %c0_118 = arith.constant 0 : index
    %c0_119 = arith.constant 0 : index
    %137 = vector.load %arg6[%c21, %c0_118, %c0_119] : memref<25x128x128xf32, #tpu.memory_space<vmem>>, vector<1x128x128xf32>
    %138 = vector.shape_cast %137 : vector<1x128x128xf32> to vector<128x128xf32>
    %cst_120 = arith.constant dense<0.000000e+00> : vector<2x128xf32>
    %139 = tpu.matmul %136, %138, %cst_120 {dimension_numbers = #tpu.dot_dimension_numbers<[1], [0], [0], [1], [0, 0, 1, 1], [], []>} : vector<2x128xf32>, vector<128x128xf32>, vector<2x128xf32> -> vector<2x128xf32>
    %140 = arith.addf %135, %139 : vector<2x128xf32>
    %c44 = arith.constant 44 : index
    %c0_121 = arith.constant 0 : index
    %141 = vector.load %arg12[%c44, %c0_121] : memref<50x128xf32, #tpu.memory_space<vmem>>, vector<2x128xf32>
    %c22_122 = arith.constant 22 : index
    %c0_123 = arith.constant 0 : index
    %c0_124 = arith.constant 0 : index
    %142 = vector.load %arg6[%c22_122, %c0_123, %c0_124] : memref<25x128x128xf32, #tpu.memory_space<vmem>>, vector<1x128x128xf32>
    %143 = vector.shape_cast %142 : vector<1x128x128xf32> to vector<128x128xf32>
    %cst_125 = arith.constant dense<0.000000e+00> : vector<2x128xf32>
    %144 = tpu.matmul %141, %143, %cst_125 {dimension_numbers = #tpu.dot_dimension_numbers<[1], [0], [0], [1], [0, 0, 1, 1], [], []>} : vector<2x128xf32>, vector<128x128xf32>, vector<2x128xf32> -> vector<2x128xf32>
    %145 = arith.addf %140, %144 : vector<2x128xf32>
    %c46 = arith.constant 46 : index
    %c0_126 = arith.constant 0 : index
    %146 = vector.load %arg12[%c46, %c0_126] : memref<50x128xf32, #tpu.memory_space<vmem>>, vector<2x128xf32>
    %c23 = arith.constant 23 : index
    %c0_127 = arith.constant 0 : index
    %c0_128 = arith.constant 0 : index
    %147 = vector.load %arg6[%c23, %c0_127, %c0_128] : memref<25x128x128xf32, #tpu.memory_space<vmem>>, vector<1x128x128xf32>
    %148 = vector.shape_cast %147 : vector<1x128x128xf32> to vector<128x128xf32>
    %cst_129 = arith.constant dense<0.000000e+00> : vector<2x128xf32>
    %149 = tpu.matmul %146, %148, %cst_129 {dimension_numbers = #tpu.dot_dimension_numbers<[1], [0], [0], [1], [0, 0, 1, 1], [], []>} : vector<2x128xf32>, vector<128x128xf32>, vector<2x128xf32> -> vector<2x128xf32>
    %150 = arith.addf %145, %149 : vector<2x128xf32>
    %c48 = arith.constant 48 : index
    %c0_130 = arith.constant 0 : index
    %151 = vector.load %arg12[%c48, %c0_130] : memref<50x128xf32, #tpu.memory_space<vmem>>, vector<2x128xf32>
    %c24_131 = arith.constant 24 : index
    %c0_132 = arith.constant 0 : index
    %c0_133 = arith.constant 0 : index
    %152 = vector.load %arg6[%c24_131, %c0_132, %c0_133] : memref<25x128x128xf32, #tpu.memory_space<vmem>>, vector<1x128x128xf32>
    %153 = vector.shape_cast %152 : vector<1x128x128xf32> to vector<128x128xf32>
    %cst_134 = arith.constant dense<0.000000e+00> : vector<2x128xf32>
    %154 = tpu.matmul %151, %153, %cst_134 {dimension_numbers = #tpu.dot_dimension_numbers<[1], [0], [0], [1], [0, 0, 1, 1], [], []>} : vector<2x128xf32>, vector<128x128xf32>, vector<2x128xf32> -> vector<2x128xf32>
    %155 = arith.addf %150, %154 : vector<2x128xf32>
    %c0_135 = arith.constant 0 : index
    %c0_136 = arith.constant 0 : index
    %156 = vector.load %arg7[%c0_135, %c0_136] : memref<1x128xf32, #tpu.memory_space<vmem>>, vector<1x128xf32>
    %157 = vector.broadcast %156 : vector<1x128xf32> to vector<2x128xf32>
    %158 = arith.addf %155, %157 : vector<2x128xf32>
    %cst_137 = arith.constant 0.000000e+00 : f32
    %159 = vector.broadcast %cst_137 : f32 to vector<2x128xf32>
    %160 = arith.maximumf %158, %159 : vector<2x128xf32>
    %c0_138 = arith.constant 0 : index
    %c0_139 = arith.constant 0 : index
    %161 = vector.load %arg13[%c0_138, %c0_139] : memref<2x128xf32, #tpu.memory_space<vmem>>, vector<2x128xf32>
    tpu.vector_store %arg13[%c0_138, %c0_139], %160 {strides = array<i32>} : memref<2x128xf32, #tpu.memory_space<vmem>>, vector<2x128xf32>,
    %c0_140 = arith.constant 0 : index
    %c0_141 = arith.constant 0 : index
    %162 = vector.load %arg8[%c0_140, %c0_141] : memref<128x128xf32, #tpu.memory_space<vmem>>, vector<128x128xf32>
    %cst_142 = arith.constant dense<0.000000e+00> : vector<2x128xf32>
    %163 = tpu.matmul %160, %162, %cst_142 {dimension_numbers = #tpu.dot_dimension_numbers<[1], [0], [0], [1], [0, 0, 1, 1], [], []>} : vector<2x128xf32>, vector<128x128xf32>, vector<2x128xf32> -> vector<2x128xf32>
    %c0_143 = arith.constant 0 : index
    %c0_144 = arith.constant 0 : index
    %164 = vector.load %arg9[%c0_143, %c0_144] : memref<1x128xf32, #tpu.memory_space<vmem>>, vector<1x128xf32>
    %165 = vector.broadcast %164 : vector<1x128xf32> to vector<2x128xf32>
    %166 = arith.addf %163, %165 : vector<2x128xf32>
    %cst_145 = arith.constant 0.000000e+00 : f32
    %167 = vector.broadcast %cst_145 : f32 to vector<2x128xf32>
    %168 = arith.maximumf %166, %167 : vector<2x128xf32>
    %c0_146 = arith.constant 0 : index
    %c0_147 = arith.constant 0 : index
    %169 = vector.load %arg14[%c0_146, %c0_147] : memref<2x128xf32, #tpu.memory_space<vmem>>, vector<2x128xf32>
    tpu.vector_store %arg14[%c0_146, %c0_147], %168 {strides = array<i32>} : memref<2x128xf32, #tpu.memory_space<vmem>>, vector<2x128xf32>,
    %c0_148 = arith.constant 0 : index
    %c0_149 = arith.constant 0 : index
    %170 = vector.load %arg10[%c0_148, %c0_149] : memref<128x128xf32, #tpu.memory_space<vmem>>, vector<128x128xf32>
    %cst_150 = arith.constant dense<0.000000e+00> : vector<2x128xf32>
    %171 = tpu.matmul %168, %170, %cst_150 {dimension_numbers = #tpu.dot_dimension_numbers<[1], [0], [0], [1], [0, 0, 1, 1], [], []>} : vector<2x128xf32>, vector<128x128xf32>, vector<2x128xf32> -> vector<2x128xf32>
    %c0_151 = arith.constant 0 : index
    %c0_152 = arith.constant 0 : index
    %172 = vector.load %arg11[%c0_151, %c0_152] : memref<1x128xf32, #tpu.memory_space<vmem>>, vector<1x128xf32>
    %173 = vector.broadcast %172 : vector<1x128xf32> to vector<2x128xf32>
    %174 = arith.addf %171, %173 : vector<2x128xf32>
    %c0_153 = arith.constant 0 : index
    %c0_154 = arith.constant 0 : index
    %175 = vector.load %arg15[%c0_153, %c0_154] : memref<2x128xf32, #tpu.memory_space<vmem>>, vector<2x128xf32>
    tpu.vector_store %arg15[%c0_153, %c0_154], %174 {strides = array<i32>} : memref<2x128xf32, #tpu.memory_space<vmem>>, vector<2x128xf32>,
    %176 = tpu.iota {dimensions = array<i32: 1>} : vector<2x128xi32>
    %c10_i32 = arith.constant 10 : i32
    %177 = vector.broadcast %c10_i32 : i32 to vector<2x128xi32>
    %178 = arith.cmpi slt, %176, %177 : vector<2x128xi32>
    %cst_155 = arith.constant -1.000000e+30 : f32
    %179 = vector.broadcast %cst_155 : f32 to vector<2x128xf32>
    %180 = arith.select %178, %174, %179 : vector<2x128xi1>, vector<2x128xf32>
    %cst_156 = arith.constant dense<0xFF800000> : vector<2xf32>
    %181 = vector.multi_reduction <maximumf>, %180, %cst_156 [1] : vector<2x128xf32> to vector<2xf32>
    %182 = vector.shape_cast %181 : vector<2xf32> to vector<2x1xf32>
    %183 = vector.broadcast %182 : vector<2x1xf32> to vector<2x128xf32>
    %184 = arith.subf %174, %183 : vector<2x128xf32>
    %185 = math.exp %184 : vector<2x128xf32>
    %cst_157 = arith.constant 0.000000e+00 : f32
    %186 = vector.broadcast %cst_157 : f32 to vector<2x128xf32>
    %187 = arith.select %178, %185, %186 : vector<2x128xi1>, vector<2x128xf32>
    %cst_158 = arith.constant dense<0.000000e+00> : vector<2xf32>
    %188 = vector.multi_reduction <add>, %187, %cst_158 [1] : vector<2x128xf32> to vector<2xf32>
    %189 = vector.shape_cast %188 : vector<2xf32> to vector<2x1xf32>
    %190 = math.log %189 : vector<2x1xf32>
    %191 = vector.broadcast %190 : vector<2x1xf32> to vector<2x128xf32>
    %192 = arith.subf %184, %191 : vector<2x128xf32>
    %c0_159 = arith.constant 0 : index
    %c0_160 = arith.constant 0 : index
    %193 = vector.load %arg16[%c0_159, %c0_160] : memref<2x128xf32, #tpu.memory_space<vmem>>, vector<2x128xf32>
    tpu.vector_store %arg16[%c0_159, %c0_160], %192 {strides = array<i32>} : memref<2x128xf32, #tpu.memory_space<vmem>>, vector<2x128xf32>,
    return
  }
}

</mosaic_0001>

<llo_original>
// kernel: lenet5_forward.2
$region0: #{lenet5_forward.2}
  #allocation0 [shape = 'u32[]', space=smem, size = 0x4, offset = 0x4, fixed_abs, tag = 'smem constant byte address 0x4 - core index']
  #allocation1 [shape = 'u32[144,128]{1,0:T(1,128)}', space=vmem, size = 0x12000, scoped, tag = 'internal scratch']
  %s0 = inlined_call_operand.vmem [shape: f32[392,25], index: 0, kind: input, shape index: {}]
  %s1 = inlined_call_operand.vmem [shape: f32[392,25], index: 1, kind: input, shape index: {}]
  %s2 = inlined_call_operand.vmem [shape: f32[392,25], index: 2, kind: input, shape index: {}]
  %s3 = inlined_call_operand.vmem [shape: f32[392,25], index: 3, kind: input, shape index: {}]
  %s4 = inlined_call_operand.vmem [shape: f32[25,128], index: 4, kind: input, shape index: {}]
  %s5 = inlined_call_operand.vmem [shape: f32[1,128], index: 5, kind: input, shape index: {}]
  %s6 = inlined_call_operand.vmem [shape: f32[392,128], index: 6, kind: output, shape index: {}]
  %s7 = sld [smem:[#allocation0]]
  $region34: #{lenet5_forward.2} parent=0
    _
  %s9 = ssub.s32 1, %s7
  %s10 = scalar_select 0, %s9, %s7
  // Predicated region
  $region2: #{lenet5_forward.2} parent=0 // pred_check
    _
  $region3: #{lenet5_forward.2} parent=0 // pred_check_branch
    %12 = sbr.rel (0) target = $region5
  $region4: #{lenet5_forward.2} parent=0 // pred_region
    _
  $region5: #{lenet5_forward.2} parent=0 // pred_fallthru
    _
  // Predicated region
  $region6: #{lenet5_forward.2} parent=0 // pred_check
    _
  $region7: #{lenet5_forward.2} parent=0 // pred_check_branch
    %14 = sbr.rel (0) target = $region9
  $region8: #{lenet5_forward.2} parent=0 // pred_region
    _
  $region9: #{lenet5_forward.2} parent=0 // pred_fallthru
    _
  // Predicated region
  $region10: #{lenet5_forward.2} parent=0 // pred_check
    _
  $region11: #{lenet5_forward.2} parent=0 // pred_check_branch
    %16 = sbr.rel (0) target = $region13
  $region12: #{lenet5_forward.2} parent=0 // pred_region
    _
  $region13: #{lenet5_forward.2} parent=0 // pred_fallthru
    _
  // Predicated region
  $region14: #{lenet5_forward.2} parent=0 // pred_check
    _
  $region15: #{lenet5_forward.2} parent=0 // pred_check_branch
    %18 = sbr.rel (0) target = $region17
  $region16: #{lenet5_forward.2} parent=0 // pred_region
    _
  $region17: #{lenet5_forward.2} parent=0 // pred_fallthru
    _
  // Predicated region
  $region18: #{lenet5_forward.2} parent=0 // pred_check
    _
  $region19: #{lenet5_forward.2} parent=0 // pred_check_branch
    %20 = sbr.rel (0) target = $region21
  $region20: #{lenet5_forward.2} parent=0 // pred_region
    _
  $region21: #{lenet5_forward.2} parent=0 // pred_fallthru
    _
  // Predicated region
  $region22: #{lenet5_forward.2} parent=0 // pred_check
    _
  $region23: #{lenet5_forward.2} parent=0 // pred_check_branch
    %22 = sbr.rel (0) target = $region25
  $region24: #{lenet5_forward.2} parent=0 // pred_region
    _
  $region25: #{lenet5_forward.2} parent=0 // pred_fallthru
    _
  %v23 = vld [vmem:[%s4] sm:$0xff]
  %v24 = vld [vmem:[%s4 + $0x8] sm:$0xff]
  %v25 = vld [vmem:[%s4 + $0x10] sm:$0xff]
  %v26 = vld [vmem:[%s4 + $0x18] sm:$0x1]
  %v27 = vld [vmem:[%s5] sm:$0x1]
  %v28 = vld [vmem:[%s0] sm:$0xff]
  %v29 = vld [vmem:[%s0 + $0x8] sm:$0xff]
  %v30 = vld [vmem:[%s0 + $0x10] sm:$0xff]
  %v31 = vld [vmem:[%s0 + $0x18] sm:$0xff]
  %v32 = vld [vmem:[%s0 + $0x20] sm:$0xff]
  %v33 = vld [vmem:[%s0 + $0x28] sm:$0xff]
  %v34 = vld [vmem:[%s0 + $0x30] sm:$0xff]
  %v35 = vld [vmem:[%s0 + $0x38] sm:$0xff]
  %v36 = vld [vmem:[%s0 + $0x40] sm:$0xff]
  %v37 = vld [vmem:[%s0 + $0x48] sm:$0xff]
  %v38 = vld [vmem:[%s0 + $0x50] sm:$0xff]
  %v39 = vld [vmem:[%s0 + $0x58] sm:$0xff]
  %v40 = vld [vmem:[%s0 + $0x60] sm:$0xff]
  %v41 = vld [vmem:[%s0 + $0x68] sm:$0xff]
  %v42 = vld [vmem:[%s0 + $0x70] sm:$0xff]
  %v43 = vld [vmem:[%s0 + $0x78] sm:$0xff]
  %v44 = vld [vmem:[%s0 + $0x80] sm:$0xff]
  %v45 = vld [vmem:[%s0 + $0x88] sm:$0xff]
  %v46 = vld [vmem:[%s0 + $0x90] sm:$0xff]
  %v47 = vld [vmem:[%s0 + $0x98] sm:$0xff]
  %v48 = vld [vmem:[%s0 + $0xa0] sm:$0xff]
  %v49 = vld [vmem:[%s0 + $0xa8] sm:$0xff]
  %v50 = vld [vmem:[%s0 + $0xb0] sm:$0xff]
  %v51 = vld [vmem:[%s0 + $0xb8] sm:$0xff]
  %v52 = vld [vmem:[%s0 + $0xc0] sm:$0xff]
  %v53 = vld [vmem:[%s0 + $0xc8] sm:$0xff]
  %v54 = vld [vmem:[%s0 + $0xd0] sm:$0xff]
  %v55 = vld [vmem:[%s0 + $0xd8] sm:$0xff]
  %v56 = vld [vmem:[%s0 + $0xe0] sm:$0xff]
  %v57 = vld [vmem:[%s0 + $0xe8] sm:$0xff]
  %v58 = vld [vmem:[%s0 + $0xf0] sm:$0xff]
  %v59 = vld [vmem:[%s0 + $0xf8] sm:$0xff]
  %v60 = vld [vmem:[%s0 + $0x100] sm:$0xff]
  %v61 = vld [vmem:[%s0 + $0x108] sm:$0xff]
  %v62 = vld [vmem:[%s0 + $0x110] sm:$0xff]
  %v63 = vld [vmem:[%s0 + $0x118] sm:$0xff]
  %v64 = vld [vmem:[%s0 + $0x120] sm:$0xff]
  %v65 = vld [vmem:[%s0 + $0x128] sm:$0xff]
  %v66 = vld [vmem:[%s0 + $0x130] sm:$0xff]
  %v67 = vld [vmem:[%s0 + $0x138] sm:$0xff]
  %v68 = vld [vmem:[%s0 + $0x140] sm:$0xff]
  %v69 = vld [vmem:[%s0 + $0x148] sm:$0xff]
  %v70 = vld [vmem:[%s0 + $0x150] sm:$0xff]
  %v71 = vld [vmem:[%s0 + $0x158] sm:$0xff]
  %v72 = vld [vmem:[%s0 + $0x160] sm:$0xff]
  %v73 = vld [vmem:[%s0 + $0x168] sm:$0xff]
  %v74 = vld [vmem:[%s0 + $0x170] sm:$0xff]
  %v75 = vld [vmem:[%s0 + $0x178] sm:$0xff]
  %v76 = vld [vmem:[%s0 + $0x180] sm:$0xff]
  %v78 = vlaneseq
  %v79 = vshrl.u32 %v78, 7
  %v80 = vsub.s32 0, %v79
  %v81 = vrot.slane %v27, %v80
  %vm83 = vcmask 203776
  %v85 = vsel %vm83, %v28, 0
  %v88 = vsel %vm83, %v29, 0
  %v91 = vsel %vm83, %v30, 0
  %v94 = vsel %vm83, %v31, 0
  %v97 = vsel %vm83, %v32, 0
  %v100 = vsel %vm83, %v33, 0
  %v103 = vsel %vm83, %v34, 0
  %v106 = vsel %vm83, %v35, 0
  %v109 = vsel %vm83, %v36, 0
  %v112 = vsel %vm83, %v37, 0
  %v115 = vsel %vm83, %v38, 0
  %v118 = vsel %vm83, %v39, 0
  %v121 = vsel %vm83, %v40, 0
  %v124 = vsel %vm83, %v41, 0
  %v127 = vsel %vm83, %v42, 0
  %v130 = vsel %vm83, %v43, 0
  %v133 = vsel %vm83, %v44, 0
  %v136 = vsel %vm83, %v45, 0
  %v139 = vsel %vm83, %v46, 0
  %v142 = vsel %vm83, %v47, 0
  %v145 = vsel %vm83, %v48, 0
  %v148 = vsel %vm83, %v49, 0
  %v151 = vsel %vm83, %v50, 0
  %v154 = vsel %vm83, %v51, 0
  %v157 = vsel %vm83, %v52, 0
  %v160 = vsel %vm83, %v53, 0
  %v163 = vsel %vm83, %v54, 0
  %v166 = vsel %vm83, %v55, 0
  %v169 = vsel %vm83, %v56, 0
  %v172 = vsel %vm83, %v57, 0
  %v175 = vsel %vm83, %v58, 0
  %v178 = vsel %vm83, %v59, 0
  %v181 = vsel %vm83, %v60, 0
  %v184 = vsel %vm83, %v61, 0
  %v187 = vsel %vm83, %v62, 0
  %v190 = vsel %vm83, %v63, 0
  %v193 = vsel %vm83, %v64, 0
  %v196 = vsel %vm83, %v65, 0
  %v199 = vsel %vm83, %v66, 0
  %v202 = vsel %vm83, %v67, 0
  %v205 = vsel %vm83, %v68, 0
  %v208 = vsel %vm83, %v69, 0
  %v211 = vsel %vm83, %v70, 0
  %v214 = vsel %vm83, %v71, 0
  %v217 = vsel %vm83, %v72, 0
  %v220 = vsel %vm83, %v73, 0
  %v223 = vsel %vm83, %v74, 0
  %v226 = vsel %vm83, %v75, 0
  %v229 = vsel %vm83, %v76, 0
  %vm231 = vcmask 1040384
  %v233 = vsel %vm231, %v26, 0
  %235 = vmatprep.subr.mxu0 0.0
  %236 = vmatpush1.msra.mxu0 %v23
  %237 = vmatprep.subr.mxu0 0.0
  %238 = vmatpush1.msra.mxu0 %v24
  %239 = vmatprep.subr.mxu0 0.0
  %240 = vmatpush1.msra.mxu0 %v25
  %241 = vmatprep.subr.mxu0 0.0
  %242 = vmatpush1.msra.mxu0 %v233
  %243 = vmatprep.subr.mxu0 0.0
  %244 = vmatpush1.msra.mxu0 0.0
  %245 = vmatprep.subr.mxu0 0.0
  %246 = vmatpush1.msra.mxu0 0.0
  %247 = vmatprep.subr.mxu0 0.0
  %248 = vmatpush1.msra.mxu0 0.0
  %249 = vmatprep.subr.mxu0 0.0
  %250 = vmatpush1.msra.mxu0 0.0
  %251 = vmatprep.subr.mxu0 0.0
  %252 = vmatpush1.msra.mxu0 0.0
  %253 = vmatprep.subr.mxu0 0.0
  %254 = vmatpush1.msra.mxu0 0.0
  %255 = vmatprep.subr.mxu0 0.0
  %256 = vmatpush1.msra.mxu0 0.0
  %257 = vmatprep.subr.mxu0 0.0
  %258 = vmatpush1.msra.mxu0 0.0
  %259 = vmatprep.subr.mxu0 0.0
  %260 = vmatpush1.msra.mxu0 0.0
  %261 = vmatprep.subr.mxu0 0.0
  %262 = vmatpush1.msra.mxu0 0.0
  %263 = vmatprep.subr.mxu0 0.0
  %264 = vmatpush1.msra.mxu0 0.0
  %265 = vmatprep.subr.mxu0 0.0
  %266 = vmatpush1.msra.mxu0 0.0
  %267 = vmatprep.subr.mxu0 0.0
  %268 = vmatpush1.msra.mxu0 0.0
  %269 = vmatprep.subr.mxu0 0.0
  %270 = vmatpush1.msra.mxu0 0.0
  %271 = vmatprep.subr.mxu0 0.0
  %272 = vmatpush1.msra.mxu0 0.0
  %273 = vmatprep.subr.mxu0 0.0
  %274 = vmatpush1.msra.mxu0 0.0
  %275 = vmatprep.subr.mxu0 0.0
  %276 = vmatpush1.msra.mxu0 0.0
  %277 = vmatprep.subr.mxu0 0.0
  %278 = vmatpush1.msra.mxu0 0.0
  %279 = vmatprep.subr.mxu0 0.0
  %280 = vmatpush1.msra.mxu0 0.0
  %281 = vmatprep.subr.mxu0 0.0
  %282 = vmatpush1.msra.mxu0 0.0
  %283 = vmatprep.subr.mxu0 0.0
  %284 = vmatpush1.msra.mxu0 0.0
  %285 = vmatprep.subr.mxu0 0.0
  %286 = vmatpush1.msra.mxu0 0.0
  %287 = vmatprep.subr.mxu0 0.0
  %288 = vmatpush1.msra.mxu0 0.0
  %289 = vmatprep.subr.mxu0 0.0
  %290 = vmatpush1.msra.mxu0 0.0
  %291 = vmatprep.subr.mxu0 0.0
  %292 = vmatpush1.msra.mxu0 0.0
  %293 = vmatprep.subr.mxu0 0.0
  %294 = vmatpush1.msra.mxu0 0.0
  %295 = vmatprep.subr.mxu0 0.0
  %296 = vmatpush1.msra.mxu0 0.0
  %297 = vmatprep.subr.mxu0 0.0
  %298 = vmatpush1.msra.mxu0 0.0
  %299 = vmatprep.mubr.f32.mxu0 0.0
  %300 = vmatmul.mubr.f32.gmra.mrb[0].mxu0 %v85
  %v301 = vpop.f32.mrb[0].mxu0
  %v302 = vadd.f32 %v81, %v301
  %v303 = vpop.f32.mrb[0].mxu0
  %304 = vmatprep.mubr.f32.mxu0 0.0
  %305 = vmatmul.mubr.f32.gmra.mrb[0].mxu0 %v88
  %v306 = vpop.f32.mrb[0].mxu0
  %v307 = vadd.f32 %v81, %v306
  %v308 = vpop.f32.mrb[0].mxu0
  %309 = vmatprep.mubr.f32.mxu0 0.0
  %310 = vmatmul.mubr.f32.gmra.mrb[0].mxu0 %v91
  %v311 = vpop.f32.mrb[0].mxu0
  %v312 = vadd.f32 %v81, %v311
  %v313 = vpop.f32.mrb[0].mxu0
  %314 = vmatprep.mubr.f32.mxu0 0.0
  %315 = vmatmul.mubr.f32.gmra.mrb[0].mxu0 %v94
  %v316 = vpop.f32.mrb[0].mxu0
  %v317 = vadd.f32 %v81, %v316
  %v318 = vpop.f32.mrb[0].mxu0
  %319 = vmatprep.mubr.f32.mxu0 0.0
  %320 = vmatmul.mubr.f32.gmra.mrb[0].mxu0 %v97
  %v321 = vpop.f32.mrb[0].mxu0
  %v322 = vadd.f32 %v81, %v321
  %v323 = vpop.f32.mrb[0].mxu0
  %324 = vmatprep.mubr.f32.mxu0 0.0
  %325 = vmatmul.mubr.f32.gmra.mrb[0].mxu0 %v100
  %v326 = vpop.f32.mrb[0].mxu0
  %v327 = vadd.f32 %v81, %v326
  %v328 = vpop.f32.mrb[0].mxu0
  %329 = vmatprep.mubr.f32.mxu0 0.0
  %330 = vmatmul.mubr.f32.gmra.mrb[0].mxu0 %v103
  %v331 = vpop.f32.mrb[0].mxu0
  %v332 = vadd.f32 %v81, %v331
  %v333 = vpop.f32.mrb[0].mxu0
  %334 = vmatprep.mubr.f32.mxu0 0.0
  %335 = vmatmul.mubr.f32.gmra.mrb[0].mxu0 %v106
  %v336 = vpop.f32.mrb[0].mxu0
  %v337 = vadd.f32 %v81, %v336
  %v338 = vpop.f32.mrb[0].mxu0
  %339 = vmatprep.mubr.f32.mxu0 0.0
  %340 = vmatmul.mubr.f32.gmra.mrb[0].mxu0 %v109
  %v341 = vpop.f32.mrb[0].mxu0
  %v342 = vadd.f32 %v81, %v341
  %v343 = vpop.f32.mrb[0].mxu0
  %344 = vmatprep.mubr.f32.mxu0 0.0
  %345 = vmatmul.mubr.f32.gmra.mrb[0].mxu0 %v112
  %v346 = vpop.f32.mrb[0].mxu0
  %v347 = vadd.f32 %v81, %v346
  %v348 = vpop.f32.mrb[0].mxu0
  %349 = vmatprep.mubr.f32.mxu0 0.0
  %350 = vmatmul.mubr.f32.gmra.mrb[0].mxu0 %v115
  %v351 = vpop.f32.mrb[0].mxu0
  %v352 = vadd.f32 %v81, %v351
  %v353 = vpop.f32.mrb[0].mxu0
  %354 = vmatprep.mubr.f32.mxu0 0.0
  %355 = vmatmul.mubr.f32.gmra.mrb[0].mxu0 %v118
  %v356 = vpop.f32.mrb[0].mxu0
  %v357 = vadd.f32 %v81, %v356
  %v358 = vpop.f32.mrb[0].mxu0
  %359 = vmatprep.mubr.f32.mxu0 0.0
  %360 = vmatmul.mubr.f32.gmra.mrb[0].mxu0 %v121
  %v361 = vpop.f32.mrb[0].mxu0
  %v362 = vadd.f32 %v81, %v361
  %v363 = vpop.f32.mrb[0].mxu0
  %364 = vmatprep.mubr.f32.mxu0 0.0
  %365 = vmatmul.mubr.f32.gmra.mrb[0].mxu0 %v124
  %v366 = vpop.f32.mrb[0].mxu0
  %v367 = vadd.f32 %v81, %v366
  %v368 = vpop.f32.mrb[0].mxu0
  %369 = vmatprep.mubr.f32.mxu0 0.0
  %370 = vmatmul.mubr.f32.gmra.mrb[0].mxu0 %v127
  %v371 = vpop.f32.mrb[0].mxu0
  %v372 = vadd.f32 %v81, %v371
  %v373 = vpop.f32.mrb[0].mxu0
  %374 = vmatprep.mubr.f32.mxu0 0.0
  %375 = vmatmul.mubr.f32.gmra.mrb[0].mxu0 %v130
  %v376 = vpop.f32.mrb[0].mxu0
  %v377 = vadd.f32 %v81, %v376
  %v378 = vpop.f32.mrb[0].mxu0
  %379 = vmatprep.mubr.f32.mxu0 0.0
  %380 = vmatmul.mubr.f32.gmra.mrb[0].mxu0 %v133
  %v381 = vpop.f32.mrb[0].mxu0
  %v382 = vadd.f32 %v81, %v381
  %v383 = vpop.f32.mrb[0].mxu0
  %384 = vmatprep.mubr.f32.mxu0 0.0
  %385 = vmatmul.mubr.f32.gmra.mrb[0].mxu0 %v136
  %v386 = vpop.f32.mrb[0].mxu0
  %v387 = vadd.f32 %v81, %v386
  %v388 = vpop.f32.mrb[0].mxu0
  %389 = vmatprep.mubr.f32.mxu0 0.0
  %390 = vmatmul.mubr.f32.gmra.mrb[0].mxu0 %v139
  %v391 = vpop.f32.mrb[0].mxu0
  %v392 = vadd.f32 %v81, %v391
  %v393 = vpop.f32.mrb[0].mxu0
  %394 = vmatprep.mubr.f32.mxu0 0.0
  %395 = vmatmul.mubr.f32.gmra.mrb[0].mxu0 %v142
  %v396 = vpop.f32.mrb[0].mxu0
  %v397 = vadd.f32 %v81, %v396
  %v398 = vpop.f32.mrb[0].mxu0
  %399 = vmatprep.mubr.f32.mxu0 0.0
  %400 = vmatmul.mubr.f32.gmra.mrb[0].mxu0 %v145
  %v401 = vpop.f32.mrb[0].mxu0
  %v402 = vadd.f32 %v81, %v401
  %v403 = vpop.f32.mrb[0].mxu0
  %404 = vmatprep.mubr.f32.mxu0 0.0
  %405 = vmatmul.mubr.f32.gmra.mrb[0].mxu0 %v148
  %v406 = vpop.f32.mrb[0].mxu0
  %v407 = vadd.f32 %v81, %v406
  %v408 = vpop.f32.mrb[0].mxu0
  %409 = vmatprep.mubr.f32.mxu0 0.0
  %410 = vmatmul.mubr.f32.gmra.mrb[0].mxu0 %v151
  %v411 = vpop.f32.mrb[0].mxu0
  %v412 = vadd.f32 %v81, %v411
  %v413 = vpop.f32.mrb[0].mxu0
  %414 = vmatprep.mubr.f32.mxu0 0.0
  %415 = vmatmul.mubr.f32.gmra.mrb[0].mxu0 %v154
  %v416 = vpop.f32.mrb[0].mxu0
  %v417 = vadd.f32 %v81, %v416
  %v418 = vpop.f32.mrb[0].mxu0
  %419 = vmatprep.mubr.f32.mxu0 0.0
  %420 = vmatmul.mubr.f32.gmra.mrb[0].mxu0 %v157
  %v421 = vpop.f32.mrb[0].mxu0
  %v422 = vadd.f32 %v81, %v421
  %v423 = vpop.f32.mrb[0].mxu0
  %424 = vmatprep.mubr.f32.mxu0 0.0
  %425 = vmatmul.mubr.f32.gmra.mrb[0].mxu0 %v160
  %v426 = vpop.f32.mrb[0].mxu0
  %v427 = vadd.f32 %v81, %v426
  %v428 = vpop.f32.mrb[0].mxu0
  %429 = vmatprep.mubr.f32.mxu0 0.0
  %430 = vmatmul.mubr.f32.gmra.mrb[0].mxu0 %v163
  %v431 = vpop.f32.mrb[0].mxu0
  %v432 = vadd.f32 %v81, %v431
  %v433 = vpop.f32.mrb[0].mxu0
  %434 = vmatprep.mubr.f32.mxu0 0.0
  %435 = vmatmul.mubr.f32.gmra.mrb[0].mxu0 %v166
  %v436 = vpop.f32.mrb[0].mxu0
  %v437 = vadd.f32 %v81, %v436
  %v438 = vpop.f32.mrb[0].mxu0
  %439 = vmatprep.mubr.f32.mxu0 0.0
  %440 = vmatmul.mubr.f32.gmra.mrb[0].mxu0 %v169
  %v441 = vpop.f32.mrb[0].mxu0
  %v442 = vadd.f32 %v81, %v441
  %v443 = vpop.f32.mrb[0].mxu0
  %444 = vmatprep.mubr.f32.mxu0 0.0
  %445 = vmatmul.mubr.f32.gmra.mrb[0].mxu0 %v172
  %v446 = vpop.f32.mrb[0].mxu0
  %v447 = vadd.f32 %v81, %v446
  %v448 = vpop.f32.mrb[0].mxu0
  %449 = vmatprep.mubr.f32.mxu0 0.0
  %450 = vmatmul.mubr.f32.gmra.mrb[0].mxu0 %v175
  %v451 = vpop.f32.mrb[0].mxu0
  %v452 = vadd.f32 %v81, %v451
  %v453 = vpop.f32.mrb[0].mxu0
  %454 = vmatprep.mubr.f32.mxu0 0.0
  %455 = vmatmul.mubr.f32.gmra.mrb[0].mxu0 %v178
  %v456 = vpop.f32.mrb[0].mxu0
  %v457 = vadd.f32 %v81, %v456
  %v458 = vpop.f32.mrb[0].mxu0
  %459 = vmatprep.mubr.f32.mxu0 0.0
  %460 = vmatmul.mubr.f32.gmra.mrb[0].mxu0 %v181
  %v461 = vpop.f32.mrb[0].mxu0
  %v462 = vadd.f32 %v81, %v461
  %v463 = vpop.f32.mrb[0].mxu0
  %464 = vmatprep.mubr.f32.mxu0 0.0
  %465 = vmatmul.mubr.f32.gmra.mrb[0].mxu0 %v184
  %v466 = vpop.f32.mrb[0].mxu0
  %v467 = vadd.f32 %v81, %v466
  %v468 = vpop.f32.mrb[0].mxu0
  %469 = vmatprep.mubr.f32.mxu0 0.0
  %470 = vmatmul.mubr.f32.gmra.mrb[0].mxu0 %v187
  %v471 = vpop.f32.mrb[0].mxu0
  %v472 = vadd.f32 %v81, %v471
  %v473 = vpop.f32.mrb[0].mxu0
  %474 = vmatprep.mubr.f32.mxu0 0.0
  %475 = vmatmul.mubr.f32.gmra.mrb[0].mxu0 %v190
  %v476 = vpop.f32.mrb[0].mxu0
  %v477 = vadd.f32 %v81, %v476
  %v478 = vpop.f32.mrb[0].mxu0
  %479 = vmatprep.mubr.f32.mxu0 0.0
  %480 = vmatmul.mubr.f32.gmra.mrb[0].mxu0 %v193
  %v481 = vpop.f32.mrb[0].mxu0
  %v482 = vadd.f32 %v81, %v481
  %v483 = vpop.f32.mrb[0].mxu0
  %484 = vmatprep.mubr.f32.mxu0 0.0
  %485 = vmatmul.mubr.f32.gmra.mrb[0].mxu0 %v196
  %v486 = vpop.f32.mrb[0].mxu0
  %v487 = vadd.f32 %v81, %v486
  %v488 = vpop.f32.mrb[0].mxu0
  %489 = vmatprep.mubr.f32.mxu0 0.0
  %490 = vmatmul.mubr.f32.gmra.mrb[0].mxu0 %v199
  %v491 = vpop.f32.mrb[0].mxu0
  %v492 = vadd.f32 %v81, %v491
  %v493 = vpop.f32.mrb[0].mxu0
  %494 = vmatprep.mubr.f32.mxu0 0.0
  %495 = vmatmul.mubr.f32.gmra.mrb[0].mxu0 %v202
  %v496 = vpop.f32.mrb[0].mxu0
  %v497 = vadd.f32 %v81, %v496
  %v498 = vpop.f32.mrb[0].mxu0
  %499 = vmatprep.mubr.f32.mxu0 0.0
  %500 = vmatmul.mubr.f32.gmra.mrb[0].mxu0 %v205
  %v501 = vpop.f32.mrb[0].mxu0
  %v502 = vadd.f32 %v81, %v501
  %v503 = vpop.f32.mrb[0].mxu0
  %504 = vmatprep.mubr.f32.mxu0 0.0
  %505 = vmatmul.mubr.f32.gmra.mrb[0].mxu0 %v208
  %v506 = vpop.f32.mrb[0].mxu0
  %v507 = vadd.f32 %v81, %v506
  %v508 = vpop.f32.mrb[0].mxu0
  %509 = vmatprep.mubr.f32.mxu0 0.0
  %510 = vmatmul.mubr.f32.gmra.mrb[0].mxu0 %v211
  %v511 = vpop.f32.mrb[0].mxu0
  %v512 = vadd.f32 %v81, %v511
  %v513 = vpop.f32.mrb[0].mxu0
  %514 = vmatprep.mubr.f32.mxu0 0.0
  %515 = vmatmul.mubr.f32.gmra.mrb[0].mxu0 %v214
  %v516 = vpop.f32.mrb[0].mxu0
  %v517 = vadd.f32 %v81, %v516
  %v518 = vpop.f32.mrb[0].mxu0
  %519 = vmatprep.mubr.f32.mxu0 0.0
  %520 = vmatmul.mubr.f32.gmra.mrb[0].mxu0 %v217
  %v521 = vpop.f32.mrb[0].mxu0
  %v522 = vadd.f32 %v81, %v521
  %v523 = vpop.f32.mrb[0].mxu0
  %524 = vmatprep.mubr.f32.mxu0 0.0
  %525 = vmatmul.mubr.f32.gmra.mrb[0].mxu0 %v220
  %v526 = vpop.f32.mrb[0].mxu0
  %v527 = vadd.f32 %v81, %v526
  %v528 = vpop.f32.mrb[0].mxu0
  %529 = vmatprep.mubr.f32.mxu0 0.0
  %530 = vmatmul.mubr.f32.gmra.mrb[0].mxu0 %v223
  %v531 = vpop.f32.mrb[0].mxu0
  %v532 = vadd.f32 %v81, %v531
  %v533 = vpop.f32.mrb[0].mxu0
  %534 = vmatprep.mubr.f32.mxu0 0.0
  %535 = vmatmul.mubr.f32.gmra.mrb[0].mxu0 %v226
  %v536 = vpop.f32.mrb[0].mxu0
  %v537 = vadd.f32 %v81, %v536
  %v538 = vpop.f32.mrb[0].mxu0
  %539 = vmatprep.mubr.f32.mxu0 0.0
  %540 = vmatmul.mubr.f32.gmra.mrb[0].mxu0 %v229
  %v541 = vpop.f32.mrb[0].mxu0
  %v542 = vadd.f32 %v81, %v541
  %v543 = vpop.f32.mrb[0].mxu0
  %544 = vdwg.mxu0
  %v545 = vmax.f32 %v302, 0.0
  %v546 = vmax.f32 %v307, 0.0
  %v547 = vmax.f32 %v312, 0.0
  %v548 = vmax.f32 %v317, 0.0
  %v549 = vmax.f32 %v322, 0.0
  %v550 = vmax.f32 %v327, 0.0
  %v551 = vmax.f32 %v332, 0.0
  %v552 = vmax.f32 %v337, 0.0
  %v553 = vmax.f32 %v342, 0.0
  %v554 = vmax.f32 %v347, 0.0
  %v555 = vmax.f32 %v352, 0.0
  %v556 = vmax.f32 %v357, 0.0
  %v557 = vmax.f32 %v362, 0.0
  %v558 = vmax.f32 %v367, 0.0
  %v559 = vmax.f32 %v372, 0.0
  %v560 = vmax.f32 %v377, 0.0
  %v561 = vmax.f32 %v382, 0.0
  %v562 = vmax.f32 %v387, 0.0
  %v563 = vmax.f32 %v392, 0.0
  %v564 = vmax.f32 %v397, 0.0
  %v565 = vmax.f32 %v402, 0.0
  %v566 = vmax.f32 %v407, 0.0
  %v567 = vmax.f32 %v412, 0.0
  %v568 = vmax.f32 %v417, 0.0
  %v569 = vmax.f32 %v422, 0.0
  %v570 = vmax.f32 %v427, 0.0
  %v571 = vmax.f32 %v432, 0.0
  %v572 = vmax.f32 %v437, 0.0
  %v573 = vmax.f32 %v442, 0.0
  %v574 = vmax.f32 %v447, 0.0
  %v575 = vmax.f32 %v452, 0.0
  %v576 = vmax.f32 %v457, 0.0
  %v577 = vmax.f32 %v462, 0.0
  %v578 = vmax.f32 %v467, 0.0
  %v579 = vmax.f32 %v472, 0.0
  %v580 = vmax.f32 %v477, 0.0
  %v581 = vmax.f32 %v482, 0.0
  %v582 = vmax.f32 %v487, 0.0
  %v583 = vmax.f32 %v492, 0.0
  %v584 = vmax.f32 %v497, 0.0
  %v585 = vmax.f32 %v502, 0.0
  %v586 = vmax.f32 %v507, 0.0
  %v587 = vmax.f32 %v512, 0.0
  %v588 = vmax.f32 %v517, 0.0
  %v589 = vmax.f32 %v522, 0.0
  %v590 = vmax.f32 %v527, 0.0
  %v591 = vmax.f32 %v532, 0.0
  %v592 = vmax.f32 %v537, 0.0
  %v593 = vmax.f32 %v542, 0.0
  %v594 = vld [vmem:[%s1] sm:$0xff]
  %v595 = vld [vmem:[%s1 + $0x8] sm:$0xff]
  %v596 = vld [vmem:[%s1 + $0x10] sm:$0xff]
  %v597 = vld [vmem:[%s1 + $0x18] sm:$0xff]
  %v598 = vld [vmem:[%s1 + $0x20] sm:$0xff]
  %v599 = vld [vmem:[%s1 + $0x28] sm:$0xff]
  %v600 = vld [vmem:[%s1 + $0x30] sm:$0xff]
  %v601 = vld [vmem:[%s1 + $0x38] sm:$0xff]
  %v602 = vld [vmem:[%s1 + $0x40] sm:$0xff]
  %v603 = vld [vmem:[%s1 + $0x48] sm:$0xff]
  %v604 = vld [vmem:[%s1 + $0x50] sm:$0xff]
  %v605 = vld [vmem:[%s1 + $0x58] sm:$0xff]
  %v606 = vld [vmem:[%s1 + $0x60] sm:$0xff]
  %v607 = vld [vmem:[%s1 + $0x68] sm:$0xff]
  %v608 = vld [vmem:[%s1 + $0x70] sm:$0xff]
  %v609 = vld [vmem:[%s1 + $0x78] sm:$0xff]
  %v610 = vld [vmem:[%s1 + $0x80] sm:$0xff]
  %v611 = vld [vmem:[%s1 + $0x88] sm:$0xff]
  %v612 = vld [vmem:[%s1 + $0x90] sm:$0xff]
  %v613 = vld [vmem:[%s1 + $0x98] sm:$0xff]
  %v614 = vld [vmem:[%s1 + $0xa0] sm:$0xff]
  %v615 = vld [vmem:[%s1 + $0xa8] sm:$0xff]
  %v616 = vld [vmem:[%s1 + $0xb0] sm:$0xff]
  %v617 = vld [vmem:[%s1 + $0xb8] sm:$0xff]
  %v618 = vld [vmem:[%s1 + $0xc0] sm:$0xff]
  %v619 = vld [vmem:[%s1 + $0xc8] sm:$0xff]
  %v620 = vld [vmem:[%s1 + $0xd0] sm:$0xff]
  %v621 = vld [vmem:[%s1 + $0xd8] sm:$0xff]
  %v622 = vld [vmem:[%s1 + $0xe0] sm:$0xff]
  %v623 = vld [vmem:[%s1 + $0xe8] sm:$0xff]
  %v624 = vld [vmem:[%s1 + $0xf0] sm:$0xff]
  %v625 = vld [vmem:[%s1 + $0xf8] sm:$0xff]
  %v626 = vld [vmem:[%s1 + $0x100] sm:$0xff]
  %v627 = vld [vmem:[%s1 + $0x108] sm:$0xff]
  %v628 = vld [vmem:[%s1 + $0x110] sm:$0xff]
  %v629 = vld [vmem:[%s1 + $0x118] sm:$0xff]
  %v630 = vld [vmem:[%s1 + $0x120] sm:$0xff]
  %v631 = vld [vmem:[%s1 + $0x128] sm:$0xff]
  %v632 = vld [vmem:[%s1 + $0x130] sm:$0xff]
  %v633 = vld [vmem:[%s1 + $0x138] sm:$0xff]
  %v634 = vld [vmem:[%s1 + $0x140] sm:$0xff]
  %v635 = vld [vmem:[%s1 + $0x148] sm:$0xff]
  %v636 = vld [vmem:[%s1 + $0x150] sm:$0xff]
  %v637 = vld [vmem:[%s1 + $0x158] sm:$0xff]
  %v638 = vld [vmem:[%s1 + $0x160] sm:$0xff]
  %v639 = vld [vmem:[%s1 + $0x168] sm:$0xff]
  %v640 = vld [vmem:[%s1 + $0x170] sm:$0xff]
  %v641 = vld [vmem:[%s1 + $0x178] sm:$0xff]
  %v642 = vld [vmem:[%s1 + $0x180] sm:$0xff]
  %v644 = vsel %vm83, %v594, 0
  %v647 = vsel %vm83, %v595, 0
  %v650 = vsel %vm83, %v596, 0
  %v653 = vsel %vm83, %v597, 0
  %v656 = vsel %vm83, %v598, 0
  %v659 = vsel %vm83, %v599, 0
  %v662 = vsel %vm83, %v600, 0
  %v665 = vsel %vm83, %v601, 0
  %v668 = vsel %vm83, %v602, 0
  %v671 = vsel %vm83, %v603, 0
  %v674 = vsel %vm83, %v604, 0
  %v677 = vsel %vm83, %v605, 0
  %v680 = vsel %vm83, %v606, 0
  %v683 = vsel %vm83, %v607, 0
  %v686 = vsel %vm83, %v608, 0
  %v689 = vsel %vm83, %v609, 0
  %v692 = vsel %vm83, %v610, 0
  %v695 = vsel %vm83, %v611, 0
  %v698 = vsel %vm83, %v612, 0
  %v701 = vsel %vm83, %v613, 0
  %v704 = vsel %vm83, %v614, 0
  %v707 = vsel %vm83, %v615, 0
  %v710 = vsel %vm83, %v616, 0
  %v713 = vsel %vm83, %v617, 0
  %v716 = vsel %vm83, %v618, 0
  %v719 = vsel %vm83, %v619, 0
  %v722 = vsel %vm83, %v620, 0
  %v725 = vsel %vm83, %v621, 0
  %v728 = vsel %vm83, %v622, 0
  %v731 = vsel %vm83, %v623, 0
  %v734 = vsel %vm83, %v624, 0
  %v737 = vsel %vm83, %v625, 0
  %v740 = vsel %vm83, %v626, 0
  %v743 = vsel %vm83, %v627, 0
  %v746 = vsel %vm83, %v628, 0
  %v749 = vsel %vm83, %v629, 0
  %v752 = vsel %vm83, %v630, 0
  %v755 = vsel %vm83, %v631, 0
  %v758 = vsel %vm83, %v632, 0
  %v761 = vsel %vm83, %v633, 0
  %v764 = vsel %vm83, %v634, 0
  %v767 = vsel %vm83, %v635, 0
  %v770 = vsel %vm83, %v636, 0
  %v773 = vsel %vm83, %v637, 0
  %v776 = vsel %vm83, %v638, 0
  %v779 = vsel %vm83, %v639, 0
  %v782 = vsel %vm83, %v640, 0
  %v785 = vsel %vm83, %v641, 0
  %v788 = vsel %vm83, %v642, 0
  %790 = vmatprep.subr.mxu0 0.0
  %791 = vmatpush1.msra.mxu0 %v23
  %792 = vmatprep.subr.mxu0 0.0
  %793 = vmatpush1.msra.mxu0 %v24
  %794 = vmatprep.subr.mxu0 0.0
  %795 = vmatpush1.msra.mxu0 %v25
  %796 = vmatprep.subr.mxu0 0.0
  %797 = vmatpush1.msra.mxu0 %v233
  %798 = vmatprep.subr.mxu0 0.0
  %799 = vmatpush1.msra.mxu0 0.0
  %800 = vmatprep.subr.mxu0 0.0
  %801 = vmatpush1.msra.mxu0 0.0
  %802 = vmatprep.subr.mxu0 0.0
  %803 = vmatpush1.msra.mxu0 0.0
  %804 = vmatprep.subr.mxu0 0.0
  %805 = vmatpush1.msra.mxu0 0.0
  %806 = vmatprep.subr.mxu0 0.0
  %807 = vmatpush1.msra.mxu0 0.0
  %808 = vmatprep.subr.mxu0 0.0
  %809 = vmatpush1.msra.mxu0 0.0
  %810 = vmatprep.subr.mxu0 0.0
  %811 = vmatpush1.msra.mxu0 0.0
  %812 = vmatprep.subr.mxu0 0.0
  %813 = vmatpush1.msra.mxu0 0.0
  %814 = vmatprep.subr.mxu0 0.0
  %815 = vmatpush1.msra.mxu0 0.0
  %816 = vmatprep.subr.mxu0 0.0
  %817 = vmatpush1.msra.mxu0 0.0
  %818 = vmatprep.subr.mxu0 0.0
  %819 = vmatpush1.msra.mxu0 0.0
  %820 = vmatprep.subr.mxu0 0.0
  %821 = vmatpush1.msra.mxu0 0.0
  %822 = vmatprep.subr.mxu0 0.0
  %823 = vmatpush1.msra.mxu0 0.0
  %824 = vmatprep.subr.mxu0 0.0
  %825 = vmatpush1.msra.mxu0 0.0
  %826 = vmatprep.subr.mxu0 0.0
  %827 = vmatpush1.msra.mxu0 0.0
  %828 = vmatprep.subr.mxu0 0.0
  %829 = vmatpush1.msra.mxu0 0.0
  %830 = vmatprep.subr.mxu0 0.0
  %831 = vmatpush1.msra.mxu0 0.0
  %832 = vmatprep.subr.mxu0 0.0
  %833 = vmatpush1.msra.mxu0 0.0
  %834 = vmatprep.subr.mxu0 0.0
  %835 = vmatpush1.msra.mxu0 0.0
  %836 = vmatprep.subr.mxu0 0.0
  %837 = vmatpush1.msra.mxu0 0.0
  %838 = vmatprep.subr.mxu0 0.0
  %839 = vmatpush1.msra.mxu0 0.0
  %840 = vmatprep.subr.mxu0 0.0
  %841 = vmatpush1.msra.mxu0 0.0
  %842 = vmatprep.subr.mxu0 0.0
  %843 = vmatpush1.msra.mxu0 0.0
  %844 = vmatprep.subr.mxu0 0.0
  %845 = vmatpush1.msra.mxu0 0.0
  %846 = vmatprep.subr.mxu0 0.0
  %847 = vmatpush1.msra.mxu0 0.0
  %848 = vmatprep.subr.mxu0 0.0
  %849 = vmatpush1.msra.mxu0 0.0
  %850 = vmatprep.subr.mxu0 0.0
  %851 = vmatpush1.msra.mxu0 0.0
  %852 = vmatprep.subr.mxu0 0.0
  %853 = vmatpush1.msra.mxu0 0.0
  %854 = vmatprep.mubr.f32.mxu0 0.0
  %855 = vmatmul.mubr.f32.gmra.mrb[0].mxu0 %v644
  %v856 = vpop.f32.mrb[0].mxu0
  %v857 = vadd.f32 %v81, %v856
  %v858 = vpop.f32.mrb[0].mxu0
  %859 = vmatprep.mubr.f32.mxu0 0.0
  %860 = vmatmul.mubr.f32.gmra.mrb[0].mxu0 %v647
  %v861 = vpop.f32.mrb[0].mxu0
  %v862 = vadd.f32 %v81, %v861
  %v863 = vpop.f32.mrb[0].mxu0
  %864 = vmatprep.mubr.f32.mxu0 0.0
  %865 = vmatmul.mubr.f32.gmra.mrb[0].mxu0 %v650
  %v866 = vpop.f32.mrb[0].mxu0
  %v867 = vadd.f32 %v81, %v866
  %v868 = vpop.f32.mrb[0].mxu0
  %869 = vmatprep.mubr.f32.mxu0 0.0
  %870 = vmatmul.mubr.f32.gmra.mrb[0].mxu0 %v653
  %v871 = vpop.f32.mrb[0].mxu0
  %v872 = vadd.f32 %v81, %v871
  %v873 = vpop.f32.mrb[0].mxu0
  %874 = vmatprep.mubr.f32.mxu0 0.0
  %875 = vmatmul.mubr.f32.gmra.mrb[0].mxu0 %v656
  %v876 = vpop.f32.mrb[0].mxu0
  %v877 = vadd.f32 %v81, %v876
  %v878 = vpop.f32.mrb[0].mxu0
  %879 = vmatprep.mubr.f32.mxu0 0.0
  %880 = vmatmul.mubr.f32.gmra.mrb[0].mxu0 %v659
  %v881 = vpop.f32.mrb[0].mxu0
  %v882 = vadd.f32 %v81, %v881
  %v883 = vpop.f32.mrb[0].mxu0
  %884 = vmatprep.mubr.f32.mxu0 0.0
  %885 = vmatmul.mubr.f32.gmra.mrb[0].mxu0 %v662
  %v886 = vpop.f32.mrb[0].mxu0
  %v887 = vadd.f32 %v81, %v886
  %v888 = vpop.f32.mrb[0].mxu0
  %889 = vmatprep.mubr.f32.mxu0 0.0
  %890 = vmatmul.mubr.f32.gmra.mrb[0].mxu0 %v665
  %v891 = vpop.f32.mrb[0].mxu0
  %v892 = vadd.f32 %v81, %v891
  %v893 = vpop.f32.mrb[0].mxu0
  %894 = vmatprep.mubr.f32.mxu0 0.0
  %895 = vmatmul.mubr.f32.gmra.mrb[0].mxu0 %v668
  %v896 = vpop.f32.mrb[0].mxu0
  %v897 = vadd.f32 %v81, %v896
  %v898 = vpop.f32.mrb[0].mxu0
  %899 = vmatprep.mubr.f32.mxu0 0.0
  %900 = vmatmul.mubr.f32.gmra.mrb[0].mxu0 %v671
  %v901 = vpop.f32.mrb[0].mxu0
  %v902 = vadd.f32 %v81, %v901
  %v903 = vpop.f32.mrb[0].mxu0
  %904 = vmatprep.mubr.f32.mxu0 0.0
  %905 = vmatmul.mubr.f32.gmra.mrb[0].mxu0 %v674
  %v906 = vpop.f32.mrb[0].mxu0
  %v907 = vadd.f32 %v81, %v906
  %v908 = vpop.f32.mrb[0].mxu0
  %909 = vmatprep.mubr.f32.mxu0 0.0
  %910 = vmatmul.mubr.f32.gmra.mrb[0].mxu0 %v677
  %v911 = vpop.f32.mrb[0].mxu0
  %v912 = vadd.f32 %v81, %v911
  %v913 = vpop.f32.mrb[0].mxu0
  %914 = vmatprep.mubr.f32.mxu0 0.0
  %915 = vmatmul.mubr.f32.gmra.mrb[0].mxu0 %v680
  %v916 = vpop.f32.mrb[0].mxu0
  %v917 = vadd.f32 %v81, %v916
  %v918 = vpop.f32.mrb[0].mxu0
  %919 = vmatprep.mubr.f32.mxu0 0.0
  %920 = vmatmul.mubr.f32.gmra.mrb[0].mxu0 %v683
  %v921 = vpop.f32.mrb[0].mxu0
  %v922 = vadd.f32 %v81, %v921
  %v923 = vpop.f32.mrb[0].mxu0
  %924 = vmatprep.mubr.f32.mxu0 0.0
  %925 = vmatmul.mubr.f32.gmra.mrb[0].mxu0 %v686
  %v926 = vpop.f32.mrb[0].mxu0
  %v927 = vadd.f32 %v81, %v926
  %v928 = vpop.f32.mrb[0].mxu0
  %929 = vmatprep.mubr.f32.mxu0 0.0
  %930 = vmatmul.mubr.f32.gmra.mrb[0].mxu0 %v689
  %v931 = vpop.f32.mrb[0].mxu0
  %v932 = vadd.f32 %v81, %v931
  %v933 = vpop.f32.mrb[0].mxu0
  %934 = vmatprep.mubr.f32.mxu0 0.0
  %935 = vmatmul.mubr.f32.gmra.mrb[0].mxu0 %v692
  %v936 = vpop.f32.mrb[0].mxu0
  %v937 = vadd.f32 %v81, %v936
  %v938 = vpop.f32.mrb[0].mxu0
  %939 = vmatprep.mubr.f32.mxu0 0.0
  %940 = vmatmul.mubr.f32.gmra.mrb[0].mxu0 %v695
  %v941 = vpop.f32.mrb[0].mxu0
  %v942 = vadd.f32 %v81, %v941
  %v943 = vpop.f32.mrb[0].mxu0
  %944 = vmatprep.mubr.f32.mxu0 0.0
  %945 = vmatmul.mubr.f32.gmra.mrb[0].mxu0 %v698
  %v946 = vpop.f32.mrb[0].mxu0
  %v947 = vadd.f32 %v81, %v946
  %v948 = vpop.f32.mrb[0].mxu0
  %949 = vmatprep.mubr.f32.mxu0 0.0
  %950 = vmatmul.mubr.f32.gmra.mrb[0].mxu0 %v701
  %v951 = vpop.f32.mrb[0].mxu0
  %v952 = vadd.f32 %v81, %v951
  %v953 = vpop.f32.mrb[0].mxu0
  %954 = vmatprep.mubr.f32.mxu0 0.0
  %955 = vmatmul.mubr.f32.gmra.mrb[0].mxu0 %v704
  %v956 = vpop.f32.mrb[0].mxu0
  %v957 = vadd.f32 %v81, %v956
  %v958 = vpop.f32.mrb[0].mxu0
  %959 = vmatprep.mubr.f32.mxu0 0.0
  %960 = vmatmul.mubr.f32.gmra.mrb[0].mxu0 %v707
  %v961 = vpop.f32.mrb[0].mxu0
  %v962 = vadd.f32 %v81, %v961
  %v963 = vpop.f32.mrb[0].mxu0
  %964 = vmatprep.mubr.f32.mxu0 0.0
  %965 = vmatmul.mubr.f32.gmra.mrb[0].mxu0 %v710
  %v966 = vpop.f32.mrb[0].mxu0
  %v967 = vadd.f32 %v81, %v966
  %v968 = vpop.f32.mrb[0].mxu0
  %969 = vmatprep.mubr.f32.mxu0 0.0
  %970 = vmatmul.mubr.f32.gmra.mrb[0].mxu0 %v713
  %v971 = vpop.f32.mrb[0].mxu0
  %v972 = vadd.f32 %v81, %v971
  %v973 = vpop.f32.mrb[0].mxu0
  %974 = vmatprep.mubr.f32.mxu0 0.0
  %975 = vmatmul.mubr.f32.gmra.mrb[0].mxu0 %v716
  %v976 = vpop.f32.mrb[0].mxu0
  %v977 = vadd.f32 %v81, %v976
  %v978 = vpop.f32.mrb[0].mxu0
  %979 = vmatprep.mubr.f32.mxu0 0.0
  %980 = vmatmul.mubr.f32.gmra.mrb[0].mxu0 %v719
  %v981 = vpop.f32.mrb[0].mxu0
  %v982 = vadd.f32 %v81, %v981
  %v983 = vpop.f32.mrb[0].mxu0
  %984 = vmatprep.mubr.f32.mxu0 0.0
  %985 = vmatmul.mubr.f32.gmra.mrb[0].mxu0 %v722
  %v986 = vpop.f32.mrb[0].mxu0
  %v987 = vadd.f32 %v81, %v986
  %v988 = vpop.f32.mrb[0].mxu0
  %989 = vmatprep.mubr.f32.mxu0 0.0
  %990 = vmatmul.mubr.f32.gmra.mrb[0].mxu0 %v725
  %v991 = vpop.f32.mrb[0].mxu0
  %v992 = vadd.f32 %v81, %v991
  %v993 = vpop.f32.mrb[0].mxu0
  %994 = vmatprep.mubr.f32.mxu0 0.0
  %995 = vmatmul.mubr.f32.gmra.mrb[0].mxu0 %v728
  %v996 = vpop.f32.mrb[0].mxu0
  %v997 = vadd.f32 %v81, %v996
  %v998 = vpop.f32.mrb[0].mxu0
  %999 = vmatprep.mubr.f32.mxu0 0.0
  %1000 = vmatmul.mubr.f32.gmra.mrb[0].mxu0 %v731
  %v1001 = vpop.f32.mrb[0].mxu0
  %v1002 = vadd.f32 %v81, %v1001
  %v1003 = vpop.f32.mrb[0].mxu0
  %1004 = vmatprep.mubr.f32.mxu0 0.0
  %1005 = vmatmul.mubr.f32.gmra.mrb[0].mxu0 %v734
  %v1006 = vpop.f32.mrb[0].mxu0
  %v1007 = vadd.f32 %v81, %v1006
  %v1008 = vpop.f32.mrb[0].mxu0
  %1009 = vmatprep.mubr.f32.mxu0 0.0
  %1010 = vmatmul.mubr.f32.gmra.mrb[0].mxu0 %v737
  %v1011 = vpop.f32.mrb[0].mxu0
  %v1012 = vadd.f32 %v81, %v1011
  %v1013 = vpop.f32.mrb[0].mxu0
  %1014 = vmatprep.mubr.f32.mxu0 0.0
  %1015 = vmatmul.mubr.f32.gmra.mrb[0].mxu0 %v740
  %v1016 = vpop.f32.mrb[0].mxu0
  %v1017 = vadd.f32 %v81, %v1016
  %v1018 = vpop.f32.mrb[0].mxu0
  %1019 = vmatprep.mubr.f32.mxu0 0.0
  %1020 = vmatmul.mubr.f32.gmra.mrb[0].mxu0 %v743
  %v1021 = vpop.f32.mrb[0].mxu0
  %v1022 = vadd.f32 %v81, %v1021
  %v1023 = vpop.f32.mrb[0].mxu0
  %1024 = vmatprep.mubr.f32.mxu0 0.0
  %1025 = vmatmul.mubr.f32.gmra.mrb[0].mxu0 %v746
  %v1026 = vpop.f32.mrb[0].mxu0
  %v1027 = vadd.f32 %v81, %v1026
  %v1028 = vpop.f32.mrb[0].mxu0
  %1029 = vmatprep.mubr.f32.mxu0 0.0
  %1030 = vmatmul.mubr.f32.gmra.mrb[0].mxu0 %v749
  %v1031 = vpop.f32.mrb[0].mxu0
  %v1032 = vadd.f32 %v81, %v1031
  %v1033 = vpop.f32.mrb[0].mxu0
  %1034 = vmatprep.mubr.f32.mxu0 0.0
  %1035 = vmatmul.mubr.f32.gmra.mrb[0].mxu0 %v752
  %v1036 = vpop.f32.mrb[0].mxu0
  %v1037 = vadd.f32 %v81, %v1036
  %v1038 = vpop.f32.mrb[0].mxu0
  %1039 = vmatprep.mubr.f32.mxu0 0.0
  %1040 = vmatmul.mubr.f32.gmra.mrb[0].mxu0 %v755
  %v1041 = vpop.f32.mrb[0].mxu0
  %v1042 = vadd.f32 %v81, %v1041
  %v1043 = vpop.f32.mrb[0].mxu0
  %1044 = vmatprep.mubr.f32.mxu0 0.0
  %1045 = vmatmul.mubr.f32.gmra.mrb[0].mxu0 %v758
  %v1046 = vpop.f32.mrb[0].mxu0
  %v1047 = vadd.f32 %v81, %v1046
  %v1048 = vpop.f32.mrb[0].mxu0
  %1049 = vmatprep.mubr.f32.mxu0 0.0
  %1050 = vmatmul.mubr.f32.gmra.mrb[0].mxu0 %v761
  %v1051 = vpop.f32.mrb[0].mxu0
  %v1052 = vadd.f32 %v81, %v1051
  %v1053 = vpop.f32.mrb[0].mxu0
  %1054 = vmatprep.mubr.f32.mxu0 0.0
  %1055 = vmatmul.mubr.f32.gmra.mrb[0].mxu0 %v764
  %v1056 = vpop.f32.mrb[0].mxu0
  %v1057 = vadd.f32 %v81, %v1056
  %v1058 = vpop.f32.mrb[0].mxu0
  %1059 = vmatprep.mubr.f32.mxu0 0.0
  %1060 = vmatmul.mubr.f32.gmra.mrb[0].mxu0 %v767
  %v1061 = vpop.f32.mrb[0].mxu0
  %v1062 = vadd.f32 %v81, %v1061
  %v1063 = vpop.f32.mrb[0].mxu0
  %1064 = vmatprep.mubr.f32.mxu0 0.0
  %1065 = vmatmul.mubr.f32.gmra.mrb[0].mxu0 %v770
  %v1066 = vpop.f32.mrb[0].mxu0
  %v1067 = vadd.f32 %v81, %v1066
  %v1068 = vpop.f32.mrb[0].mxu0
  %1069 = vmatprep.mubr.f32.mxu0 0.0
  %1070 = vmatmul.mubr.f32.gmra.mrb[0].mxu0 %v773
  %v1071 = vpop.f32.mrb[0].mxu0
  %v1072 = vadd.f32 %v81, %v1071
  %v1073 = vpop.f32.mrb[0].mxu0
  %1074 = vmatprep.mubr.f32.mxu0 0.0
  %1075 = vmatmul.mubr.f32.gmra.mrb[0].mxu0 %v776
  %v1076 = vpop.f32.mrb[0].mxu0
  %v1077 = vadd.f32 %v81, %v1076
  %v1078 = vpop.f32.mrb[0].mxu0
  %1079 = vmatprep.mubr.f32.mxu0 0.0
  %1080 = vmatmul.mubr.f32.gmra.mrb[0].mxu0 %v779
  %v1081 = vpop.f32.mrb[0].mxu0
  %v1082 = vadd.f32 %v81, %v1081
  %v1083 = vpop.f32.mrb[0].mxu0
  %1084 = vmatprep.mubr.f32.mxu0 0.0
  %1085 = vmatmul.mubr.f32.gmra.mrb[0].mxu0 %v782
  %v1086 = vpop.f32.mrb[0].mxu0
  %v1087 = vadd.f32 %v81, %v1086
  %v1088 = vpop.f32.mrb[0].mxu0
  %1089 = vmatprep.mubr.f32.mxu0 0.0
  %1090 = vmatmul.mubr.f32.gmra.mrb[0].mxu0 %v785
  %v1091 = vpop.f32.mrb[0].mxu0
  %v1092 = vadd.f32 %v81, %v1091
  %v1093 = vpop.f32.mrb[0].mxu0
  %1094 = vmatprep.mubr.f32.mxu0 0.0
  %1095 = vmatmul.mubr.f32.gmra.mrb[0].mxu0 %v788
  %v1096 = vpop.f32.mrb[0].mxu0
  %v1097 = vadd.f32 %v81, %v1096
  %v1098 = vpop.f32.mrb[0].mxu0
  %1099 = vdwg.mxu0
  %v1100 = vmax.f32 %v857, 0.0
  %v1101 = vmax.f32 %v862, 0.0
  %v1102 = vmax.f32 %v867, 0.0
  %v1103 = vmax.f32 %v872, 0.0
  %v1104 = vmax.f32 %v877, 0.0
  %v1105 = vmax.f32 %v882, 0.0
  %v1106 = vmax.f32 %v887, 0.0
  %v1107 = vmax.f32 %v892, 0.0
  %v1108 = vmax.f32 %v897, 0.0
  %v1109 = vmax.f32 %v902, 0.0
  %v1110 = vmax.f32 %v907, 0.0
  %v1111 = vmax.f32 %v912, 0.0
  %v1112 = vmax.f32 %v917, 0.0
  %v1113 = vmax.f32 %v922, 0.0
  %v1114 = vmax.f32 %v927, 0.0
  %v1115 = vmax.f32 %v932, 0.0
  %v1116 = vmax.f32 %v937, 0.0
  %v1117 = vmax.f32 %v942, 0.0
  %v1118 = vmax.f32 %v947, 0.0
  %v1119 = vmax.f32 %v952, 0.0
  %v1120 = vmax.f32 %v957, 0.0
  %v1121 = vmax.f32 %v962, 0.0
  %v1122 = vmax.f32 %v967, 0.0
  %v1123 = vmax.f32 %v972, 0.0
  %v1124 = vmax.f32 %v977, 0.0
  %v1125 = vmax.f32 %v982, 0.0
  %v1126 = vmax.f32 %v987, 0.0
  %v1127 = vmax.f32 %v992, 0.0
  %v1128 = vmax.f32 %v997, 0.0
  %v1129 = vmax.f32 %v1002, 0.0
  %v1130 = vmax.f32 %v1007, 0.0
  %v1131 = vmax.f32 %v1012, 0.0
  %v1132 = vmax.f32 %v1017, 0.0
  %v1133 = vmax.f32 %v1022, 0.0
  %v1134 = vmax.f32 %v1027, 0.0
  %v1135 = vmax.f32 %v1032, 0.0
  %v1136 = vmax.f32 %v1037, 0.0
  %v1137 = vmax.f32 %v1042, 0.0
  %v1138 = vmax.f32 %v1047, 0.0
  %v1139 = vmax.f32 %v1052, 0.0
  %v1140 = vmax.f32 %v1057, 0.0
  %v1141 = vmax.f32 %v1062, 0.0
  %v1142 = vmax.f32 %v1067, 0.0
  %v1143 = vmax.f32 %v1072, 0.0
  %v1144 = vmax.f32 %v1077, 0.0
  %v1145 = vmax.f32 %v1082, 0.0
  %v1146 = vmax.f32 %v1087, 0.0
  %v1147 = vmax.f32 %v1092, 0.0
  %v1148 = vmax.f32 %v1097, 0.0
  %v1149 = vmax.f32 %v545, %v1100
  %v1150 = vmax.f32 %v546, %v1101
  %v1151 = vmax.f32 %v547, %v1102
  %v1152 = vmax.f32 %v548, %v1103
  %v1153 = vmax.f32 %v549, %v1104
  %v1154 = vmax.f32 %v550, %v1105
  %v1155 = vmax.f32 %v551, %v1106
  %v1156 = vmax.f32 %v552, %v1107
  %v1157 = vmax.f32 %v553, %v1108
  %v1158 = vmax.f32 %v554, %v1109
  %v1159 = vmax.f32 %v555, %v1110
  %v1160 = vmax.f32 %v556, %v1111
  %v1161 = vmax.f32 %v557, %v1112
  %v1162 = vmax.f32 %v558, %v1113
  %v1163 = vmax.f32 %v559, %v1114
  %v1164 = vmax.f32 %v560, %v1115
  %v1165 = vmax.f32 %v561, %v1116
  %v1166 = vmax.f32 %v562, %v1117
  %v1167 = vmax.f32 %v563, %v1118
  %v1168 = vmax.f32 %v564, %v1119
  %v1169 = vmax.f32 %v565, %v1120
  %v1170 = vmax.f32 %v566, %v1121
  %v1171 = vmax.f32 %v567, %v1122
  %v1172 = vmax.f32 %v568, %v1123
  %v1173 = vmax.f32 %v569, %v1124
  %v1174 = vmax.f32 %v570, %v1125
  %v1175 = vmax.f32 %v571, %v1126
  %v1176 = vmax.f32 %v572, %v1127
  %v1177 = vmax.f32 %v573, %v1128
  %v1178 = vmax.f32 %v574, %v1129
  %v1179 = vmax.f32 %v575, %v1130
  %v1180 = vmax.f32 %v576, %v1131
  %v1181 = vmax.f32 %v577, %v1132
  %v1182 = vmax.f32 %v578, %v1133
  %v1183 = vmax.f32 %v579, %v1134
  %v1184 = vmax.f32 %v580, %v1135
  %v1185 = vmax.f32 %v581, %v1136
  %v1186 = vmax.f32 %v582, %v1137
  %v1187 = vmax.f32 %v583, %v1138
  %v1188 = vmax.f32 %v584, %v1139
  %v1189 = vmax.f32 %v585, %v1140
  %v1190 = vmax.f32 %v586, %v1141
  %v1191 = vmax.f32 %v587, %v1142
  %v1192 = vmax.f32 %v588, %v1143
  %v1193 = vmax.f32 %v589, %v1144
  %v1194 = vmax.f32 %v590, %v1145
  %v1195 = vmax.f32 %v591, %v1146
  %v1196 = vmax.f32 %v592, %v1147
  %v1197 = vmax.f32 %v593, %v1148
  %v1198 = vld [vmem:[%s2] sm:$0xff]
  %v1199 = vld [vmem:[%s2 + $0x8] sm:$0xff]
  %v1200 = vld [vmem:[%s2 + $0x10] sm:$0xff]
  %v1201 = vld [vmem:[%s2 + $0x18] sm:$0xff]
  %v1202 = vld [vmem:[%s2 + $0x20] sm:$0xff]
  %v1203 = vld [vmem:[%s2 + $0x28] sm:$0xff]
  %v1204 = vld [vmem:[%s2 + $0x30] sm:$0xff]
  %v1205 = vld [vmem:[%s2 + $0x38] sm:$0xff]
  %v1206 = vld [vmem:[%s2 + $0x40] sm:$0xff]
  %v1207 = vld [vmem:[%s2 + $0x48] sm:$0xff]
  %v1208 = vld [vmem:[%s2 + $0x50] sm:$0xff]
  %v1209 = vld [vmem:[%s2 + $0x58] sm:$0xff]
  %v1210 = vld [vmem:[%s2 + $0x60] sm:$0xff]
  %v1211 = vld [vmem:[%s2 + $0x68] sm:$0xff]
  %v1212 = vld [vmem:[%s2 + $0x70] sm:$0xff]
  %v1213 = vld [vmem:[%s2 + $0x78] sm:$0xff]
  %v1214 = vld [vmem:[%s2 + $0x80] sm:$0xff]
  %v1215 = vld [vmem:[%s2 + $0x88] sm:$0xff]
  %v1216 = vld [vmem:[%s2 + $0x90] sm:$0xff]
  %v1217 = vld [vmem:[%s2 + $0x98] sm:$0xff]
  %v1218 = vld [vmem:[%s2 + $0xa0] sm:$0xff]
  %v1219 = vld [vmem:[%s2 + $0xa8] sm:$0xff]
  %v1220 = vld [vmem:[%s2 + $0xb0] sm:$0xff]
  %v1221 = vld [vmem:[%s2 + $0xb8] sm:$0xff]
  %v1222 = vld [vmem:[%s2 + $0xc0] sm:$0xff]
  %v1223 = vld [vmem:[%s2 + $0xc8] sm:$0xff]
  %v1224 = vld [vmem:[%s2 + $0xd0] sm:$0xff]
  %v1225 = vld [vmem:[%s2 + $0xd8] sm:$0xff]
  %v1226 = vld [vmem:[%s2 + $0xe0] sm:$0xff]
  %v1227 = vld [vmem:[%s2 + $0xe8] sm:$0xff]
  %v1228 = vld [vmem:[%s2 + $0xf0] sm:$0xff]
  %v1229 = vld [vmem:[%s2 + $0xf8] sm:$0xff]
  %v1230 = vld [vmem:[%s2 + $0x100] sm:$0xff]
  %v1231 = vld [vmem:[%s2 + $0x108] sm:$0xff]
  %v1232 = vld [vmem:[%s2 + $0x110] sm:$0xff]
  %v1233 = vld [vmem:[%s2 + $0x118] sm:$0xff]
  %v1234 = vld [vmem:[%s2 + $0x120] sm:$0xff]
  %v1235 = vld [vmem:[%s2 + $0x128] sm:$0xff]
  %v1236 = vld [vmem:[%s2 + $0x130] sm:$0xff]
  %v1237 = vld [vmem:[%s2 + $0x138] sm:$0xff]
  %v1238 = vld [vmem:[%s2 + $0x140] sm:$0xff]
  %v1239 = vld [vmem:[%s2 + $0x148] sm:$0xff]
  %v1240 = vld [vmem:[%s2 + $0x150] sm:$0xff]
  %v1241 = vld [vmem:[%s2 + $0x158] sm:$0xff]
  %v1242 = vld [vmem:[%s2 + $0x160] sm:$0xff]
  %v1243 = vld [vmem:[%s2 + $0x168] sm:$0xff]
  %v1244 = vld [vmem:[%s2 + $0x170] sm:$0xff]
  %v1245 = vld [vmem:[%s2 + $0x178] sm:$0xff]
  %v1246 = vld [vmem:[%s2 + $0x180] sm:$0xff]
  %v1248 = vsel %vm83, %v1198, 0
  %v1251 = vsel %vm83, %v1199, 0
  %v1254 = vsel %vm83, %v1200, 0
  %v1257 = vsel %vm83, %v1201, 0
  %v1260 = vsel %vm83, %v1202, 0
  %v1263 = vsel %vm83, %v1203, 0
  %v1266 = vsel %vm83, %v1204, 0
  %v1269 = vsel %vm83, %v1205, 0
  %v1272 = vsel %vm83, %v1206, 0
  %v1275 = vsel %vm83, %v1207, 0
  %v1278 = vsel %vm83, %v1208, 0
  %v1281 = vsel %vm83, %v1209, 0
  %v1284 = vsel %vm83, %v1210, 0
  %v1287 = vsel %vm83, %v1211, 0
  %v1290 = vsel %vm83, %v1212, 0
  %v1293 = vsel %vm83, %v1213, 0
  %v1296 = vsel %vm83, %v1214, 0
  %v1299 = vsel %vm83, %v1215, 0
  %v1302 = vsel %vm83, %v1216, 0
  %v1305 = vsel %vm83, %v1217, 0
  %v1308 = vsel %vm83, %v1218, 0
  %v1311 = vsel %vm83, %v1219, 0
  %v1314 = vsel %vm83, %v1220, 0
  %v1317 = vsel %vm83, %v1221, 0
  %v1320 = vsel %vm83, %v1222, 0
  %v1323 = vsel %vm83, %v1223, 0
  %v1326 = vsel %vm83, %v1224, 0
  %v1329 = vsel %vm83, %v1225, 0
  %v1332 = vsel %vm83, %v1226, 0
  %v1335 = vsel %vm83, %v1227, 0
  %v1338 = vsel %vm83, %v1228, 0
  %v1341 = vsel %vm83, %v1229, 0
  %v1344 = vsel %vm83, %v1230, 0
  %v1347 = vsel %vm83, %v1231, 0
  %v1350 = vsel %vm83, %v1232, 0
  %v1353 = vsel %vm83, %v1233, 0
  %v1356 = vsel %vm83, %v1234, 0
  %v1359 = vsel %vm83, %v1235, 0
  %v1362 = vsel %vm83, %v1236, 0
  %v1365 = vsel %vm83, %v1237, 0
  %v1368 = vsel %vm83, %v1238, 0
  %v1371 = vsel %vm83, %v1239, 0
  %v1374 = vsel %vm83, %v1240, 0
  %v1377 = vsel %vm83, %v1241, 0
  %v1380 = vsel %vm83, %v1242, 0
  %v1383 = vsel %vm83, %v1243, 0
  %v1386 = vsel %vm83, %v1244, 0
  %v1389 = vsel %vm83, %v1245, 0
  %v1392 = vsel %vm83, %v1246, 0
  %1394 = vmatprep.subr.mxu0 0.0
  %1395 = vmatpush1.msra.mxu0 %v23
  %1396 = vmatprep.subr.mxu0 0.0
  %1397 = vmatpush1.msra.mxu0 %v24
  %1398 = vmatprep.subr.mxu0 0.0
  %1399 = vmatpush1.msra.mxu0 %v25
  %1400 = vmatprep.subr.mxu0 0.0
  %1401 = vmatpush1.msra.mxu0 %v233
  %1402 = vmatprep.subr.mxu0 0.0
  %1403 = vmatpush1.msra.mxu0 0.0
  %1404 = vmatprep.subr.mxu0 0.0
  %1405 = vmatpush1.msra.mxu0 0.0
  %1406 = vmatprep.subr.mxu0 0.0
  %1407 = vmatpush1.msra.mxu0 0.0
  %1408 = vmatprep.subr.mxu0 0.0
  %1409 = vmatpush1.msra.mxu0 0.0
  %1410 = vmatprep.subr.mxu0 0.0
  %1411 = vmatpush1.msra.mxu0 0.0
  %1412 = vmatprep.subr.mxu0 0.0
  %1413 = vmatpush1.msra.mxu0 0.0
  %1414 = vmatprep.subr.mxu0 0.0
  %1415 = vmatpush1.msra.mxu0 0.0
  %1416 = vmatprep.subr.mxu0 0.0
  %1417 = vmatpush1.msra.mxu0 0.0
  %1418 = vmatprep.subr.mxu0 0.0
  %1419 = vmatpush1.msra.mxu0 0.0
  %1420 = vmatprep.subr.mxu0 0.0
  %1421 = vmatpush1.msra.mxu0 0.0
  %1422 = vmatprep.subr.mxu0 0.0
  %1423 = vmatpush1.msra.mxu0 0.0
  %1424 = vmatprep.subr.mxu0 0.0
  %1425 = vmatpush1.msra.mxu0 0.0
  %1426 = vmatprep.subr.mxu0 0.0
  %1427 = vmatpush1.msra.mxu0 0.0
  %1428 = vmatprep.subr.mxu0 0.0
  %1429 = vmatpush1.msra.mxu0 0.0
  %1430 = vmatprep.subr.mxu0 0.0
  %1431 = vmatpush1.msra.mxu0 0.0
  %1432 = vmatprep.subr.mxu0 0.0
  %1433 = vmatpush1.msra.mxu0 0.0
  %1434 = vmatprep.subr.mxu0 0.0
  %1435 = vmatpush1.msra.mxu0 0.0
  %1436 = vmatprep.subr.mxu0 0.0
  %1437 = vmatpush1.msra.mxu0 0.0
  %1438 = vmatprep.subr.mxu0 0.0
  %1439 = vmatpush1.msra.mxu0 0.0
  %1440 = vmatprep.subr.mxu0 0.0
  %1441 = vmatpush1.msra.mxu0 0.0
  %1442 = vmatprep.subr.mxu0 0.0
  %1443 = vmatpush1.msra.mxu0 0.0
  %1444 = vmatprep.subr.mxu0 0.0
  %1445 = vmatpush1.msra.mxu0 0.0
  %1446 = vmatprep.subr.mxu0 0.0
  %1447 = vmatpush1.msra.mxu0 0.0
  %1448 = vmatprep.subr.mxu0 0.0
  %1449 = vmatpush1.msra.mxu0 0.0
  %1450 = vmatprep.subr.mxu0 0.0
  %1451 = vmatpush1.msra.mxu0 0.0
  %1452 = vmatprep.subr.mxu0 0.0
  %1453 = vmatpush1.msra.mxu0 0.0
  %1454 = vmatprep.subr.mxu0 0.0
  %1455 = vmatpush1.msra.mxu0 0.0
  %1456 = vmatprep.subr.mxu0 0.0
  %1457 = vmatpush1.msra.mxu0 0.0
  %1458 = vmatprep.mubr.f32.mxu0 0.0
  %1459 = vmatmul.mubr.f32.gmra.mrb[0].mxu0 %v1248
  %v1460 = vpop.f32.mrb[0].mxu0
  %v1461 = vadd.f32 %v81, %v1460
  %v1462 = vpop.f32.mrb[0].mxu0
  %1463 = vmatprep.mubr.f32.mxu0 0.0
  %1464 = vmatmul.mubr.f32.gmra.mrb[0].mxu0 %v1251
  %v1465 = vpop.f32.mrb[0].mxu0
  %v1466 = vadd.f32 %v81, %v1465
  %v1467 = vpop.f32.mrb[0].mxu0
  %1468 = vmatprep.mubr.f32.mxu0 0.0
  %1469 = vmatmul.mubr.f32.gmra.mrb[0].mxu0 %v1254
  %v1470 = vpop.f32.mrb[0].mxu0
  %v1471 = vadd.f32 %v81, %v1470
  %v1472 = vpop.f32.mrb[0].mxu0
  %1473 = vmatprep.mubr.f32.mxu0 0.0
  %1474 = vmatmul.mubr.f32.gmra.mrb[0].mxu0 %v1257
  %v1475 = vpop.f32.mrb[0].mxu0
  %v1476 = vadd.f32 %v81, %v1475
  %v1477 = vpop.f32.mrb[0].mxu0
  %1478 = vmatprep.mubr.f32.mxu0 0.0
  %1479 = vmatmul.mubr.f32.gmra.mrb[0].mxu0 %v1260
  %v1480 = vpop.f32.mrb[0].mxu0
  %v1481 = vadd.f32 %v81, %v1480
  %v1482 = vpop.f32.mrb[0].mxu0
  %1483 = vmatprep.mubr.f32.mxu0 0.0
  %1484 = vmatmul.mubr.f32.gmra.mrb[0].mxu0 %v1263
  %v1485 = vpop.f32.mrb[0].mxu0
  %v1486 = vadd.f32 %v81, %v1485
  %v1487 = vpop.f32.mrb[0].mxu0
  %1488 = vmatprep.mubr.f32.mxu0 0.0
  %1489 = vmatmul.mubr.f32.gmra.mrb[0].mxu0 %v1266
  %v1490 = vpop.f32.mrb[0].mxu0
  %v1491 = vadd.f32 %v81, %v1490
  %v1492 = vpop.f32.mrb[0].mxu0
  %1493 = vmatprep.mubr.f32.mxu0 0.0
  %1494 = vmatmul.mubr.f32.gmra.mrb[0].mxu0 %v1269
  %v1495 = vpop.f32.mrb[0].mxu0
  %v1496 = vadd.f32 %v81, %v1495
  %v1497 = vpop.f32.mrb[0].mxu0
  %1498 = vmatprep.mubr.f32.mxu0 0.0
  %1499 = vmatmul.mubr.f32.gmra.mrb[0].mxu0 %v1272
  %v1500 = vpop.f32.mrb[0].mxu0
  %v1501 = vadd.f32 %v81, %v1500
  %v1502 = vpop.f32.mrb[0].mxu0
  %1503 = vmatprep.mubr.f32.mxu0 0.0
  %1504 = vmatmul.mubr.f32.gmra.mrb[0].mxu0 %v1275
  %v1505 = vpop.f32.mrb[0].mxu0
  %v1506 = vadd.f32 %v81, %v1505
  %v1507 = vpop.f32.mrb[0].mxu0
  %1508 = vmatprep.mubr.f32.mxu0 0.0
  %1509 = vmatmul.mubr.f32.gmra.mrb[0].mxu0 %v1278
  %v1510 = vpop.f32.mrb[0].mxu0
  %v1511 = vadd.f32 %v81, %v1510
  %v1512 = vpop.f32.mrb[0].mxu0
  %1513 = vmatprep.mubr.f32.mxu0 0.0
  %1514 = vmatmul.mubr.f32.gmra.mrb[0].mxu0 %v1281
  %v1515 = vpop.f32.mrb[0].mxu0
  %v1516 = vadd.f32 %v81, %v1515
  %v1517 = vpop.f32.mrb[0].mxu0
  %1518 = vmatprep.mubr.f32.mxu0 0.0
  %1519 = vmatmul.mubr.f32.gmra.mrb[0].mxu0 %v1284
  %v1520 = vpop.f32.mrb[0].mxu0
  %v1521 = vadd.f32 %v81, %v1520
  %v1522 = vpop.f32.mrb[0].mxu0
  %1523 = vmatprep.mubr.f32.mxu0 0.0
  %1524 = vmatmul.mubr.f32.gmra.mrb[0].mxu0 %v1287
  %v1525 = vpop.f32.mrb[0].mxu0
  %v1526 = vadd.f32 %v81, %v1525
  %v1527 = vpop.f32.mrb[0].mxu0
  %1528 = vmatprep.mubr.f32.mxu0 0.0
  %1529 = vmatmul.mubr.f32.gmra.mrb[0].mxu0 %v1290
  %v1530 = vpop.f32.mrb[0].mxu0
  %v1531 = vadd.f32 %v81, %v1530
  %v1532 = vpop.f32.mrb[0].mxu0
  %1533 = vmatprep.mubr.f32.mxu0 0.0
  %1534 = vmatmul.mubr.f32.gmra.mrb[0].mxu0 %v1293
  %v1535 = vpop.f32.mrb[0].mxu0
  %v1536 = vadd.f32 %v81, %v1535
  %v1537 = vpop.f32.mrb[0].mxu0
  %1538 = vmatprep.mubr.f32.mxu0 0.0
  %1539 = vmatmul.mubr.f32.gmra.mrb[0].mxu0 %v1296
  %v1540 = vpop.f32.mrb[0].mxu0
  %v1541 = vadd.f32 %v81, %v1540
  %v1542 = vpop.f32.mrb[0].mxu0
  %1543 = vmatprep.mubr.f32.mxu0 0.0
  %1544 = vmatmul.mubr.f32.gmra.mrb[0].mxu0 %v1299
  %v1545 = vpop.f32.mrb[0].mxu0
  %v1546 = vadd.f32 %v81, %v1545
  %v1547 = vpop.f32.mrb[0].mxu0
  %1548 = vmatprep.mubr.f32.mxu0 0.0
  %1549 = vmatmul.mubr.f32.gmra.mrb[0].mxu0 %v1302
  %v1550 = vpop.f32.mrb[0].mxu0
  %v1551 = vadd.f32 %v81, %v1550
  %v1552 = vpop.f32.mrb[0].mxu0
  %1553 = vmatprep.mubr.f32.mxu0 0.0
  %1554 = vmatmul.mubr.f32.gmra.mrb[0].mxu0 %v1305
  %v1555 = vpop.f32.mrb[0].mxu0
  %v1556 = vadd.f32 %v81, %v1555
  %v1557 = vpop.f32.mrb[0].mxu0
  %1558 = vmatprep.mubr.f32.mxu0 0.0
  %1559 = vmatmul.mubr.f32.gmra.mrb[0].mxu0 %v1308
  %v1560 = vpop.f32.mrb[0].mxu0
  %v1561 = vadd.f32 %v81, %v1560
  %v1562 = vpop.f32.mrb[0].mxu0
  %1563 = vmatprep.mubr.f32.mxu0 0.0
  %1564 = vmatmul.mubr.f32.gmra.mrb[0].mxu0 %v1311
  %v1565 = vpop.f32.mrb[0].mxu0
  %v1566 = vadd.f32 %v81, %v1565
  %v1567 = vpop.f32.mrb[0].mxu0
  %1568 = vmatprep.mubr.f32.mxu0 0.0
  %1569 = vmatmul.mubr.f32.gmra.mrb[0].mxu0 %v1314
  %v1570 = vpop.f32.mrb[0].mxu0
  %v1571 = vadd.f32 %v81, %v1570
  %v1572 = vpop.f32.mrb[0].mxu0
  %1573 = vmatprep.mubr.f32.mxu0 0.0
  %1574 = vmatmul.mubr.f32.gmra.mrb[0].mxu0 %v1317
  %v1575 = vpop.f32.mrb[0].mxu0
  %v1576 = vadd.f32 %v81, %v1575
  %v1577 = vpop.f32.mrb[0].mxu0
  %1578 = vmatprep.mubr.f32.mxu0 0.0
  %1579 = vmatmul.mubr.f32.gmra.mrb[0].mxu0 %v1320
  %v1580 = vpop.f32.mrb[0].mxu0
  %v1581 = vadd.f32 %v81, %v1580
  %v1582 = vpop.f32.mrb[0].mxu0
  %1583 = vmatprep.mubr.f32.mxu0 0.0
  %1584 = vmatmul.mubr.f32.gmra.mrb[0].mxu0 %v1323
  %v1585 = vpop.f32.mrb[0].mxu0
  %v1586 = vadd.f32 %v81, %v1585
  %v1587 = vpop.f32.mrb[0].mxu0
  %1588 = vmatprep.mubr.f32.mxu0 0.0
  %1589 = vmatmul.mubr.f32.gmra.mrb[0].mxu0 %v1326
  %v1590 = vpop.f32.mrb[0].mxu0
  %v1591 = vadd.f32 %v81, %v1590
  %v1592 = vpop.f32.mrb[0].mxu0
  %1593 = vmatprep.mubr.f32.mxu0 0.0
  %1594 = vmatmul.mubr.f32.gmra.mrb[0].mxu0 %v1329
  %v1595 = vpop.f32.mrb[0].mxu0
  %v1596 = vadd.f32 %v81, %v1595
  %v1597 = vpop.f32.mrb[0].mxu0
  %1598 = vmatprep.mubr.f32.mxu0 0.0
  %1599 = vmatmul.mubr.f32.gmra.mrb[0].mxu0 %v1332
  %v1600 = vpop.f32.mrb[0].mxu0
  %v1601 = vadd.f32 %v81, %v1600
  %v1602 = vpop.f32.mrb[0].mxu0
  %1603 = vmatprep.mubr.f32.mxu0 0.0
  %1604 = vmatmul.mubr.f32.gmra.mrb[0].mxu0 %v1335
  %v1605 = vpop.f32.mrb[0].mxu0
  %v1606 = vadd.f32 %v81, %v1605
  %v1607 = vpop.f32.mrb[0].mxu0
  %1608 = vmatprep.mubr.f32.mxu0 0.0
  %1609 = vmatmul.mubr.f32.gmra.mrb[0].mxu0 %v1338
  %v1610 = vpop.f32.mrb[0].mxu0
  %v1611 = vadd.f32 %v81, %v1610
  %v1612 = vpop.f32.mrb[0].mxu0
  %1613 = vmatprep.mubr.f32.mxu0 0.0
  %1614 = vmatmul.mubr.f32.gmra.mrb[0].mxu0 %v1341
  %v1615 = vpop.f32.mrb[0].mxu0
  %v1616 = vadd.f32 %v81, %v1615
  %v1617 = vpop.f32.mrb[0].mxu0
  %1618 = vmatprep.mubr.f32.mxu0 0.0
  %1619 = vmatmul.mubr.f32.gmra.mrb[0].mxu0 %v1344
  %v1620 = vpop.f32.mrb[0].mxu0
  %v1621 = vadd.f32 %v81, %v1620
  %v1622 = vpop.f32.mrb[0].mxu0
  %1623 = vmatprep.mubr.f32.mxu0 0.0
  %1624 = vmatmul.mubr.f32.gmra.mrb[0].mxu0 %v1347
  %v1625 = vpop.f32.mrb[0].mxu0
  %v1626 = vadd.f32 %v81, %v1625
  %v1627 = vpop.f32.mrb[0].mxu0
  %1628 = vmatprep.mubr.f32.mxu0 0.0
  %1629 = vmatmul.mubr.f32.gmra.mrb[0].mxu0 %v1350
  %v1630 = vpop.f32.mrb[0].mxu0
  %v1631 = vadd.f32 %v81, %v1630
  %v1632 = vpop.f32.mrb[0].mxu0
  %1633 = vmatprep.mubr.f32.mxu0 0.0
  %1634 = vmatmul.mubr.f32.gmra.mrb[0].mxu0 %v1353
  %v1635 = vpop.f32.mrb[0].mxu0
  %v1636 = vadd.f32 %v81, %v1635
  %v1637 = vpop.f32.mrb[0].mxu0
  %1638 = vmatprep.mubr.f32.mxu0 0.0
  %1639 = vmatmul.mubr.f32.gmra.mrb[0].mxu0 %v1356
  %v1640 = vpop.f32.mrb[0].mxu0
  %v1641 = vadd.f32 %v81, %v1640
  %v1642 = vpop.f32.mrb[0].mxu0
  %1643 = vmatprep.mubr.f32.mxu0 0.0
  %1644 = vmatmul.mubr.f32.gmra.mrb[0].mxu0 %v1359
  %v1645 = vpop.f32.mrb[0].mxu0
  %v1646 = vadd.f32 %v81, %v1645
  %v1647 = vpop.f32.mrb[0].mxu0
  %1648 = vmatprep.mubr.f32.mxu0 0.0
  %1649 = vmatmul.mubr.f32.gmra.mrb[0].mxu0 %v1362
  %v1650 = vpop.f32.mrb[0].mxu0
  %v1651 = vadd.f32 %v81, %v1650
  %v1652 = vpop.f32.mrb[0].mxu0
  %1653 = vmatprep.mubr.f32.mxu0 0.0
  %1654 = vmatmul.mubr.f32.gmra.mrb[0].mxu0 %v1365
  %v1655 = vpop.f32.mrb[0].mxu0
  %v1656 = vadd.f32 %v81, %v1655
  %v1657 = vpop.f32.mrb[0].mxu0
  %1658 = vmatprep.mubr.f32.mxu0 0.0
  %1659 = vmatmul.mubr.f32.gmra.mrb[0].mxu0 %v1368
  %v1660 = vpop.f32.mrb[0].mxu0
  %v1661 = vadd.f32 %v81, %v1660
  %v1662 = vpop.f32.mrb[0].mxu0
  %1663 = vmatprep.mubr.f32.mxu0 0.0
  %1664 = vmatmul.mubr.f32.gmra.mrb[0].mxu0 %v1371
  %v1665 = vpop.f32.mrb[0].mxu0
  %v1666 = vadd.f32 %v81, %v1665
  %v1667 = vpop.f32.mrb[0].mxu0
  %1668 = vmatprep.mubr.f32.mxu0 0.0
  %1669 = vmatmul.mubr.f32.gmra.mrb[0].mxu0 %v1374
  %v1670 = vpop.f32.mrb[0].mxu0
  %v1671 = vadd.f32 %v81, %v1670
  %v1672 = vpop.f32.mrb[0].mxu0
  %1673 = vmatprep.mubr.f32.mxu0 0.0
  %1674 = vmatmul.mubr.f32.gmra.mrb[0].mxu0 %v1377
  %v1675 = vpop.f32.mrb[0].mxu0
  %v1676 = vadd.f32 %v81, %v1675
  %v1677 = vpop.f32.mrb[0].mxu0
  %1678 = vmatprep.mubr.f32.mxu0 0.0
  %1679 = vmatmul.mubr.f32.gmra.mrb[0].mxu0 %v1380
  %v1680 = vpop.f32.mrb[0].mxu0
  %v1681 = vadd.f32 %v81, %v1680
  %v1682 = vpop.f32.mrb[0].mxu0
  %1683 = vmatprep.mubr.f32.mxu0 0.0
  %1684 = vmatmul.mubr.f32.gmra.mrb[0].mxu0 %v1383
  %v1685 = vpop.f32.mrb[0].mxu0
  %v1686 = vadd.f32 %v81, %v1685
  %v1687 = vpop.f32.mrb[0].mxu0
  %1688 = vmatprep.mubr.f32.mxu0 0.0
  %1689 = vmatmul.mubr.f32.gmra.mrb[0].mxu0 %v1386
  %v1690 = vpop.f32.mrb[0].mxu0
  %v1691 = vadd.f32 %v81, %v1690
  %v1692 = vpop.f32.mrb[0].mxu0
  %1693 = vmatprep.mubr.f32.mxu0 0.0
  %1694 = vmatmul.mubr.f32.gmra.mrb[0].mxu0 %v1389
  %v1695 = vpop.f32.mrb[0].mxu0
  %v1696 = vadd.f32 %v81, %v1695
  %v1697 = vpop.f32.mrb[0].mxu0
  %1698 = vmatprep.mubr.f32.mxu0 0.0
  %1699 = vmatmul.mubr.f32.gmra.mrb[0].mxu0 %v1392
  %v1700 = vpop.f32.mrb[0].mxu0
  %v1701 = vadd.f32 %v81, %v1700
  %v1702 = vpop.f32.mrb[0].mxu0
  %1703 = vdwg.mxu0
  %v1704 = vmax.f32 %v1461, 0.0
  %v1705 = vmax.f32 %v1466, 0.0
  %v1706 = vmax.f32 %v1471, 0.0
  %v1707 = vmax.f32 %v1476, 0.0
  %v1708 = vmax.f32 %v1481, 0.0
  %v1709 = vmax.f32 %v1486, 0.0
  %v1710 = vmax.f32 %v1491, 0.0
  %v1711 = vmax.f32 %v1496, 0.0
  %v1712 = vmax.f32 %v1501, 0.0
  %v1713 = vmax.f32 %v1506, 0.0
  %v1714 = vmax.f32 %v1511, 0.0
  %v1715 = vmax.f32 %v1516, 0.0
  %v1716 = vmax.f32 %v1521, 0.0
  %v1717 = vmax.f32 %v1526, 0.0
  %v1718 = vmax.f32 %v1531, 0.0
  %v1719 = vmax.f32 %v1536, 0.0
  %v1720 = vmax.f32 %v1541, 0.0
  %v1721 = vmax.f32 %v1546, 0.0
  %v1722 = vmax.f32 %v1551, 0.0
  %v1723 = vmax.f32 %v1556, 0.0
  %v1724 = vmax.f32 %v1561, 0.0
  %v1725 = vmax.f32 %v1566, 0.0
  %v1726 = vmax.f32 %v1571, 0.0
  %v1727 = vmax.f32 %v1576, 0.0
  %v1728 = vmax.f32 %v1581, 0.0
  %v1729 = vmax.f32 %v1586, 0.0
  %v1730 = vmax.f32 %v1591, 0.0
  %v1731 = vmax.f32 %v1596, 0.0
  %v1732 = vmax.f32 %v1601, 0.0
  %v1733 = vmax.f32 %v1606, 0.0
  %v1734 = vmax.f32 %v1611, 0.0
  %v1735 = vmax.f32 %v1616, 0.0
  %v1736 = vmax.f32 %v1621, 0.0
  %v1737 = vmax.f32 %v1626, 0.0
  %v1738 = vmax.f32 %v1631, 0.0
  %v1739 = vmax.f32 %v1636, 0.0
  %v1740 = vmax.f32 %v1641, 0.0
  %v1741 = vmax.f32 %v1646, 0.0
  %v1742 = vmax.f32 %v1651, 0.0
  %v1743 = vmax.f32 %v1656, 0.0
  %v1744 = vmax.f32 %v1661, 0.0
  %v1745 = vmax.f32 %v1666, 0.0
  %v1746 = vmax.f32 %v1671, 0.0
  %v1747 = vmax.f32 %v1676, 0.0
  %v1748 = vmax.f32 %v1681, 0.0
  %v1749 = vmax.f32 %v1686, 0.0
  %v1750 = vmax.f32 %v1691, 0.0
  %v1751 = vmax.f32 %v1696, 0.0
  %v1752 = vmax.f32 %v1701, 0.0
  %v1753 = vld [vmem:[%s3] sm:$0xff]
  %v1754 = vld [vmem:[%s3 + $0x8] sm:$0xff]
  %v1755 = vld [vmem:[%s3 + $0x10] sm:$0xff]
  %v1756 = vld [vmem:[%s3 + $0x18] sm:$0xff]
  %v1757 = vld [vmem:[%s3 + $0x20] sm:$0xff]
  %v1758 = vld [vmem:[%s3 + $0x28] sm:$0xff]
  %v1759 = vld [vmem:[%s3 + $0x30] sm:$0xff]
  %v1760 = vld [vmem:[%s3 + $0x38] sm:$0xff]
  %v1761 = vld [vmem:[%s3 + $0x40] sm:$0xff]
  %v1762 = vld [vmem:[%s3 + $0x48] sm:$0xff]
  %v1763 = vld [vmem:[%s3 + $0x50] sm:$0xff]
  %v1764 = vld [vmem:[%s3 + $0x58] sm:$0xff]
  %v1765 = vld [vmem:[%s3 + $0x60] sm:$0xff]
  %v1766 = vld [vmem:[%s3 + $0x68] sm:$0xff]
  %v1767 = vld [vmem:[%s3 + $0x70] sm:$0xff]
  %v1768 = vld [vmem:[%s3 + $0x78] sm:$0xff]
  %v1769 = vld [vmem:[%s3 + $0x80] sm:$0xff]
  %v1770 = vld [vmem:[%s3 + $0x88] sm:$0xff]
  %v1771 = vld [vmem:[%s3 + $0x90] sm:$0xff]
  %v1772 = vld [vmem:[%s3 + $0x98] sm:$0xff]
  %v1773 = vld [vmem:[%s3 + $0xa0] sm:$0xff]
  %v1774 = vld [vmem:[%s3 + $0xa8] sm:$0xff]
  %v1775 = vld [vmem:[%s3 + $0xb0] sm:$0xff]
  %v1776 = vld [vmem:[%s3 + $0xb8] sm:$0xff]
  %v1777 = vld [vmem:[%s3 + $0xc0] sm:$0xff]
  %v1778 = vld [vmem:[%s3 + $0xc8] sm:$0xff]
  %v1779 = vld [vmem:[%s3 + $0xd0] sm:$0xff]
  %v1780 = vld [vmem:[%s3 + $0xd8] sm:$0xff]
  %v1781 = vld [vmem:[%s3 + $0xe0] sm:$0xff]
  %v1782 = vld [vmem:[%s3 + $0xe8] sm:$0xff]
  %v1783 = vld [vmem:[%s3 + $0xf0] sm:$0xff]
  %v1784 = vld [vmem:[%s3 + $0xf8] sm:$0xff]
  %v1785 = vld [vmem:[%s3 + $0x100] sm:$0xff]
  %v1786 = vld [vmem:[%s3 + $0x108] sm:$0xff]
  %v1787 = vld [vmem:[%s3 + $0x110] sm:$0xff]
  %v1788 = vld [vmem:[%s3 + $0x118] sm:$0xff]
  %v1789 = vld [vmem:[%s3 + $0x120] sm:$0xff]
  %v1790 = vld [vmem:[%s3 + $0x128] sm:$0xff]
  %v1791 = vld [vmem:[%s3 + $0x130] sm:$0xff]
  %v1792 = vld [vmem:[%s3 + $0x138] sm:$0xff]
  %v1793 = vld [vmem:[%s3 + $0x140] sm:$0xff]
  %v1794 = vld [vmem:[%s3 + $0x148] sm:$0xff]
  %v1795 = vld [vmem:[%s3 + $0x150] sm:$0xff]
  %v1796 = vld [vmem:[%s3 + $0x158] sm:$0xff]
  %v1797 = vld [vmem:[%s3 + $0x160] sm:$0xff]
  %v1798 = vld [vmem:[%s3 + $0x168] sm:$0xff]
  %v1799 = vld [vmem:[%s3 + $0x170] sm:$0xff]
  %v1800 = vld [vmem:[%s3 + $0x178] sm:$0xff]
  %v1801 = vld [vmem:[%s3 + $0x180] sm:$0xff]
  %v1803 = vsel %vm83, %v1753, 0
  %v1806 = vsel %vm83, %v1754, 0
  %v1809 = vsel %vm83, %v1755, 0
  %v1812 = vsel %vm83, %v1756, 0
  %v1815 = vsel %vm83, %v1757, 0
  %v1818 = vsel %vm83, %v1758, 0
  %v1821 = vsel %vm83, %v1759, 0
  %v1824 = vsel %vm83, %v1760, 0
  %v1827 = vsel %vm83, %v1761, 0
  %v1830 = vsel %vm83, %v1762, 0
  %v1833 = vsel %vm83, %v1763, 0
  %v1836 = vsel %vm83, %v1764, 0
  %v1839 = vsel %vm83, %v1765, 0
  %v1842 = vsel %vm83, %v1766, 0
  %v1845 = vsel %vm83, %v1767, 0
  %v1848 = vsel %vm83, %v1768, 0
  %v1851 = vsel %vm83, %v1769, 0
  %v1854 = vsel %vm83, %v1770, 0
  %v1857 = vsel %vm83, %v1771, 0
  %v1860 = vsel %vm83, %v1772, 0
  %v1863 = vsel %vm83, %v1773, 0
  %v1866 = vsel %vm83, %v1774, 0
  %v1869 = vsel %vm83, %v1775, 0
  %v1872 = vsel %vm83, %v1776, 0
  %v1875 = vsel %vm83, %v1777, 0
  %v1878 = vsel %vm83, %v1778, 0
  %v1881 = vsel %vm83, %v1779, 0
  %v1884 = vsel %vm83, %v1780, 0
  %v1887 = vsel %vm83, %v1781, 0
  %v1890 = vsel %vm83, %v1782, 0
  %v1893 = vsel %vm83, %v1783, 0
  %v1896 = vsel %vm83, %v1784, 0
  %v1899 = vsel %vm83, %v1785, 0
  %v1902 = vsel %vm83, %v1786, 0
  %v1905 = vsel %vm83, %v1787, 0
  %v1908 = vsel %vm83, %v1788, 0
  %v1911 = vsel %vm83, %v1789, 0
  %v1914 = vsel %vm83, %v1790, 0
  %v1917 = vsel %vm83, %v1791, 0
  %v1920 = vsel %vm83, %v1792, 0
  %v1923 = vsel %vm83, %v1793, 0
  %v1926 = vsel %vm83, %v1794, 0
  %v1929 = vsel %vm83, %v1795, 0
  %v1932 = vsel %vm83, %v1796, 0
  %v1935 = vsel %vm83, %v1797, 0
  %v1938 = vsel %vm83, %v1798, 0
  %v1941 = vsel %vm83, %v1799, 0
  %v1944 = vsel %vm83, %v1800, 0
  %v1947 = vsel %vm83, %v1801, 0
  %1949 = vmatprep.subr.mxu0 0.0
  %1950 = vmatpush1.msra.mxu0 %v23
  %1951 = vmatprep.subr.mxu0 0.0
  %1952 = vmatpush1.msra.mxu0 %v24
  %1953 = vmatprep.subr.mxu0 0.0
  %1954 = vmatpush1.msra.mxu0 %v25
  %1955 = vmatprep.subr.mxu0 0.0
  %1956 = vmatpush1.msra.mxu0 %v233
  %1957 = vmatprep.subr.mxu0 0.0
  %1958 = vmatpush1.msra.mxu0 0.0
  %1959 = vmatprep.subr.mxu0 0.0
  %1960 = vmatpush1.msra.mxu0 0.0
  %1961 = vmatprep.subr.mxu0 0.0
  %1962 = vmatpush1.msra.mxu0 0.0
  %1963 = vmatprep.subr.mxu0 0.0
  %1964 = vmatpush1.msra.mxu0 0.0
  %1965 = vmatprep.subr.mxu0 0.0
  %1966 = vmatpush1.msra.mxu0 0.0
  %1967 = vmatprep.subr.mxu0 0.0
  %1968 = vmatpush1.msra.mxu0 0.0
  %1969 = vmatprep.subr.mxu0 0.0
  %1970 = vmatpush1.msra.mxu0 0.0
  %1971 = vmatprep.subr.mxu0 0.0
  %1972 = vmatpush1.msra.mxu0 0.0
  %1973 = vmatprep.subr.mxu0 0.0
  %1974 = vmatpush1.msra.mxu0 0.0
  %1975 = vmatprep.subr.mxu0 0.0
  %1976 = vmatpush1.msra.mxu0 0.0
  %1977 = vmatprep.subr.mxu0 0.0
  %1978 = vmatpush1.msra.mxu0 0.0
  %1979 = vmatprep.subr.mxu0 0.0
  %1980 = vmatpush1.msra.mxu0 0.0
  %1981 = vmatprep.subr.mxu0 0.0
  %1982 = vmatpush1.msra.mxu0 0.0
  %1983 = vmatprep.subr.mxu0 0.0
  %1984 = vmatpush1.msra.mxu0 0.0
  %1985 = vmatprep.subr.mxu0 0.0
  %1986 = vmatpush1.msra.mxu0 0.0
  %1987 = vmatprep.subr.mxu0 0.0
  %1988 = vmatpush1.msra.mxu0 0.0
  %1989 = vmatprep.subr.mxu0 0.0
  %1990 = vmatpush1.msra.mxu0 0.0
  %1991 = vmatprep.subr.mxu0 0.0
  %1992 = vmatpush1.msra.mxu0 0.0
  %1993 = vmatprep.subr.mxu0 0.0
  %1994 = vmatpush1.msra.mxu0 0.0
  %1995 = vmatprep.subr.mxu0 0.0
  %1996 = vmatpush1.msra.mxu0 0.0
  %1997 = vmatprep.subr.mxu0 0.0
  %1998 = vmatpush1.msra.mxu0 0.0
  %1999 = vmatprep.subr.mxu0 0.0
  %2000 = vmatpush1.msra.mxu0 0.0
  %2001 = vmatprep.subr.mxu0 0.0
  %2002 = vmatpush1.msra.mxu0 0.0
  %2003 = vmatprep.subr.mxu0 0.0
  %2004 = vmatpush1.msra.mxu0 0.0
  %2005 = vmatprep.subr.mxu0 0.0
  %2006 = vmatpush1.msra.mxu0 0.0
  %2007 = vmatprep.subr.mxu0 0.0
  %2008 = vmatpush1.msra.mxu0 0.0
  %2009 = vmatprep.subr.mxu0 0.0
  %2010 = vmatpush1.msra.mxu0 0.0
  %2011 = vmatprep.subr.mxu0 0.0
  %2012 = vmatpush1.msra.mxu0 0.0
  %2013 = vmatprep.mubr.f32.mxu0 0.0
  %2014 = vmatmul.mubr.f32.gmra.mrb[0].mxu0 %v1803
  %v2015 = vpop.f32.mrb[0].mxu0
  %v2016 = vadd.f32 %v81, %v2015
  %v2017 = vpop.f32.mrb[0].mxu0
  %2018 = vmatprep.mubr.f32.mxu0 0.0
  %2019 = vmatmul.mubr.f32.gmra.mrb[0].mxu0 %v1806
  %v2020 = vpop.f32.mrb[0].mxu0
  %v2021 = vadd.f32 %v81, %v2020
  %v2022 = vpop.f32.mrb[0].mxu0
  %2023 = vmatprep.mubr.f32.mxu0 0.0
  %2024 = vmatmul.mubr.f32.gmra.mrb[0].mxu0 %v1809
  %v2025 = vpop.f32.mrb[0].mxu0
  %v2026 = vadd.f32 %v81, %v2025
  %v2027 = vpop.f32.mrb[0].mxu0
  %2028 = vmatprep.mubr.f32.mxu0 0.0
  %2029 = vmatmul.mubr.f32.gmra.mrb[0].mxu0 %v1812
  %v2030 = vpop.f32.mrb[0].mxu0
  %v2031 = vadd.f32 %v81, %v2030
  %v2032 = vpop.f32.mrb[0].mxu0
  %2033 = vmatprep.mubr.f32.mxu0 0.0
  %2034 = vmatmul.mubr.f32.gmra.mrb[0].mxu0 %v1815
  %v2035 = vpop.f32.mrb[0].mxu0
  %v2036 = vadd.f32 %v81, %v2035
  %v2037 = vpop.f32.mrb[0].mxu0
  %2038 = vmatprep.mubr.f32.mxu0 0.0
  %2039 = vmatmul.mubr.f32.gmra.mrb[0].mxu0 %v1818
  %v2040 = vpop.f32.mrb[0].mxu0
  %v2041 = vadd.f32 %v81, %v2040
  %v2042 = vpop.f32.mrb[0].mxu0
  %2043 = vmatprep.mubr.f32.mxu0 0.0
  %2044 = vmatmul.mubr.f32.gmra.mrb[0].mxu0 %v1821
  %v2045 = vpop.f32.mrb[0].mxu0
  %v2046 = vadd.f32 %v81, %v2045
  %v2047 = vpop.f32.mrb[0].mxu0
  %2048 = vmatprep.mubr.f32.mxu0 0.0
  %2049 = vmatmul.mubr.f32.gmra.mrb[0].mxu0 %v1824
  %v2050 = vpop.f32.mrb[0].mxu0
  %v2051 = vadd.f32 %v81, %v2050
  %v2052 = vpop.f32.mrb[0].mxu0
  %2053 = vmatprep.mubr.f32.mxu0 0.0
  %2054 = vmatmul.mubr.f32.gmra.mrb[0].mxu0 %v1827
  %v2055 = vpop.f32.mrb[0].mxu0
  %v2056 = vadd.f32 %v81, %v2055
  %v2057 = vpop.f32.mrb[0].mxu0
  %2058 = vmatprep.mubr.f32.mxu0 0.0
  %2059 = vmatmul.mubr.f32.gmra.mrb[0].mxu0 %v1830
  %v2060 = vpop.f32.mrb[0].mxu0
  %v2061 = vadd.f32 %v81, %v2060
  %v2062 = vpop.f32.mrb[0].mxu0
  %2063 = vmatprep.mubr.f32.mxu0 0.0
  %2064 = vmatmul.mubr.f32.gmra.mrb[0].mxu0 %v1833
  %v2065 = vpop.f32.mrb[0].mxu0
  %v2066 = vadd.f32 %v81, %v2065
  %v2067 = vpop.f32.mrb[0].mxu0
  %2068 = vmatprep.mubr.f32.mxu0 0.0
  %2069 = vmatmul.mubr.f32.gmra.mrb[0].mxu0 %v1836
  %v2070 = vpop.f32.mrb[0].mxu0
  %v2071 = vadd.f32 %v81, %v2070
  %v2072 = vpop.f32.mrb[0].mxu0
  %2073 = vmatprep.mubr.f32.mxu0 0.0
  %2074 = vmatmul.mubr.f32.gmra.mrb[0].mxu0 %v1839
  %v2075 = vpop.f32.mrb[0].mxu0
  %v2076 = vadd.f32 %v81, %v2075
  %v2077 = vpop.f32.mrb[0].mxu0
  %2078 = vmatprep.mubr.f32.mxu0 0.0
  %2079 = vmatmul.mubr.f32.gmra.mrb[0].mxu0 %v1842
  %v2080 = vpop.f32.mrb[0].mxu0
  %v2081 = vadd.f32 %v81, %v2080
  %v2082 = vpop.f32.mrb[0].mxu0
  %2083 = vmatprep.mubr.f32.mxu0 0.0
  %2084 = vmatmul.mubr.f32.gmra.mrb[0].mxu0 %v1845
  %v2085 = vpop.f32.mrb[0].mxu0
  %v2086 = vadd.f32 %v81, %v2085
  %v2087 = vpop.f32.mrb[0].mxu0
  %2088 = vmatprep.mubr.f32.mxu0 0.0
  %2089 = vmatmul.mubr.f32.gmra.mrb[0].mxu0 %v1848
  %v2090 = vpop.f32.mrb[0].mxu0
  %v2091 = vadd.f32 %v81, %v2090
  %v2092 = vpop.f32.mrb[0].mxu0
  %2093 = vmatprep.mubr.f32.mxu0 0.0
  %2094 = vmatmul.mubr.f32.gmra.mrb[0].mxu0 %v1851
  %v2095 = vpop.f32.mrb[0].mxu0
  %v2096 = vadd.f32 %v81, %v2095
  %v2097 = vpop.f32.mrb[0].mxu0
  %2098 = vmatprep.mubr.f32.mxu0 0.0
  %2099 = vmatmul.mubr.f32.gmra.mrb[0].mxu0 %v1854
  %v2100 = vpop.f32.mrb[0].mxu0
  %v2101 = vadd.f32 %v81, %v2100
  %v2102 = vpop.f32.mrb[0].mxu0
  %2103 = vmatprep.mubr.f32.mxu0 0.0
  %2104 = vmatmul.mubr.f32.gmra.mrb[0].mxu0 %v1857
  %v2105 = vpop.f32.mrb[0].mxu0
  %v2106 = vadd.f32 %v81, %v2105
  %v2107 = vpop.f32.mrb[0].mxu0
  %2108 = vmatprep.mubr.f32.mxu0 0.0
  %2109 = vmatmul.mubr.f32.gmra.mrb[0].mxu0 %v1860
  %v2110 = vpop.f32.mrb[0].mxu0
  %v2111 = vadd.f32 %v81, %v2110
  %v2112 = vpop.f32.mrb[0].mxu0
  %2113 = vmatprep.mubr.f32.mxu0 0.0
  %2114 = vmatmul.mubr.f32.gmra.mrb[0].mxu0 %v1863
  %v2115 = vpop.f32.mrb[0].mxu0
  %v2116 = vadd.f32 %v81, %v2115
  %v2117 = vpop.f32.mrb[0].mxu0
  %2118 = vmatprep.mubr.f32.mxu0 0.0
  %2119 = vmatmul.mubr.f32.gmra.mrb[0].mxu0 %v1866
  %v2120 = vpop.f32.mrb[0].mxu0
  %v2121 = vadd.f32 %v81, %v2120
  %v2122 = vpop.f32.mrb[0].mxu0
  %2123 = vmatprep.mubr.f32.mxu0 0.0
  %2124 = vmatmul.mubr.f32.gmra.mrb[0].mxu0 %v1869
  %v2125 = vpop.f32.mrb[0].mxu0
  %v2126 = vadd.f32 %v81, %v2125
  %v2127 = vpop.f32.mrb[0].mxu0
  %2128 = vmatprep.mubr.f32.mxu0 0.0
  %2129 = vmatmul.mubr.f32.gmra.mrb[0].mxu0 %v1872
  %v2130 = vpop.f32.mrb[0].mxu0
  %v2131 = vadd.f32 %v81, %v2130
  %v2132 = vpop.f32.mrb[0].mxu0
  %2133 = vmatprep.mubr.f32.mxu0 0.0
  %2134 = vmatmul.mubr.f32.gmra.mrb[0].mxu0 %v1875
  %v2135 = vpop.f32.mrb[0].mxu0
  %v2136 = vadd.f32 %v81, %v2135
  %v2137 = vpop.f32.mrb[0].mxu0
  %2138 = vmatprep.mubr.f32.mxu0 0.0
  %2139 = vmatmul.mubr.f32.gmra.mrb[0].mxu0 %v1878
  %v2140 = vpop.f32.mrb[0].mxu0
  %v2141 = vadd.f32 %v81, %v2140
  %v2142 = vpop.f32.mrb[0].mxu0
  %2143 = vmatprep.mubr.f32.mxu0 0.0
  %2144 = vmatmul.mubr.f32.gmra.mrb[0].mxu0 %v1881
  %v2145 = vpop.f32.mrb[0].mxu0
  %v2146 = vadd.f32 %v81, %v2145
  %v2147 = vpop.f32.mrb[0].mxu0
  %2148 = vmatprep.mubr.f32.mxu0 0.0
  %2149 = vmatmul.mubr.f32.gmra.mrb[0].mxu0 %v1884
  %v2150 = vpop.f32.mrb[0].mxu0
  %v2151 = vadd.f32 %v81, %v2150
  %v2152 = vpop.f32.mrb[0].mxu0
  %2153 = vmatprep.mubr.f32.mxu0 0.0
  %2154 = vmatmul.mubr.f32.gmra.mrb[0].mxu0 %v1887
  %v2155 = vpop.f32.mrb[0].mxu0
  %v2156 = vadd.f32 %v81, %v2155
  %v2157 = vpop.f32.mrb[0].mxu0
  %2158 = vmatprep.mubr.f32.mxu0 0.0
  %2159 = vmatmul.mubr.f32.gmra.mrb[0].mxu0 %v1890
  %v2160 = vpop.f32.mrb[0].mxu0
  %v2161 = vadd.f32 %v81, %v2160
  %v2162 = vpop.f32.mrb[0].mxu0
  %2163 = vmatprep.mubr.f32.mxu0 0.0
  %2164 = vmatmul.mubr.f32.gmra.mrb[0].mxu0 %v1893
  %v2165 = vpop.f32.mrb[0].mxu0
  %v2166 = vadd.f32 %v81, %v2165
  %v2167 = vpop.f32.mrb[0].mxu0
  %2168 = vmatprep.mubr.f32.mxu0 0.0
  %2169 = vmatmul.mubr.f32.gmra.mrb[0].mxu0 %v1896
  %v2170 = vpop.f32.mrb[0].mxu0
  %v2171 = vadd.f32 %v81, %v2170
  %v2172 = vpop.f32.mrb[0].mxu0
  %2173 = vmatprep.mubr.f32.mxu0 0.0
  %2174 = vmatmul.mubr.f32.gmra.mrb[0].mxu0 %v1899
  %v2175 = vpop.f32.mrb[0].mxu0
  %v2176 = vadd.f32 %v81, %v2175
  %v2177 = vpop.f32.mrb[0].mxu0
  %2178 = vmatprep.mubr.f32.mxu0 0.0
  %2179 = vmatmul.mubr.f32.gmra.mrb[0].mxu0 %v1902
  %v2180 = vpop.f32.mrb[0].mxu0
  %v2181 = vadd.f32 %v81, %v2180
  %v2182 = vpop.f32.mrb[0].mxu0
  %2183 = vmatprep.mubr.f32.mxu0 0.0
  %2184 = vmatmul.mubr.f32.gmra.mrb[0].mxu0 %v1905
  %v2185 = vpop.f32.mrb[0].mxu0
  %v2186 = vadd.f32 %v81, %v2185
  %v2187 = vpop.f32.mrb[0].mxu0
  %2188 = vmatprep.mubr.f32.mxu0 0.0
  %2189 = vmatmul.mubr.f32.gmra.mrb[0].mxu0 %v1908
  %v2190 = vpop.f32.mrb[0].mxu0
  %v2191 = vadd.f32 %v81, %v2190
  %v2192 = vpop.f32.mrb[0].mxu0
  %2193 = vmatprep.mubr.f32.mxu0 0.0
  %2194 = vmatmul.mubr.f32.gmra.mrb[0].mxu0 %v1911
  %v2195 = vpop.f32.mrb[0].mxu0
  %v2196 = vadd.f32 %v81, %v2195
  %v2197 = vpop.f32.mrb[0].mxu0
  %2198 = vmatprep.mubr.f32.mxu0 0.0
  %2199 = vmatmul.mubr.f32.gmra.mrb[0].mxu0 %v1914
  %v2200 = vpop.f32.mrb[0].mxu0
  %v2201 = vadd.f32 %v81, %v2200
  %v2202 = vpop.f32.mrb[0].mxu0
  %2203 = vmatprep.mubr.f32.mxu0 0.0
  %2204 = vmatmul.mubr.f32.gmra.mrb[0].mxu0 %v1917
  %v2205 = vpop.f32.mrb[0].mxu0
  %v2206 = vadd.f32 %v81, %v2205
  %v2207 = vpop.f32.mrb[0].mxu0
  %2208 = vmatprep.mubr.f32.mxu0 0.0
  %2209 = vmatmul.mubr.f32.gmra.mrb[0].mxu0 %v1920
  %v2210 = vpop.f32.mrb[0].mxu0
  %v2211 = vadd.f32 %v81, %v2210
  %v2212 = vpop.f32.mrb[0].mxu0
  %2213 = vmatprep.mubr.f32.mxu0 0.0
  %2214 = vmatmul.mubr.f32.gmra.mrb[0].mxu0 %v1923
  %v2215 = vpop.f32.mrb[0].mxu0
  %v2216 = vadd.f32 %v81, %v2215
  %v2217 = vpop.f32.mrb[0].mxu0
  %2218 = vmatprep.mubr.f32.mxu0 0.0
  %2219 = vmatmul.mubr.f32.gmra.mrb[0].mxu0 %v1926
  %v2220 = vpop.f32.mrb[0].mxu0
  %v2221 = vadd.f32 %v81, %v2220
  %v2222 = vpop.f32.mrb[0].mxu0
  %2223 = vmatprep.mubr.f32.mxu0 0.0
  %2224 = vmatmul.mubr.f32.gmra.mrb[0].mxu0 %v1929
  %v2225 = vpop.f32.mrb[0].mxu0
  %v2226 = vadd.f32 %v81, %v2225
  %v2227 = vpop.f32.mrb[0].mxu0
  %2228 = vmatprep.mubr.f32.mxu0 0.0
  %2229 = vmatmul.mubr.f32.gmra.mrb[0].mxu0 %v1932
  %v2230 = vpop.f32.mrb[0].mxu0
  %v2231 = vadd.f32 %v81, %v2230
  %v2232 = vpop.f32.mrb[0].mxu0
  %2233 = vmatprep.mubr.f32.mxu0 0.0
  %2234 = vmatmul.mubr.f32.gmra.mrb[0].mxu0 %v1935
  %v2235 = vpop.f32.mrb[0].mxu0
  %v2236 = vadd.f32 %v81, %v2235
  %v2237 = vpop.f32.mrb[0].mxu0
  %2238 = vmatprep.mubr.f32.mxu0 0.0
  %2239 = vmatmul.mubr.f32.gmra.mrb[0].mxu0 %v1938
  %v2240 = vpop.f32.mrb[0].mxu0
  %v2241 = vadd.f32 %v81, %v2240
  %v2242 = vpop.f32.mrb[0].mxu0
  %2243 = vmatprep.mubr.f32.mxu0 0.0
  %2244 = vmatmul.mubr.f32.gmra.mrb[0].mxu0 %v1941
  %v2245 = vpop.f32.mrb[0].mxu0
  %v2246 = vadd.f32 %v81, %v2245
  %v2247 = vpop.f32.mrb[0].mxu0
  %2248 = vmatprep.mubr.f32.mxu0 0.0
  %2249 = vmatmul.mubr.f32.gmra.mrb[0].mxu0 %v1944
  %v2250 = vpop.f32.mrb[0].mxu0
  %v2251 = vadd.f32 %v81, %v2250
  %v2252 = vpop.f32.mrb[0].mxu0
  %2253 = vmatprep.mubr.f32.mxu0 0.0
  %2254 = vmatmul.mubr.f32.gmra.mrb[0].mxu0 %v1947
  %v2255 = vpop.f32.mrb[0].mxu0
  %v2256 = vadd.f32 %v81, %v2255
  %v2257 = vpop.f32.mrb[0].mxu0
  %2258 = vdwg.mxu0
  %v2259 = vmax.f32 %v2016, 0.0
  %v2260 = vmax.f32 %v2021, 0.0
  %v2261 = vmax.f32 %v2026, 0.0
  %v2262 = vmax.f32 %v2031, 0.0
  %v2263 = vmax.f32 %v2036, 0.0
  %v2264 = vmax.f32 %v2041, 0.0
  %v2265 = vmax.f32 %v2046, 0.0
  %v2266 = vmax.f32 %v2051, 0.0
  %v2267 = vmax.f32 %v2056, 0.0
  %v2268 = vmax.f32 %v2061, 0.0
  %v2269 = vmax.f32 %v2066, 0.0
  %v2270 = vmax.f32 %v2071, 0.0
  %v2271 = vmax.f32 %v2076, 0.0
  %v2272 = vmax.f32 %v2081, 0.0
  %v2273 = vmax.f32 %v2086, 0.0
  %v2274 = vmax.f32 %v2091, 0.0
  %v2275 = vmax.f32 %v2096, 0.0
  %v2276 = vmax.f32 %v2101, 0.0
  %v2277 = vmax.f32 %v2106, 0.0
  %v2278 = vmax.f32 %v2111, 0.0
  %v2279 = vmax.f32 %v2116, 0.0
  %v2280 = vmax.f32 %v2121, 0.0
  %v2281 = vmax.f32 %v2126, 0.0
  %v2282 = vmax.f32 %v2131, 0.0
  %v2283 = vmax.f32 %v2136, 0.0
  %v2284 = vmax.f32 %v2141, 0.0
  %v2285 = vmax.f32 %v2146, 0.0
  %v2286 = vmax.f32 %v2151, 0.0
  %v2287 = vmax.f32 %v2156, 0.0
  %v2288 = vmax.f32 %v2161, 0.0
  %v2289 = vmax.f32 %v2166, 0.0
  %v2290 = vmax.f32 %v2171, 0.0
  %v2291 = vmax.f32 %v2176, 0.0
  %v2292 = vmax.f32 %v2181, 0.0
  %v2293 = vmax.f32 %v2186, 0.0
  %v2294 = vmax.f32 %v2191, 0.0
  %v2295 = vmax.f32 %v2196, 0.0
  %v2296 = vmax.f32 %v2201, 0.0
  %v2297 = vmax.f32 %v2206, 0.0
  %v2298 = vmax.f32 %v2211, 0.0
  %v2299 = vmax.f32 %v2216, 0.0
  %v2300 = vmax.f32 %v2221, 0.0
  %v2301 = vmax.f32 %v2226, 0.0
  %v2302 = vmax.f32 %v2231, 0.0
  %v2303 = vmax.f32 %v2236, 0.0
  %v2304 = vmax.f32 %v2241, 0.0
  %v2305 = vmax.f32 %v2246, 0.0
  %v2306 = vmax.f32 %v2251, 0.0
  %v2307 = vmax.f32 %v2256, 0.0
  %v2308 = vmax.f32 %v1704, %v2259
  %v2309 = vmax.f32 %v1705, %v2260
  %v2310 = vmax.f32 %v1706, %v2261
  %v2311 = vmax.f32 %v1707, %v2262
  %v2312 = vmax.f32 %v1708, %v2263
  %v2313 = vmax.f32 %v1709, %v2264
  %v2314 = vmax.f32 %v1710, %v2265
  %v2315 = vmax.f32 %v1711, %v2266
  %v2316 = vmax.f32 %v1712, %v2267
  %v2317 = vmax.f32 %v1713, %v2268
  %v2318 = vmax.f32 %v1714, %v2269
  %v2319 = vmax.f32 %v1715, %v2270
  %v2320 = vmax.f32 %v1716, %v2271
  %v2321 = vmax.f32 %v1717, %v2272
  %v2322 = vmax.f32 %v1718, %v2273
  %v2323 = vmax.f32 %v1719, %v2274
  %v2324 = vmax.f32 %v1720, %v2275
  %v2325 = vmax.f32 %v1721, %v2276
  %v2326 = vmax.f32 %v1722, %v2277
  %v2327 = vmax.f32 %v1723, %v2278
  %v2328 = vmax.f32 %v1724, %v2279
  %v2329 = vmax.f32 %v1725, %v2280
  %v2330 = vmax.f32 %v1726, %v2281
  %v2331 = vmax.f32 %v1727, %v2282
  %v2332 = vmax.f32 %v1728, %v2283
  %v2333 = vmax.f32 %v1729, %v2284
  %v2334 = vmax.f32 %v1730, %v2285
  %v2335 = vmax.f32 %v1731, %v2286
  %v2336 = vmax.f32 %v1732, %v2287
  %v2337 = vmax.f32 %v1733, %v2288
  %v2338 = vmax.f32 %v1734, %v2289
  %v2339 = vmax.f32 %v1735, %v2290
  %v2340 = vmax.f32 %v1736, %v2291
  %v2341 = vmax.f32 %v1737, %v2292
  %v2342 = vmax.f32 %v1738, %v2293
  %v2343 = vmax.f32 %v1739, %v2294
  %v2344 = vmax.f32 %v1740, %v2295
  %v2345 = vmax.f32 %v1741, %v2296
  %v2346 = vmax.f32 %v1742, %v2297
  %v2347 = vmax.f32 %v1743, %v2298
  %v2348 = vmax.f32 %v1744, %v2299
  %v2349 = vmax.f32 %v1745, %v2300
  %v2350 = vmax.f32 %v1746, %v2301
  %v2351 = vmax.f32 %v1747, %v2302
  %v2352 = vmax.f32 %v1748, %v2303
  %v2353 = vmax.f32 %v1749, %v2304
  %v2354 = vmax.f32 %v1750, %v2305
  %v2355 = vmax.f32 %v1751, %v2306
  %v2356 = vmax.f32 %v1752, %v2307
  %v2357 = vmax.f32 %v1149, %v2308
  %v2358 = vmax.f32 %v1150, %v2309
  %v2359 = vmax.f32 %v1151, %v2310
  %v2360 = vmax.f32 %v1152, %v2311
  %v2361 = vmax.f32 %v1153, %v2312
  %v2362 = vmax.f32 %v1154, %v2313
  %v2363 = vmax.f32 %v1155, %v2314
  %v2364 = vmax.f32 %v1156, %v2315
  %v2365 = vmax.f32 %v1157, %v2316
  %v2366 = vmax.f32 %v1158, %v2317
  %v2367 = vmax.f32 %v1159, %v2318
  %v2368 = vmax.f32 %v1160, %v2319
  %v2369 = vmax.f32 %v1161, %v2320
  %v2370 = vmax.f32 %v1162, %v2321
  %v2371 = vmax.f32 %v1163, %v2322
  %v2372 = vmax.f32 %v1164, %v2323
  %v2373 = vmax.f32 %v1165, %v2324
  %v2374 = vmax.f32 %v1166, %v2325
  %v2375 = vmax.f32 %v1167, %v2326
  %v2376 = vmax.f32 %v1168, %v2327
  %v2377 = vmax.f32 %v1169, %v2328
  %v2378 = vmax.f32 %v1170, %v2329
  %v2379 = vmax.f32 %v1171, %v2330
  %v2380 = vmax.f32 %v1172, %v2331
  %v2381 = vmax.f32 %v1173, %v2332
  %v2382 = vmax.f32 %v1174, %v2333
  %v2383 = vmax.f32 %v1175, %v2334
  %v2384 = vmax.f32 %v1176, %v2335
  %v2385 = vmax.f32 %v1177, %v2336
  %v2386 = vmax.f32 %v1178, %v2337
  %v2387 = vmax.f32 %v1179, %v2338
  %v2388 = vmax.f32 %v1180, %v2339
  %v2389 = vmax.f32 %v1181, %v2340
  %v2390 = vmax.f32 %v1182, %v2341
  %v2391 = vmax.f32 %v1183, %v2342
  %v2392 = vmax.f32 %v1184, %v2343
  %v2393 = vmax.f32 %v1185, %v2344
  %v2394 = vmax.f32 %v1186, %v2345
  %v2395 = vmax.f32 %v1187, %v2346
  %v2396 = vmax.f32 %v1188, %v2347
  %v2397 = vmax.f32 %v1189, %v2348
  %v2398 = vmax.f32 %v1190, %v2349
  %v2399 = vmax.f32 %v1191, %v2350
  %v2400 = vmax.f32 %v1192, %v2351
  %v2401 = vmax.f32 %v1193, %v2352
  %v2402 = vmax.f32 %v1194, %v2353
  %v2403 = vmax.f32 %v1195, %v2354
  %v2404 = vmax.f32 %v1196, %v2355
  %v2405 = vmax.f32 %v1197, %v2356
  %2406 = vst [vmem:[%s6] sm:$0xff] %v2357
  %2407 = vst [vmem:[%s6 + $0x8] sm:$0xff] %v2358
  %2408 = vst [vmem:[%s6 + $0x10] sm:$0xff] %v2359
  %2409 = vst [vmem:[%s6 + $0x18] sm:$0xff] %v2360
  %2410 = vst [vmem:[%s6 + $0x20] sm:$0xff] %v2361
  %2411 = vst [vmem:[%s6 + $0x28] sm:$0xff] %v2362
  %2412 = vst [vmem:[%s6 + $0x30] sm:$0xff] %v2363
  %2413 = vst [vmem:[%s6 + $0x38] sm:$0xff] %v2364
  %2414 = vst [vmem:[%s6 + $0x40] sm:$0xff] %v2365
  %2415 = vst [vmem:[%s6 + $0x48] sm:$0xff] %v2366
  %2416 = vst [vmem:[%s6 + $0x50] sm:$0xff] %v2367
  %2417 = vst [vmem:[%s6 + $0x58] sm:$0xff] %v2368
  %2418 = vst [vmem:[%s6 + $0x60] sm:$0xff] %v2369
  %2419 = vst [vmem:[%s6 + $0x68] sm:$0xff] %v2370
  %2420 = vst [vmem:[%s6 + $0x70] sm:$0xff] %v2371
  %2421 = vst [vmem:[%s6 + $0x78] sm:$0xff] %v2372
  %2422 = vst [vmem:[%s6 + $0x80] sm:$0xff] %v2373
  %2423 = vst [vmem:[%s6 + $0x88] sm:$0xff] %v2374
  %2424 = vst [vmem:[%s6 + $0x90] sm:$0xff] %v2375
  %2425 = vst [vmem:[%s6 + $0x98] sm:$0xff] %v2376
  %2426 = vst [vmem:[%s6 + $0xa0] sm:$0xff] %v2377
  %2427 = vst [vmem:[%s6 + $0xa8] sm:$0xff] %v2378
  %2428 = vst [vmem:[%s6 + $0xb0] sm:$0xff] %v2379
  %2429 = vst [vmem:[%s6 + $0xb8] sm:$0xff] %v2380
  %2430 = vst [vmem:[%s6 + $0xc0] sm:$0xff] %v2381
  %2431 = vst [vmem:[%s6 + $0xc8] sm:$0xff] %v2382
  %2432 = vst [vmem:[%s6 + $0xd0] sm:$0xff] %v2383
  %2433 = vst [vmem:[%s6 + $0xd8] sm:$0xff] %v2384
  %2434 = vst [vmem:[%s6 + $0xe0] sm:$0xff] %v2385
  %2435 = vst [vmem:[%s6 + $0xe8] sm:$0xff] %v2386
  %2436 = vst [vmem:[%s6 + $0xf0] sm:$0xff] %v2387
  %2437 = vst [vmem:[%s6 + $0xf8] sm:$0xff] %v2388
  %2438 = vst [vmem:[%s6 + $0x100] sm:$0xff] %v2389
  %2439 = vst [vmem:[%s6 + $0x108] sm:$0xff] %v2390
  %2440 = vst [vmem:[%s6 + $0x110] sm:$0xff] %v2391
  %2441 = vst [vmem:[%s6 + $0x118] sm:$0xff] %v2392
  %2442 = vst [vmem:[%s6 + $0x120] sm:$0xff] %v2393
  %2443 = vst [vmem:[%s6 + $0x128] sm:$0xff] %v2394
  %2444 = vst [vmem:[%s6 + $0x130] sm:$0xff] %v2395
  %2445 = vst [vmem:[%s6 + $0x138] sm:$0xff] %v2396
  %2446 = vst [vmem:[%s6 + $0x140] sm:$0xff] %v2397
  %2447 = vst [vmem:[%s6 + $0x148] sm:$0xff] %v2398
  %2448 = vst [vmem:[%s6 + $0x150] sm:$0xff] %v2399
  %2449 = vst [vmem:[%s6 + $0x158] sm:$0xff] %v2400
  %2450 = vst [vmem:[%s6 + $0x160] sm:$0xff] %v2401
  %2451 = vst [vmem:[%s6 + $0x168] sm:$0xff] %v2402
  %2452 = vst [vmem:[%s6 + $0x170] sm:$0xff] %v2403
  %2453 = vst [vmem:[%s6 + $0x178] sm:$0xff] %v2404
  %2454 = vst [vmem:[%s6 + $0x180] sm:$0xff] %v2405
  // Predicated region
  $region26: #{lenet5_forward.2} parent=0 // pred_check
    _
  $region27: #{lenet5_forward.2} parent=0 // pred_check_branch
    %2456 = sbr.rel (0) target = $region29
  $region28: #{lenet5_forward.2} parent=0 // pred_region
    _
  $region29: #{lenet5_forward.2} parent=0 // pred_fallthru
    _
  // Predicated region
  $region30: #{lenet5_forward.2} parent=0 // pred_check
    _
  $region31: #{lenet5_forward.2} parent=0 // pred_check_branch
    %2458 = sbr.rel (0) target = $region33
  $region32: #{lenet5_forward.2} parent=0 // pred_region
    _
  $region33: #{lenet5_forward.2} parent=0 // pred_fallthru
    _

// kernel: lenet5_forward.3
$region0: #{lenet5_forward.3}
  #allocation0 [shape = 'u32[]', space=smem, size = 0x4, offset = 0x4, fixed_abs, tag = 'smem constant byte address 0x4 - core index']
  #allocation1 [shape = 'u32[144,128]{1,0:T(1,128)}', space=vmem, size = 0x12000, scoped, tag = 'internal scratch']
  %s0 = inlined_call_operand.vmem [shape: f32[50,150], index: 0, kind: input, shape index: {}]
  %s1 = inlined_call_operand.vmem [shape: f32[50,150], index: 1, kind: input, shape index: {}]
  %s2 = inlined_call_operand.vmem [shape: f32[50,150], index: 2, kind: input, shape index: {}]
  %s3 = inlined_call_operand.vmem [shape: f32[50,150], index: 3, kind: input, shape index: {}]
  %s4 = inlined_call_operand.vmem [shape: f32[150,128], index: 4, kind: input, shape index: {}]
  %s5 = inlined_call_operand.vmem [shape: f32[1,128], index: 5, kind: input, shape index: {}]
  %s6 = inlined_call_operand.vmem [shape: f32[25,128,128], index: 6, kind: input, shape index: {}]
  %s7 = inlined_call_operand.vmem [shape: f32[1,128], index: 7, kind: input, shape index: {}]
  %s8 = inlined_call_operand.vmem [shape: f32[128,128], index: 8, kind: input, shape index: {}]
  %s9 = inlined_call_operand.vmem [shape: f32[1,128], index: 9, kind: input, shape index: {}]
  %s10 = inlined_call_operand.vmem [shape: f32[128,128], index: 10, kind: input, shape index: {}]
  %s11 = inlined_call_operand.vmem [shape: f32[1,128], index: 11, kind: input, shape index: {}]
  %s12 = inlined_call_operand.vmem [shape: f32[50,128], index: 12, kind: output, shape index: {0}]
  %s13 = inlined_call_operand.hbm [shape: f32[2,128], index: 13, kind: output, shape index: {1}]
  %s14 = inlined_call_operand.hbm [shape: f32[2,128], index: 14, kind: output, shape index: {2}]
  %s15 = inlined_call_operand.vmem [shape: f32[2,128], index: 15, kind: output, shape index: {3}]
  %s16 = inlined_call_operand.hbm [shape: f32[2,128], index: 16, kind: output, shape index: {4}]
  %17 = xla_tuple %s12, %s13, %s14, %s15, %s16
  %s18 = sld [smem:[#allocation0]]
  $region90: #{lenet5_forward.3} parent=0
    _
  %s20 = ssub.s32 1, %s18
  %s21 = scalar_select 0, %s20, %s18
  $region1: #{lenet5_forward.3} parent=0
    #allocation2 [shape = 'u8[1024]{0}', space=vmem, size = 0x400, scoped, tag = 'output window, operand 1, single buffered']
    #allocation3 [shape = 's32[1]{0}', space=sflag, size = 0x4, scoped, tag = 'scoped memory for lenet5_forward.3']
    #allocation4 [shape = 'u8[1024]{0}', space=vmem, size = 0x400, scoped, tag = 'output window, operand 2, single buffered']
    #allocation5 [shape = 's32[1]{0}', space=sflag, size = 0x4, scoped, tag = 'scoped memory for lenet5_forward.3']
    #allocation6 [shape = 'u8[1024]{0}', space=vmem, size = 0x400, scoped, tag = 'output window, operand 4, single buffered']
    %22 = vsyncpa [#allocation3], 0
    %23 = vsyncpa [#allocation5], 0
    // Predicated region
    $region2: #{lenet5_forward.3} parent=1 // pred_check
      _
    $region3: #{lenet5_forward.3} parent=1 // pred_check_branch
      %25 = sbr.rel (0) target = $region5
    $region4: #{lenet5_forward.3} parent=1 // pred_region
      _
    $region5: #{lenet5_forward.3} parent=1 // pred_fallthru
      _
    // Predicated region
    $region6: #{lenet5_forward.3} parent=1 // pred_check
      _
    $region7: #{lenet5_forward.3} parent=1 // pred_check_branch
      %27 = sbr.rel (0) target = $region9
    $region8: #{lenet5_forward.3} parent=1 // pred_region
      _
    $region9: #{lenet5_forward.3} parent=1 // pred_fallthru
      _
    // Predicated region
    $region10: #{lenet5_forward.3} parent=1 // pred_check
      _
    $region11: #{lenet5_forward.3} parent=1 // pred_check_branch
      %29 = sbr.rel (0) target = $region13
    $region12: #{lenet5_forward.3} parent=1 // pred_region
      _
    $region13: #{lenet5_forward.3} parent=1 // pred_fallthru
      _
    // Predicated region
    $region14: #{lenet5_forward.3} parent=1 // pred_check
      _
    $region15: #{lenet5_forward.3} parent=1 // pred_check_branch
      %31 = sbr.rel (0) target = $region17
    $region16: #{lenet5_forward.3} parent=1 // pred_region
      _
    $region17: #{lenet5_forward.3} parent=1 // pred_fallthru
      _
    // Predicated region
    $region18: #{lenet5_forward.3} parent=1 // pred_check
      _
    $region19: #{lenet5_forward.3} parent=1 // pred_check_branch
      %33 = sbr.rel (0) target = $region21
    $region20: #{lenet5_forward.3} parent=1 // pred_region
      _
    $region21: #{lenet5_forward.3} parent=1 // pred_fallthru
      _
    // Predicated region
    $region22: #{lenet5_forward.3} parent=1 // pred_check
      _
    $region23: #{lenet5_forward.3} parent=1 // pred_check_branch
      %35 = sbr.rel (0) target = $region25
    $region24: #{lenet5_forward.3} parent=1 // pred_region
      _
    $region25: #{lenet5_forward.3} parent=1 // pred_fallthru
      _
    // Predicated region
    $region26: #{lenet5_forward.3} parent=1 // pred_check
      _
    $region27: #{lenet5_forward.3} parent=1 // pred_check_branch
      %37 = sbr.rel (0) target = $region29
    $region28: #{lenet5_forward.3} parent=1 // pred_region
      _
    $region29: #{lenet5_forward.3} parent=1 // pred_fallthru
      _
    // Predicated region
    $region30: #{lenet5_forward.3} parent=1 // pred_check
      _
    $region31: #{lenet5_forward.3} parent=1 // pred_check_branch
      %39 = sbr.rel (0) target = $region33
    $region32: #{lenet5_forward.3} parent=1 // pred_region
      _
    $region33: #{lenet5_forward.3} parent=1 // pred_fallthru
      _
    // Predicated region
    $region34: #{lenet5_forward.3} parent=1 // pred_check
      _
    $region35: #{lenet5_forward.3} parent=1 // pred_check_branch
      %41 = sbr.rel (0) target = $region37
    $region36: #{lenet5_forward.3} parent=1 // pred_region
      _
    $region37: #{lenet5_forward.3} parent=1 // pred_fallthru
      _
    // Predicated region
    $region38: #{lenet5_forward.3} parent=1 // pred_check
      _
    $region39: #{lenet5_forward.3} parent=1 // pred_check_branch
      %43 = sbr.rel (0) target = $region41
    $region40: #{lenet5_forward.3} parent=1 // pred_region
      _
    $region41: #{lenet5_forward.3} parent=1 // pred_fallthru
      _
    // Predicated region
    $region42: #{lenet5_forward.3} parent=1 // pred_check
      _
    $region43: #{lenet5_forward.3} parent=1 // pred_check_branch
      %45 = sbr.rel (0) target = $region45
    $region44: #{lenet5_forward.3} parent=1 // pred_region
      _
    $region45: #{lenet5_forward.3} parent=1 // pred_fallthru
      _
    // Predicated region
    $region46: #{lenet5_forward.3} parent=1 // pred_check
      _
    $region47: #{lenet5_forward.3} parent=1 // pred_check_branch
      %47 = sbr.rel (0) target = $region49
    $region48: #{lenet5_forward.3} parent=1 // pred_region
      _
    $region49: #{lenet5_forward.3} parent=1 // pred_fallthru
      _
    %v48 = vld [vmem:[%s4] sm:$0xff]
    %v49 = vld [vmem:[%s4 + $0x8] sm:$0xff]
    %v50 = vld [vmem:[%s4 + $0x10] sm:$0xff]
    %v51 = vld [vmem:[%s4 + $0x18] sm:$0xff]
    %v52 = vld [vmem:[%s4 + $0x20] sm:$0xff]
    %v53 = vld [vmem:[%s4 + $0x28] sm:$0xff]
    %v54 = vld [vmem:[%s4 + $0x30] sm:$0xff]
    %v55 = vld [vmem:[%s4 + $0x38] sm:$0xff]
    %v56 = vld [vmem:[%s4 + $0x40] sm:$0xff]
    %v57 = vld [vmem:[%s4 + $0x48] sm:$0xff]
    %v58 = vld [vmem:[%s4 + $0x50] sm:$0xff]
    %v59 = vld [vmem:[%s4 + $0x58] sm:$0xff]
    %v60 = vld [vmem:[%s4 + $0x60] sm:$0xff]
    %v61 = vld [vmem:[%s4 + $0x68] sm:$0xff]
    %v62 = vld [vmem:[%s4 + $0x70] sm:$0xff]
    %v63 = vld [vmem:[%s4 + $0x78] sm:$0xff]
    %v64 = vld [vmem:[%s4 + $0x80] sm:$0xff]
    %v65 = vld [vmem:[%s4 + $0x88] sm:$0xff]
    %v66 = vld [vmem:[%s4 + $0x90] sm:$0x3f]
    %v67 = vld [vmem:[%s5] sm:$0x1]
    %v68 = vld [vmem:[%s0] sm:$0xff]
    %v69 = vld [vmem:[%s0 + $0x8] sm:$0xff]
    %v70 = vld [vmem:[%s0 + $0x10] sm:$0xff]
    %v71 = vld [vmem:[%s0 + $0x18] sm:$0xff]
    %v72 = vld [vmem:[%s0 + $0x20] sm:$0xff]
    %v73 = vld [vmem:[%s0 + $0x28] sm:$0xff]
    %v74 = vld [vmem:[%s0 + $0x30] sm:$0xff]
    %v75 = vld [vmem:[%s0 + $0x38] sm:$0xff]
    %v76 = vld [vmem:[%s0 + $0x40] sm:$0xff]
    %v77 = vld [vmem:[%s0 + $0x48] sm:$0xff]
    %v78 = vld [vmem:[%s0 + $0x50] sm:$0xff]
    %v79 = vld [vmem:[%s0 + $0x58] sm:$0xff]
    %v80 = vld [vmem:[%s0 + $0x60] sm:$0x3]
    %v81 = vld [vmem:[%s0 + $0x68] sm:$0x3]
    %v83 = vlaneseq
    %v84 = vshrl.u32 %v83, 7
    %v85 = vsub.s32 0, %v84
    %v86 = vrot.slane %v67, %v85
    %vm88 = vcmask 179200
    %v90 = vsel %vm88, %v69, 0
    %v93 = vsel %vm88, %v71, 0
    %v96 = vsel %vm88, %v73, 0
    %v99 = vsel %vm88, %v75, 0
    %v102 = vsel %vm88, %v77, 0
    %v105 = vsel %vm88, %v79, 0
    %v108 = vsel %vm88, %v81, 0
    %vm110 = vcmask 1045504
    %v112 = vsel %vm110, %v66, 0
    %114 = vmatprep.subr.mxu0 0.0
    %115 = vmatpush1.msra.mxu0 %v48
    %116 = vmatprep.subr.mxu0 0.0
    %117 = vmatpush1.msra.mxu0 %v49
    %118 = vmatprep.subr.mxu0 0.0
    %119 = vmatpush1.msra.mxu0 %v50
    %120 = vmatprep.subr.mxu0 0.0
    %121 = vmatpush1.msra.mxu0 %v51
    %122 = vmatprep.subr.mxu0 0.0
    %123 = vmatpush1.msra.mxu0 %v52
    %124 = vmatprep.subr.mxu0 0.0
    %125 = vmatpush1.msra.mxu0 %v53
    %126 = vmatprep.subr.mxu0 0.0
    %127 = vmatpush1.msra.mxu0 %v54
    %128 = vmatprep.subr.mxu0 0.0
    %129 = vmatpush1.msra.mxu0 %v55
    %130 = vmatprep.subr.mxu0 0.0
    %131 = vmatpush1.msra.mxu0 %v56
    %132 = vmatprep.subr.mxu0 0.0
    %133 = vmatpush1.msra.mxu0 %v57
    %134 = vmatprep.subr.mxu0 0.0
    %135 = vmatpush1.msra.mxu0 %v58
    %136 = vmatprep.subr.mxu0 0.0
    %137 = vmatpush1.msra.mxu0 %v59
    %138 = vmatprep.subr.mxu0 0.0
    %139 = vmatpush1.msra.mxu0 %v60
    %140 = vmatprep.subr.mxu0 0.0
    %141 = vmatpush1.msra.mxu0 %v61
    %142 = vmatprep.subr.mxu0 0.0
    %143 = vmatpush1.msra.mxu0 %v62
    %144 = vmatprep.subr.mxu0 0.0
    %145 = vmatpush1.msra.mxu0 %v63
    %146 = vmatprep.subr.mxu0 0.0
    %147 = vmatpush1.msra.mxu0 %v64
    %148 = vmatprep.subr.mxu0 0.0
    %149 = vmatpush1.msra.mxu0 %v65
    %150 = vmatprep.subr.mxu0 0.0
    %151 = vmatpush1.msra.mxu0 %v112
    %152 = vmatprep.subr.mxu0 0.0
    %153 = vmatpush1.msra.mxu0 0.0
    %154 = vmatprep.subr.mxu0 0.0
    %155 = vmatpush1.msra.mxu0 0.0
    %156 = vmatprep.subr.mxu0 0.0
    %157 = vmatpush1.msra.mxu0 0.0
    %158 = vmatprep.subr.mxu0 0.0
    %159 = vmatpush1.msra.mxu0 0.0
    %160 = vmatprep.subr.mxu0 0.0
    %161 = vmatpush1.msra.mxu0 0.0
    %162 = vmatprep.subr.mxu0 0.0
    %163 = vmatpush1.msra.mxu0 0.0
    %164 = vmatprep.subr.mxu0 0.0
    %165 = vmatpush1.msra.mxu0 0.0
    %166 = vmatprep.subr.mxu0 0.0
    %167 = vmatpush1.msra.mxu0 0.0
    %168 = vmatprep.subr.mxu0 0.0
    %169 = vmatpush1.msra.mxu0 0.0
    %170 = vmatprep.subr.mxu0 0.0
    %171 = vmatpush1.msra.mxu0 0.0
    %172 = vmatprep.subr.mxu0 0.0
    %173 = vmatpush1.msra.mxu0 0.0
    %174 = vmatprep.subr.mxu0 0.0
    %175 = vmatpush1.msra.mxu0 0.0
    %176 = vmatprep.subr.mxu0 0.0
    %177 = vmatpush1.msra.mxu0 0.0
    %178 = vmatprep.mubr.f32.mxu0 %v90
    %179 = vmatmul.mubr.f32.gmra.mrb[0].mxu0 %v68
    %v180 = vpop.f32.mrb[0].mxu0
    %v181 = vadd.f32 %v86, %v180
    %v182 = vpop.f32.mrb[0].mxu0
    %183 = vmatprep.mubr.f32.mxu0 %v93
    %184 = vmatmul.mubr.f32.gmra.mrb[0].mxu0 %v70
    %v185 = vpop.f32.mrb[0].mxu0
    %v186 = vadd.f32 %v86, %v185
    %v187 = vpop.f32.mrb[0].mxu0
    %188 = vmatprep.mubr.f32.mxu0 %v96
    %189 = vmatmul.mubr.f32.gmra.mrb[0].mxu0 %v72
    %v190 = vpop.f32.mrb[0].mxu0
    %v191 = vadd.f32 %v86, %v190
    %v192 = vpop.f32.mrb[0].mxu0
    %193 = vmatprep.mubr.f32.mxu0 %v99
    %194 = vmatmul.mubr.f32.gmra.mrb[0].mxu0 %v74
    %v195 = vpop.f32.mrb[0].mxu0
    %v196 = vadd.f32 %v86, %v195
    %v197 = vpop.f32.mrb[0].mxu0
    %198 = vmatprep.mubr.f32.mxu0 %v102
    %199 = vmatmul.mubr.f32.gmra.mrb[0].mxu0 %v76
    %v200 = vpop.f32.mrb[0].mxu0
    %v201 = vadd.f32 %v86, %v200
    %v202 = vpop.f32.mrb[0].mxu0
    %203 = vmatprep.mubr.f32.mxu0 %v105
    %204 = vmatmul.mubr.f32.gmra.mrb[0].mxu0 %v78
    %v205 = vpop.f32.mrb[0].mxu0
    %v206 = vadd.f32 %v86, %v205
    %v207 = vpop.f32.mrb[0].mxu0
    %208 = vmatprep.mubr.f32.mxu0 %v108
    %209 = vmatmul.mubr.f32.gmra.mrb[0].mxu0 %v80
    %v210 = vpop.f32.mrb[0].mxu0
    %v211 = vadd.f32 %v86, %v210
    %v212 = vpop.f32.mrb[0].mxu0
    %213 = vdwg.mxu0
    %v214 = vmax.f32 %v181, 0.0
    %v215 = vmax.f32 %v186, 0.0
    %v216 = vmax.f32 %v191, 0.0
    %v217 = vmax.f32 %v196, 0.0
    %v218 = vmax.f32 %v201, 0.0
    %v219 = vmax.f32 %v206, 0.0
    %v220 = vmax.f32 %v211, 0.0
    %v221 = vld [vmem:[%s1] sm:$0xff]
    %v222 = vld [vmem:[%s1 + $0x8] sm:$0xff]
    %v223 = vld [vmem:[%s1 + $0x10] sm:$0xff]
    %v224 = vld [vmem:[%s1 + $0x18] sm:$0xff]
    %v225 = vld [vmem:[%s1 + $0x20] sm:$0xff]
    %v226 = vld [vmem:[%s1 + $0x28] sm:$0xff]
    %v227 = vld [vmem:[%s1 + $0x30] sm:$0xff]
    %v228 = vld [vmem:[%s1 + $0x38] sm:$0xff]
    %v229 = vld [vmem:[%s1 + $0x40] sm:$0xff]
    %v230 = vld [vmem:[%s1 + $0x48] sm:$0xff]
    %v231 = vld [vmem:[%s1 + $0x50] sm:$0xff]
    %v232 = vld [vmem:[%s1 + $0x58] sm:$0xff]
    %v233 = vld [vmem:[%s1 + $0x60] sm:$0x3]
    %v234 = vld [vmem:[%s1 + $0x68] sm:$0x3]
    %v236 = vsel %vm88, %v222, 0
    %v239 = vsel %vm88, %v224, 0
    %v242 = vsel %vm88, %v226, 0
    %v245 = vsel %vm88, %v228, 0
    %v248 = vsel %vm88, %v230, 0
    %v251 = vsel %vm88, %v232, 0
    %v254 = vsel %vm88, %v234, 0
    %256 = vmatprep.subr.mxu0 0.0
    %257 = vmatpush1.msra.mxu0 %v48
    %258 = vmatprep.subr.mxu0 0.0
    %259 = vmatpush1.msra.mxu0 %v49
    %260 = vmatprep.subr.mxu0 0.0
    %261 = vmatpush1.msra.mxu0 %v50
    %262 = vmatprep.subr.mxu0 0.0
    %263 = vmatpush1.msra.mxu0 %v51
    %264 = vmatprep.subr.mxu0 0.0
    %265 = vmatpush1.msra.mxu0 %v52
    %266 = vmatprep.subr.mxu0 0.0
    %267 = vmatpush1.msra.mxu0 %v53
    %268 = vmatprep.subr.mxu0 0.0
    %269 = vmatpush1.msra.mxu0 %v54
    %270 = vmatprep.subr.mxu0 0.0
    %271 = vmatpush1.msra.mxu0 %v55
    %272 = vmatprep.subr.mxu0 0.0
    %273 = vmatpush1.msra.mxu0 %v56
    %274 = vmatprep.subr.mxu0 0.0
    %275 = vmatpush1.msra.mxu0 %v57
    %276 = vmatprep.subr.mxu0 0.0
    %277 = vmatpush1.msra.mxu0 %v58
    %278 = vmatprep.subr.mxu0 0.0
    %279 = vmatpush1.msra.mxu0 %v59
    %280 = vmatprep.subr.mxu0 0.0
    %281 = vmatpush1.msra.mxu0 %v60
    %282 = vmatprep.subr.mxu0 0.0
    %283 = vmatpush1.msra.mxu0 %v61
    %284 = vmatprep.subr.mxu0 0.0
    %285 = vmatpush1.msra.mxu0 %v62
    %286 = vmatprep.subr.mxu0 0.0
    %287 = vmatpush1.msra.mxu0 %v63
    %288 = vmatprep.subr.mxu0 0.0
    %289 = vmatpush1.msra.mxu0 %v64
    %290 = vmatprep.subr.mxu0 0.0
    %291 = vmatpush1.msra.mxu0 %v65
    %292 = vmatprep.subr.mxu0 0.0
    %293 = vmatpush1.msra.mxu0 %v112
    %294 = vmatprep.subr.mxu0 0.0
    %295 = vmatpush1.msra.mxu0 0.0
    %296 = vmatprep.subr.mxu0 0.0
    %297 = vmatpush1.msra.mxu0 0.0
    %298 = vmatprep.subr.mxu0 0.0
    %299 = vmatpush1.msra.mxu0 0.0
    %300 = vmatprep.subr.mxu0 0.0
    %301 = vmatpush1.msra.mxu0 0.0
    %302 = vmatprep.subr.mxu0 0.0
    %303 = vmatpush1.msra.mxu0 0.0
    %304 = vmatprep.subr.mxu0 0.0
    %305 = vmatpush1.msra.mxu0 0.0
    %306 = vmatprep.subr.mxu0 0.0
    %307 = vmatpush1.msra.mxu0 0.0
    %308 = vmatprep.subr.mxu0 0.0
    %309 = vmatpush1.msra.mxu0 0.0
    %310 = vmatprep.subr.mxu0 0.0
    %311 = vmatpush1.msra.mxu0 0.0
    %312 = vmatprep.subr.mxu0 0.0
    %313 = vmatpush1.msra.mxu0 0.0
    %314 = vmatprep.subr.mxu0 0.0
    %315 = vmatpush1.msra.mxu0 0.0
    %316 = vmatprep.subr.mxu0 0.0
    %317 = vmatpush1.msra.mxu0 0.0
    %318 = vmatprep.subr.mxu0 0.0
    %319 = vmatpush1.msra.mxu0 0.0
    %320 = vmatprep.mubr.f32.mxu0 %v236
    %321 = vmatmul.mubr.f32.gmra.mrb[0].mxu0 %v221
    %v322 = vpop.f32.mrb[0].mxu0
    %v323 = vadd.f32 %v86, %v322
    %v324 = vpop.f32.mrb[0].mxu0
    %325 = vmatprep.mubr.f32.mxu0 %v239
    %326 = vmatmul.mubr.f32.gmra.mrb[0].mxu0 %v223
    %v327 = vpop.f32.mrb[0].mxu0
    %v328 = vadd.f32 %v86, %v327
    %v329 = vpop.f32.mrb[0].mxu0
    %330 = vmatprep.mubr.f32.mxu0 %v242
    %331 = vmatmul.mubr.f32.gmra.mrb[0].mxu0 %v225
    %v332 = vpop.f32.mrb[0].mxu0
    %v333 = vadd.f32 %v86, %v332
    %v334 = vpop.f32.mrb[0].mxu0
    %335 = vmatprep.mubr.f32.mxu0 %v245
    %336 = vmatmul.mubr.f32.gmra.mrb[0].mxu0 %v227
    %v337 = vpop.f32.mrb[0].mxu0
    %v338 = vadd.f32 %v86, %v337
    %v339 = vpop.f32.mrb[0].mxu0
    %340 = vmatprep.mubr.f32.mxu0 %v248
    %341 = vmatmul.mubr.f32.gmra.mrb[0].mxu0 %v229
    %v342 = vpop.f32.mrb[0].mxu0
    %v343 = vadd.f32 %v86, %v342
    %v344 = vpop.f32.mrb[0].mxu0
    %345 = vmatprep.mubr.f32.mxu0 %v251
    %346 = vmatmul.mubr.f32.gmra.mrb[0].mxu0 %v231
    %v347 = vpop.f32.mrb[0].mxu0
    %v348 = vadd.f32 %v86, %v347
    %v349 = vpop.f32.mrb[0].mxu0
    %350 = vmatprep.mubr.f32.mxu0 %v254
    %351 = vmatmul.mubr.f32.gmra.mrb[0].mxu0 %v233
    %v352 = vpop.f32.mrb[0].mxu0
    %v353 = vadd.f32 %v86, %v352
    %v354 = vpop.f32.mrb[0].mxu0
    %355 = vdwg.mxu0
    %v356 = vmax.f32 %v323, 0.0
    %v357 = vmax.f32 %v328, 0.0
    %v358 = vmax.f32 %v333, 0.0
    %v359 = vmax.f32 %v338, 0.0
    %v360 = vmax.f32 %v343, 0.0
    %v361 = vmax.f32 %v348, 0.0
    %v362 = vmax.f32 %v353, 0.0
    %v363 = vmax.f32 %v214, %v356
    %v364 = vmax.f32 %v215, %v357
    %v365 = vmax.f32 %v216, %v358
    %v366 = vmax.f32 %v217, %v359
    %v367 = vmax.f32 %v218, %v360
    %v368 = vmax.f32 %v219, %v361
    %v369 = vmax.f32 %v220, %v362
    %v370 = vld [vmem:[%s2] sm:$0xff]
    %v371 = vld [vmem:[%s2 + $0x8] sm:$0xff]
    %v372 = vld [vmem:[%s2 + $0x10] sm:$0xff]
    %v373 = vld [vmem:[%s2 + $0x18] sm:$0xff]
    %v374 = vld [vmem:[%s2 + $0x20] sm:$0xff]
    %v375 = vld [vmem:[%s2 + $0x28] sm:$0xff]
    %v376 = vld [vmem:[%s2 + $0x30] sm:$0xff]
    %v377 = vld [vmem:[%s2 + $0x38] sm:$0xff]
    %v378 = vld [vmem:[%s2 + $0x40] sm:$0xff]
    %v379 = vld [vmem:[%s2 + $0x48] sm:$0xff]
    %v380 = vld [vmem:[%s2 + $0x50] sm:$0xff]
    %v381 = vld [vmem:[%s2 + $0x58] sm:$0xff]
    %v382 = vld [vmem:[%s2 + $0x60] sm:$0x3]
    %v383 = vld [vmem:[%s2 + $0x68] sm:$0x3]
    %v385 = vsel %vm88, %v371, 0
    %v388 = vsel %vm88, %v373, 0
    %v391 = vsel %vm88, %v375, 0
    %v394 = vsel %vm88, %v377, 0
    %v397 = vsel %vm88, %v379, 0
    %v400 = vsel %vm88, %v381, 0
    %v403 = vsel %vm88, %v383, 0
    %405 = vmatprep.subr.mxu0 0.0
    %406 = vmatpush1.msra.mxu0 %v48
    %407 = vmatprep.subr.mxu0 0.0
    %408 = vmatpush1.msra.mxu0 %v49
    %409 = vmatprep.subr.mxu0 0.0
    %410 = vmatpush1.msra.mxu0 %v50
    %411 = vmatprep.subr.mxu0 0.0
    %412 = vmatpush1.msra.mxu0 %v51
    %413 = vmatprep.subr.mxu0 0.0
    %414 = vmatpush1.msra.mxu0 %v52
    %415 = vmatprep.subr.mxu0 0.0
    %416 = vmatpush1.msra.mxu0 %v53
    %417 = vmatprep.subr.mxu0 0.0
    %418 = vmatpush1.msra.mxu0 %v54
    %419 = vmatprep.subr.mxu0 0.0
    %420 = vmatpush1.msra.mxu0 %v55
    %421 = vmatprep.subr.mxu0 0.0
    %422 = vmatpush1.msra.mxu0 %v56
    %423 = vmatprep.subr.mxu0 0.0
    %424 = vmatpush1.msra.mxu0 %v57
    %425 = vmatprep.subr.mxu0 0.0
    %426 = vmatpush1.msra.mxu0 %v58
    %427 = vmatprep.subr.mxu0 0.0
    %428 = vmatpush1.msra.mxu0 %v59
    %429 = vmatprep.subr.mxu0 0.0
    %430 = vmatpush1.msra.mxu0 %v60
    %431 = vmatprep.subr.mxu0 0.0
    %432 = vmatpush1.msra.mxu0 %v61
    %433 = vmatprep.subr.mxu0 0.0
    %434 = vmatpush1.msra.mxu0 %v62
    %435 = vmatprep.subr.mxu0 0.0
    %436 = vmatpush1.msra.mxu0 %v63
    %437 = vmatprep.subr.mxu0 0.0
    %438 = vmatpush1.msra.mxu0 %v64
    %439 = vmatprep.subr.mxu0 0.0
    %440 = vmatpush1.msra.mxu0 %v65
    %441 = vmatprep.subr.mxu0 0.0
    %442 = vmatpush1.msra.mxu0 %v112
    %443 = vmatprep.subr.mxu0 0.0
    %444 = vmatpush1.msra.mxu0 0.0
    %445 = vmatprep.subr.mxu0 0.0
    %446 = vmatpush1.msra.mxu0 0.0
    %447 = vmatprep.subr.mxu0 0.0
    %448 = vmatpush1.msra.mxu0 0.0
    %449 = vmatprep.subr.mxu0 0.0
    %450 = vmatpush1.msra.mxu0 0.0
    %451 = vmatprep.subr.mxu0 0.0
    %452 = vmatpush1.msra.mxu0 0.0
    %453 = vmatprep.subr.mxu0 0.0
    %454 = vmatpush1.msra.mxu0 0.0
    %455 = vmatprep.subr.mxu0 0.0
    %456 = vmatpush1.msra.mxu0 0.0
    %457 = vmatprep.subr.mxu0 0.0
    %458 = vmatpush1.msra.mxu0 0.0
    %459 = vmatprep.subr.mxu0 0.0
    %460 = vmatpush1.msra.mxu0 0.0
    %461 = vmatprep.subr.mxu0 0.0
    %462 = vmatpush1.msra.mxu0 0.0
    %463 = vmatprep.subr.mxu0 0.0
    %464 = vmatpush1.msra.mxu0 0.0
    %465 = vmatprep.subr.mxu0 0.0
    %466 = vmatpush1.msra.mxu0 0.0
    %467 = vmatprep.subr.mxu0 0.0
    %468 = vmatpush1.msra.mxu0 0.0
    %469 = vmatprep.mubr.f32.mxu0 %v385
    %470 = vmatmul.mubr.f32.gmra.mrb[0].mxu0 %v370
    %v471 = vpop.f32.mrb[0].mxu0
    %v472 = vadd.f32 %v86, %v471
    %v473 = vpop.f32.mrb[0].mxu0
    %474 = vmatprep.mubr.f32.mxu0 %v388
    %475 = vmatmul.mubr.f32.gmra.mrb[0].mxu0 %v372
    %v476 = vpop.f32.mrb[0].mxu0
    %v477 = vadd.f32 %v86, %v476
    %v478 = vpop.f32.mrb[0].mxu0
    %479 = vmatprep.mubr.f32.mxu0 %v391
    %480 = vmatmul.mubr.f32.gmra.mrb[0].mxu0 %v374
    %v481 = vpop.f32.mrb[0].mxu0
    %v482 = vadd.f32 %v86, %v481
    %v483 = vpop.f32.mrb[0].mxu0
    %484 = vmatprep.mubr.f32.mxu0 %v394
    %485 = vmatmul.mubr.f32.gmra.mrb[0].mxu0 %v376
    %v486 = vpop.f32.mrb[0].mxu0
    %v487 = vadd.f32 %v86, %v486
    %v488 = vpop.f32.mrb[0].mxu0
    %489 = vmatprep.mubr.f32.mxu0 %v397
    %490 = vmatmul.mubr.f32.gmra.mrb[0].mxu0 %v378
    %v491 = vpop.f32.mrb[0].mxu0
    %v492 = vadd.f32 %v86, %v491
    %v493 = vpop.f32.mrb[0].mxu0
    %494 = vmatprep.mubr.f32.mxu0 %v400
    %495 = vmatmul.mubr.f32.gmra.mrb[0].mxu0 %v380
    %v496 = vpop.f32.mrb[0].mxu0
    %v497 = vadd.f32 %v86, %v496
    %v498 = vpop.f32.mrb[0].mxu0
    %499 = vmatprep.mubr.f32.mxu0 %v403
    %500 = vmatmul.mubr.f32.gmra.mrb[0].mxu0 %v382
    %v501 = vpop.f32.mrb[0].mxu0
    %v502 = vadd.f32 %v86, %v501
    %v503 = vpop.f32.mrb[0].mxu0
    %504 = vdwg.mxu0
    %v505 = vmax.f32 %v472, 0.0
    %v506 = vmax.f32 %v477, 0.0
    %v507 = vmax.f32 %v482, 0.0
    %v508 = vmax.f32 %v487, 0.0
    %v509 = vmax.f32 %v492, 0.0
    %v510 = vmax.f32 %v497, 0.0
    %v511 = vmax.f32 %v502, 0.0
    %v512 = vld [vmem:[%s3] sm:$0xff]
    %v513 = vld [vmem:[%s3 + $0x8] sm:$0xff]
    %v514 = vld [vmem:[%s3 + $0x10] sm:$0xff]
    %v515 = vld [vmem:[%s3 + $0x18] sm:$0xff]
    %v516 = vld [vmem:[%s3 + $0x20] sm:$0xff]
    %v517 = vld [vmem:[%s3 + $0x28] sm:$0xff]
    %v518 = vld [vmem:[%s3 + $0x30] sm:$0xff]
    %v519 = vld [vmem:[%s3 + $0x38] sm:$0xff]
    %v520 = vld [vmem:[%s3 + $0x40] sm:$0xff]
    %v521 = vld [vmem:[%s3 + $0x48] sm:$0xff]
    %v522 = vld [vmem:[%s3 + $0x50] sm:$0xff]
    %v523 = vld [vmem:[%s3 + $0x58] sm:$0xff]
    %v524 = vld [vmem:[%s3 + $0x60] sm:$0x3]
    %v525 = vld [vmem:[%s3 + $0x68] sm:$0x3]
    %v527 = vsel %vm88, %v513, 0
    %v530 = vsel %vm88, %v515, 0
    %v533 = vsel %vm88, %v517, 0
    %v536 = vsel %vm88, %v519, 0
    %v539 = vsel %vm88, %v521, 0
    %v542 = vsel %vm88, %v523, 0
    %v545 = vsel %vm88, %v525, 0
    %547 = vmatprep.subr.mxu0 0.0
    %548 = vmatpush1.msra.mxu0 %v48
    %549 = vmatprep.subr.mxu0 0.0
    %550 = vmatpush1.msra.mxu0 %v49
    %551 = vmatprep.subr.mxu0 0.0
    %552 = vmatpush1.msra.mxu0 %v50
    %553 = vmatprep.subr.mxu0 0.0
    %554 = vmatpush1.msra.mxu0 %v51
    %555 = vmatprep.subr.mxu0 0.0
    %556 = vmatpush1.msra.mxu0 %v52
    %557 = vmatprep.subr.mxu0 0.0
    %558 = vmatpush1.msra.mxu0 %v53
    %559 = vmatprep.subr.mxu0 0.0
    %560 = vmatpush1.msra.mxu0 %v54
    %561 = vmatprep.subr.mxu0 0.0
    %562 = vmatpush1.msra.mxu0 %v55
    %563 = vmatprep.subr.mxu0 0.0
    %564 = vmatpush1.msra.mxu0 %v56
    %565 = vmatprep.subr.mxu0 0.0
    %566 = vmatpush1.msra.mxu0 %v57
    %567 = vmatprep.subr.mxu0 0.0
    %568 = vmatpush1.msra.mxu0 %v58
    %569 = vmatprep.subr.mxu0 0.0
    %570 = vmatpush1.msra.mxu0 %v59
    %571 = vmatprep.subr.mxu0 0.0
    %572 = vmatpush1.msra.mxu0 %v60
    %573 = vmatprep.subr.mxu0 0.0
    %574 = vmatpush1.msra.mxu0 %v61
    %575 = vmatprep.subr.mxu0 0.0
    %576 = vmatpush1.msra.mxu0 %v62
    %577 = vmatprep.subr.mxu0 0.0
    %578 = vmatpush1.msra.mxu0 %v63
    %579 = vmatprep.subr.mxu0 0.0
    %580 = vmatpush1.msra.mxu0 %v64
    %581 = vmatprep.subr.mxu0 0.0
    %582 = vmatpush1.msra.mxu0 %v65
    %583 = vmatprep.subr.mxu0 0.0
    %584 = vmatpush1.msra.mxu0 %v112
    %585 = vmatprep.subr.mxu0 0.0
    %586 = vmatpush1.msra.mxu0 0.0
    %587 = vmatprep.subr.mxu0 0.0
    %588 = vmatpush1.msra.mxu0 0.0
    %589 = vmatprep.subr.mxu0 0.0
    %590 = vmatpush1.msra.mxu0 0.0
    %591 = vmatprep.subr.mxu0 0.0
    %592 = vmatpush1.msra.mxu0 0.0
    %593 = vmatprep.subr.mxu0 0.0
    %594 = vmatpush1.msra.mxu0 0.0
    %595 = vmatprep.subr.mxu0 0.0
    %596 = vmatpush1.msra.mxu0 0.0
    %597 = vmatprep.subr.mxu0 0.0
    %598 = vmatpush1.msra.mxu0 0.0
    %599 = vmatprep.subr.mxu0 0.0
    %600 = vmatpush1.msra.mxu0 0.0
    %601 = vmatprep.subr.mxu0 0.0
    %602 = vmatpush1.msra.mxu0 0.0
    %603 = vmatprep.subr.mxu0 0.0
    %604 = vmatpush1.msra.mxu0 0.0
    %605 = vmatprep.subr.mxu0 0.0
    %606 = vmatpush1.msra.mxu0 0.0
    %607 = vmatprep.subr.mxu0 0.0
    %608 = vmatpush1.msra.mxu0 0.0
    %609 = vmatprep.subr.mxu0 0.0
    %610 = vmatpush1.msra.mxu0 0.0
    %611 = vmatprep.mubr.f32.mxu0 %v527
    %612 = vmatmul.mubr.f32.gmra.mrb[0].mxu0 %v512
    %v613 = vpop.f32.mrb[0].mxu0
    %v614 = vadd.f32 %v86, %v613
    %v615 = vpop.f32.mrb[0].mxu0
    %616 = vmatprep.mubr.f32.mxu0 %v530
    %617 = vmatmul.mubr.f32.gmra.mrb[0].mxu0 %v514
    %v618 = vpop.f32.mrb[0].mxu0
    %v619 = vadd.f32 %v86, %v618
    %v620 = vpop.f32.mrb[0].mxu0
    %621 = vmatprep.mubr.f32.mxu0 %v533
    %622 = vmatmul.mubr.f32.gmra.mrb[0].mxu0 %v516
    %v623 = vpop.f32.mrb[0].mxu0
    %v624 = vadd.f32 %v86, %v623
    %v625 = vpop.f32.mrb[0].mxu0
    %626 = vmatprep.mubr.f32.mxu0 %v536
    %627 = vmatmul.mubr.f32.gmra.mrb[0].mxu0 %v518
    %v628 = vpop.f32.mrb[0].mxu0
    %v629 = vadd.f32 %v86, %v628
    %v630 = vpop.f32.mrb[0].mxu0
    %631 = vmatprep.mubr.f32.mxu0 %v539
    %632 = vmatmul.mubr.f32.gmra.mrb[0].mxu0 %v520
    %v633 = vpop.f32.mrb[0].mxu0
    %v634 = vadd.f32 %v86, %v633
    %v635 = vpop.f32.mrb[0].mxu0
    %636 = vmatprep.mubr.f32.mxu0 %v542
    %637 = vmatmul.mubr.f32.gmra.mrb[0].mxu0 %v522
    %v638 = vpop.f32.mrb[0].mxu0
    %v639 = vadd.f32 %v86, %v638
    %v640 = vpop.f32.mrb[0].mxu0
    %641 = vmatprep.mubr.f32.mxu0 %v545
    %642 = vmatmul.mubr.f32.gmra.mrb[0].mxu0 %v524
    %v643 = vpop.f32.mrb[0].mxu0
    %v644 = vadd.f32 %v86, %v643
    %v645 = vpop.f32.mrb[0].mxu0
    %646 = vdwg.mxu0
    %v647 = vmax.f32 %v614, 0.0
    %v648 = vmax.f32 %v619, 0.0
    %v649 = vmax.f32 %v624, 0.0
    %v650 = vmax.f32 %v629, 0.0
    %v651 = vmax.f32 %v634, 0.0
    %v652 = vmax.f32 %v639, 0.0
    %v653 = vmax.f32 %v644, 0.0
    %v654 = vmax.f32 %v505, %v647
    %v655 = vmax.f32 %v506, %v648
    %v656 = vmax.f32 %v507, %v649
    %v657 = vmax.f32 %v508, %v650
    %v658 = vmax.f32 %v509, %v651
    %v659 = vmax.f32 %v510, %v652
    %v660 = vmax.f32 %v511, %v653
    %v661 = vmax.f32 %v363, %v654
    %v662 = vmax.f32 %v364, %v655
    %v663 = vmax.f32 %v365, %v656
    %v664 = vmax.f32 %v366, %v657
    %v665 = vmax.f32 %v367, %v658
    %v666 = vmax.f32 %v368, %v659
    %v667 = vmax.f32 %v369, %v660
    %668 = vst [vmem:[%s12] sm:$0xff] %v661
    %669 = vst [vmem:[%s12 + $0x8] sm:$0xff] %v662
    %670 = vst [vmem:[%s12 + $0x10] sm:$0xff] %v663
    %671 = vst [vmem:[%s12 + $0x18] sm:$0xff] %v664
    %672 = vst [vmem:[%s12 + $0x20] sm:$0xff] %v665
    %673 = vst [vmem:[%s12 + $0x28] sm:$0xff] %v666
    %674 = vst [vmem:[%s12 + $0x30] sm:$0x3] %v667
    %v675 = vld [vmem:[%s12] sm:$0x3]
    %v676 = vld [vmem:[%s6] sm:$0xff]
    %v677 = vld [vmem:[%s6 + $0x8] sm:$0xff]
    %v678 = vld [vmem:[%s6 + $0x10] sm:$0xff]
    %v679 = vld [vmem:[%s6 + $0x18] sm:$0xff]
    %v680 = vld [vmem:[%s6 + $0x20] sm:$0xff]
    %v681 = vld [vmem:[%s6 + $0x28] sm:$0xff]
    %v682 = vld [vmem:[%s6 + $0x30] sm:$0xff]
    %v683 = vld [vmem:[%s6 + $0x38] sm:$0xff]
    %v684 = vld [vmem:[%s6 + $0x40] sm:$0xff]
    %v685 = vld [vmem:[%s6 + $0x48] sm:$0xff]
    %v686 = vld [vmem:[%s6 + $0x50] sm:$0xff]
    %v687 = vld [vmem:[%s6 + $0x58] sm:$0xff]
    %v688 = vld [vmem:[%s6 + $0x60] sm:$0xff]
    %v689 = vld [vmem:[%s6 + $0x68] sm:$0xff]
    %v690 = vld [vmem:[%s6 + $0x70] sm:$0xff]
    %v691 = vld [vmem:[%s6 + $0x78] sm:$0xff]
    %v692 = vld [vmem:[%s12 + $0x2] sm:$0x3]
    %s693 = scalar_lea.vmem %s6, 128
    %v694 = vld [vmem:[%s693] sm:$0xff]
    %v695 = vld [vmem:[%s693 + $0x8] sm:$0xff]
    %v696 = vld [vmem:[%s693 + $0x10] sm:$0xff]
    %v697 = vld [vmem:[%s693 + $0x18] sm:$0xff]
    %v698 = vld [vmem:[%s693 + $0x20] sm:$0xff]
    %v699 = vld [vmem:[%s693 + $0x28] sm:$0xff]
    %v700 = vld [vmem:[%s693 + $0x30] sm:$0xff]
    %v701 = vld [vmem:[%s693 + $0x38] sm:$0xff]
    %v702 = vld [vmem:[%s693 + $0x40] sm:$0xff]
    %v703 = vld [vmem:[%s693 + $0x48] sm:$0xff]
    %v704 = vld [vmem:[%s693 + $0x50] sm:$0xff]
    %v705 = vld [vmem:[%s693 + $0x58] sm:$0xff]
    %v706 = vld [vmem:[%s693 + $0x60] sm:$0xff]
    %v707 = vld [vmem:[%s693 + $0x68] sm:$0xff]
    %v708 = vld [vmem:[%s693 + $0x70] sm:$0xff]
    %v709 = vld [vmem:[%s693 + $0x78] sm:$0xff]
    %710 = vmatprep.subr.mxu0 0.0
    %711 = vmatpush1.msra.mxu0 %v694
    %712 = vmatprep.subr.mxu0 0.0
    %713 = vmatpush1.msra.mxu0 %v695
    %714 = vmatprep.subr.mxu0 0.0
    %715 = vmatpush1.msra.mxu0 %v696
    %716 = vmatprep.subr.mxu0 0.0
    %717 = vmatpush1.msra.mxu0 %v697
    %718 = vmatprep.subr.mxu0 0.0
    %719 = vmatpush1.msra.mxu0 %v698
    %720 = vmatprep.subr.mxu0 0.0
    %721 = vmatpush1.msra.mxu0 %v699
    %722 = vmatprep.subr.mxu0 0.0
    %723 = vmatpush1.msra.mxu0 %v700
    %724 = vmatprep.subr.mxu0 0.0
    %725 = vmatpush1.msra.mxu0 %v701
    %726 = vmatprep.subr.mxu0 0.0
    %727 = vmatpush1.msra.mxu0 %v702
    %728 = vmatprep.subr.mxu0 0.0
    %729 = vmatpush1.msra.mxu0 %v703
    %730 = vmatprep.subr.mxu0 0.0
    %731 = vmatpush1.msra.mxu0 %v704
    %732 = vmatprep.subr.mxu0 0.0
    %733 = vmatpush1.msra.mxu0 %v705
    %734 = vmatprep.subr.mxu0 0.0
    %735 = vmatpush1.msra.mxu0 %v706
    %736 = vmatprep.subr.mxu0 0.0
    %737 = vmatpush1.msra.mxu0 %v707
    %738 = vmatprep.subr.mxu0 0.0
    %739 = vmatpush1.msra.mxu0 %v708
    %740 = vmatprep.subr.mxu0 0.0
    %741 = vmatpush1.msra.mxu0 %v709
    %742 = vmatprep.subr.mxu0 0.0
    %743 = vmatpush1.msra.mxu0 0.0
    %744 = vmatprep.subr.mxu0 0.0
    %745 = vmatpush1.msra.mxu0 0.0
    %746 = vmatprep.subr.mxu0 0.0
    %747 = vmatpush1.msra.mxu0 0.0
    %748 = vmatprep.subr.mxu0 0.0
    %749 = vmatpush1.msra.mxu0 0.0
    %750 = vmatprep.subr.mxu0 0.0
    %751 = vmatpush1.msra.mxu0 0.0
    %752 = vmatprep.subr.mxu0 0.0
    %753 = vmatpush1.msra.mxu0 0.0
    %754 = vmatprep.subr.mxu0 0.0
    %755 = vmatpush1.msra.mxu0 0.0
    %756 = vmatprep.subr.mxu0 0.0
    %757 = vmatpush1.msra.mxu0 0.0
    %758 = vmatprep.subr.mxu0 0.0
    %759 = vmatpush1.msra.mxu0 0.0
    %760 = vmatprep.subr.mxu0 0.0
    %761 = vmatpush1.msra.mxu0 0.0
    %762 = vmatprep.subr.mxu0 0.0
    %763 = vmatpush1.msra.mxu0 0.0
    %764 = vmatprep.subr.mxu0 0.0
    %765 = vmatpush1.msra.mxu0 0.0
    %766 = vmatprep.subr.mxu0 0.0
    %767 = vmatpush1.msra.mxu0 0.0
    %768 = vmatprep.subr.mxu0 0.0
    %769 = vmatpush1.msra.mxu0 0.0
    %770 = vmatprep.subr.mxu0 0.0
    %771 = vmatpush1.msra.mxu0 0.0
    %772 = vmatprep.subr.mxu0 0.0
    %773 = vmatpush1.msra.mxu0 0.0
    %774 = vmatprep.mubr.f32.mxu0 0.0
    %775 = vmatmul.mubr.f32.gmra.mrb[0].mxu0 %v692
    %v776 = vpop.f32.mrb[0].mxu0
    %v777 = vadd.f32 0.0, %v776
    %v778 = vpop.f32.mrb[0].mxu0
    %779 = vdwg.mxu0
    %780 = vmatprep.subr.mxu0 0.0
    %781 = vmatpush1.msra.mxu0 %v676
    %782 = vmatprep.subr.mxu0 0.0
    %783 = vmatpush1.msra.mxu0 %v677
    %784 = vmatprep.subr.mxu0 0.0
    %785 = vmatpush1.msra.mxu0 %v678
    %786 = vmatprep.subr.mxu0 0.0
    %787 = vmatpush1.msra.mxu0 %v679
    %788 = vmatprep.subr.mxu0 0.0
    %789 = vmatpush1.msra.mxu0 %v680
    %790 = vmatprep.subr.mxu0 0.0
    %791 = vmatpush1.msra.mxu0 %v681
    %792 = vmatprep.subr.mxu0 0.0
    %793 = vmatpush1.msra.mxu0 %v682
    %794 = vmatprep.subr.mxu0 0.0
    %795 = vmatpush1.msra.mxu0 %v683
    %796 = vmatprep.subr.mxu0 0.0
    %797 = vmatpush1.msra.mxu0 %v684
    %798 = vmatprep.subr.mxu0 0.0
    %799 = vmatpush1.msra.mxu0 %v685
    %800 = vmatprep.subr.mxu0 0.0
    %801 = vmatpush1.msra.mxu0 %v686
    %802 = vmatprep.subr.mxu0 0.0
    %803 = vmatpush1.msra.mxu0 %v687
    %804 = vmatprep.subr.mxu0 0.0
    %805 = vmatpush1.msra.mxu0 %v688
    %806 = vmatprep.subr.mxu0 0.0
    %807 = vmatpush1.msra.mxu0 %v689
    %808 = vmatprep.subr.mxu0 0.0
    %809 = vmatpush1.msra.mxu0 %v690
    %810 = vmatprep.subr.mxu0 0.0
    %811 = vmatpush1.msra.mxu0 %v691
    %812 = vmatprep.subr.mxu0 0.0
    %813 = vmatpush1.msra.mxu0 0.0
    %814 = vmatprep.subr.mxu0 0.0
    %815 = vmatpush1.msra.mxu0 0.0
    %816 = vmatprep.subr.mxu0 0.0
    %817 = vmatpush1.msra.mxu0 0.0
    %818 = vmatprep.subr.mxu0 0.0
    %819 = vmatpush1.msra.mxu0 0.0
    %820 = vmatprep.subr.mxu0 0.0
    %821 = vmatpush1.msra.mxu0 0.0
    %822 = vmatprep.subr.mxu0 0.0
    %823 = vmatpush1.msra.mxu0 0.0
    %824 = vmatprep.subr.mxu0 0.0
    %825 = vmatpush1.msra.mxu0 0.0
    %826 = vmatprep.subr.mxu0 0.0
    %827 = vmatpush1.msra.mxu0 0.0
    %828 = vmatprep.subr.mxu0 0.0
    %829 = vmatpush1.msra.mxu0 0.0
    %830 = vmatprep.subr.mxu0 0.0
    %831 = vmatpush1.msra.mxu0 0.0
    %832 = vmatprep.subr.mxu0 0.0
    %833 = vmatpush1.msra.mxu0 0.0
    %834 = vmatprep.subr.mxu0 0.0
    %835 = vmatpush1.msra.mxu0 0.0
    %836 = vmatprep.subr.mxu0 0.0
    %837 = vmatpush1.msra.mxu0 0.0
    %838 = vmatprep.subr.mxu0 0.0
    %839 = vmatpush1.msra.mxu0 0.0
    %840 = vmatprep.subr.mxu0 0.0
    %841 = vmatpush1.msra.mxu0 0.0
    %842 = vmatprep.subr.mxu0 0.0
    %843 = vmatpush1.msra.mxu0 0.0
    %844 = vmatprep.mubr.f32.mxu0 0.0
    %845 = vmatmul.mubr.f32.gmra.mrb[0].mxu0 %v675
    %v846 = vpop.f32.mrb[0].mxu0
    %v847 = vadd.f32 %v777, %v846
    %v848 = vpop.f32.mrb[0].mxu0
    %849 = vdwg.mxu0
    %v850 = vld [vmem:[%s12 + $0x4] sm:$0x3]
    %s851 = scalar_lea.vmem %s6, 256
    %v852 = vld [vmem:[%s851] sm:$0xff]
    %v853 = vld [vmem:[%s851 + $0x8] sm:$0xff]
    %v854 = vld [vmem:[%s851 + $0x10] sm:$0xff]
    %v855 = vld [vmem:[%s851 + $0x18] sm:$0xff]
    %v856 = vld [vmem:[%s851 + $0x20] sm:$0xff]
    %v857 = vld [vmem:[%s851 + $0x28] sm:$0xff]
    %v858 = vld [vmem:[%s851 + $0x30] sm:$0xff]
    %v859 = vld [vmem:[%s851 + $0x38] sm:$0xff]
    %v860 = vld [vmem:[%s851 + $0x40] sm:$0xff]
    %v861 = vld [vmem:[%s851 + $0x48] sm:$0xff]
    %v862 = vld [vmem:[%s851 + $0x50] sm:$0xff]
    %v863 = vld [vmem:[%s851 + $0x58] sm:$0xff]
    %v864 = vld [vmem:[%s851 + $0x60] sm:$0xff]
    %v865 = vld [vmem:[%s851 + $0x68] sm:$0xff]
    %v866 = vld [vmem:[%s851 + $0x70] sm:$0xff]
    %v867 = vld [vmem:[%s851 + $0x78] sm:$0xff]
    %868 = vmatprep.subr.mxu0 0.0
    %869 = vmatpush1.msra.mxu0 %v852
    %870 = vmatprep.subr.mxu0 0.0
    %871 = vmatpush1.msra.mxu0 %v853
    %872 = vmatprep.subr.mxu0 0.0
    %873 = vmatpush1.msra.mxu0 %v854
    %874 = vmatprep.subr.mxu0 0.0
    %875 = vmatpush1.msra.mxu0 %v855
    %876 = vmatprep.subr.mxu0 0.0
    %877 = vmatpush1.msra.mxu0 %v856
    %878 = vmatprep.subr.mxu0 0.0
    %879 = vmatpush1.msra.mxu0 %v857
    %880 = vmatprep.subr.mxu0 0.0
    %881 = vmatpush1.msra.mxu0 %v858
    %882 = vmatprep.subr.mxu0 0.0
    %883 = vmatpush1.msra.mxu0 %v859
    %884 = vmatprep.subr.mxu0 0.0
    %885 = vmatpush1.msra.mxu0 %v860
    %886 = vmatprep.subr.mxu0 0.0
    %887 = vmatpush1.msra.mxu0 %v861
    %888 = vmatprep.subr.mxu0 0.0
    %889 = vmatpush1.msra.mxu0 %v862
    %890 = vmatprep.subr.mxu0 0.0
    %891 = vmatpush1.msra.mxu0 %v863
    %892 = vmatprep.subr.mxu0 0.0
    %893 = vmatpush1.msra.mxu0 %v864
    %894 = vmatprep.subr.mxu0 0.0
    %895 = vmatpush1.msra.mxu0 %v865
    %896 = vmatprep.subr.mxu0 0.0
    %897 = vmatpush1.msra.mxu0 %v866
    %898 = vmatprep.subr.mxu0 0.0
    %899 = vmatpush1.msra.mxu0 %v867
    %900 = vmatprep.subr.mxu0 0.0
    %901 = vmatpush1.msra.mxu0 0.0
    %902 = vmatprep.subr.mxu0 0.0
    %903 = vmatpush1.msra.mxu0 0.0
    %904 = vmatprep.subr.mxu0 0.0
    %905 = vmatpush1.msra.mxu0 0.0
    %906 = vmatprep.subr.mxu0 0.0
    %907 = vmatpush1.msra.mxu0 0.0
    %908 = vmatprep.subr.mxu0 0.0
    %909 = vmatpush1.msra.mxu0 0.0
    %910 = vmatprep.subr.mxu0 0.0
    %911 = vmatpush1.msra.mxu0 0.0
    %912 = vmatprep.subr.mxu0 0.0
    %913 = vmatpush1.msra.mxu0 0.0
    %914 = vmatprep.subr.mxu0 0.0
    %915 = vmatpush1.msra.mxu0 0.0
    %916 = vmatprep.subr.mxu0 0.0
    %917 = vmatpush1.msra.mxu0 0.0
    %918 = vmatprep.subr.mxu0 0.0
    %919 = vmatpush1.msra.mxu0 0.0
    %920 = vmatprep.subr.mxu0 0.0
    %921 = vmatpush1.msra.mxu0 0.0
    %922 = vmatprep.subr.mxu0 0.0
    %923 = vmatpush1.msra.mxu0 0.0
    %924 = vmatprep.subr.mxu0 0.0
    %925 = vmatpush1.msra.mxu0 0.0
    %926 = vmatprep.subr.mxu0 0.0
    %927 = vmatpush1.msra.mxu0 0.0
    %928 = vmatprep.subr.mxu0 0.0
    %929 = vmatpush1.msra.mxu0 0.0
    %930 = vmatprep.subr.mxu0 0.0
    %931 = vmatpush1.msra.mxu0 0.0
    %932 = vmatprep.mubr.f32.mxu0 0.0
    %933 = vmatmul.mubr.f32.gmra.mrb[0].mxu0 %v850
    %v934 = vpop.f32.mrb[0].mxu0
    %v935 = vadd.f32 0.0, %v934
    %v936 = vpop.f32.mrb[0].mxu0
    %937 = vdwg.mxu0
    %v938 = vadd.f32 %v847, %v935
    %v939 = vld [vmem:[%s12 + $0x6] sm:$0x3]
    %s940 = scalar_lea.vmem %s6, 384
    %v941 = vld [vmem:[%s940] sm:$0xff]
    %v942 = vld [vmem:[%s940 + $0x8] sm:$0xff]
    %v943 = vld [vmem:[%s940 + $0x10] sm:$0xff]
    %v944 = vld [vmem:[%s940 + $0x18] sm:$0xff]
    %v945 = vld [vmem:[%s940 + $0x20] sm:$0xff]
    %v946 = vld [vmem:[%s940 + $0x28] sm:$0xff]
    %v947 = vld [vmem:[%s940 + $0x30] sm:$0xff]
    %v948 = vld [vmem:[%s940 + $0x38] sm:$0xff]
    %v949 = vld [vmem:[%s940 + $0x40] sm:$0xff]
    %v950 = vld [vmem:[%s940 + $0x48] sm:$0xff]
    %v951 = vld [vmem:[%s940 + $0x50] sm:$0xff]
    %v952 = vld [vmem:[%s940 + $0x58] sm:$0xff]
    %v953 = vld [vmem:[%s940 + $0x60] sm:$0xff]
    %v954 = vld [vmem:[%s940 + $0x68] sm:$0xff]
    %v955 = vld [vmem:[%s940 + $0x70] sm:$0xff]
    %v956 = vld [vmem:[%s940 + $0x78] sm:$0xff]
    %957 = vmatprep.subr.mxu0 0.0
    %958 = vmatpush1.msra.mxu0 %v941
    %959 = vmatprep.subr.mxu0 0.0
    %960 = vmatpush1.msra.mxu0 %v942
    %961 = vmatprep.subr.mxu0 0.0
    %962 = vmatpush1.msra.mxu0 %v943
    %963 = vmatprep.subr.mxu0 0.0
    %964 = vmatpush1.msra.mxu0 %v944
    %965 = vmatprep.subr.mxu0 0.0
    %966 = vmatpush1.msra.mxu0 %v945
    %967 = vmatprep.subr.mxu0 0.0
    %968 = vmatpush1.msra.mxu0 %v946
    %969 = vmatprep.subr.mxu0 0.0
    %970 = vmatpush1.msra.mxu0 %v947
    %971 = vmatprep.subr.mxu0 0.0
    %972 = vmatpush1.msra.mxu0 %v948
    %973 = vmatprep.subr.mxu0 0.0
    %974 = vmatpush1.msra.mxu0 %v949
    %975 = vmatprep.subr.mxu0 0.0
    %976 = vmatpush1.msra.mxu0 %v950
    %977 = vmatprep.subr.mxu0 0.0
    %978 = vmatpush1.msra.mxu0 %v951
    %979 = vmatprep.subr.mxu0 0.0
    %980 = vmatpush1.msra.mxu0 %v952
    %981 = vmatprep.subr.mxu0 0.0
    %982 = vmatpush1.msra.mxu0 %v953
    %983 = vmatprep.subr.mxu0 0.0
    %984 = vmatpush1.msra.mxu0 %v954
    %985 = vmatprep.subr.mxu0 0.0
    %986 = vmatpush1.msra.mxu0 %v955
    %987 = vmatprep.subr.mxu0 0.0
    %988 = vmatpush1.msra.mxu0 %v956
    %989 = vmatprep.subr.mxu0 0.0
    %990 = vmatpush1.msra.mxu0 0.0
    %991 = vmatprep.subr.mxu0 0.0
    %992 = vmatpush1.msra.mxu0 0.0
    %993 = vmatprep.subr.mxu0 0.0
    %994 = vmatpush1.msra.mxu0 0.0
    %995 = vmatprep.subr.mxu0 0.0
    %996 = vmatpush1.msra.mxu0 0.0
    %997 = vmatprep.subr.mxu0 0.0
    %998 = vmatpush1.msra.mxu0 0.0
    %999 = vmatprep.subr.mxu0 0.0
    %1000 = vmatpush1.msra.mxu0 0.0
    %1001 = vmatprep.subr.mxu0 0.0
    %1002 = vmatpush1.msra.mxu0 0.0
    %1003 = vmatprep.subr.mxu0 0.0
    %1004 = vmatpush1.msra.mxu0 0.0
    %1005 = vmatprep.subr.mxu0 0.0
    %1006 = vmatpush1.msra.mxu0 0.0
    %1007 = vmatprep.subr.mxu0 0.0
    %1008 = vmatpush1.msra.mxu0 0.0
    %1009 = vmatprep.subr.mxu0 0.0
    %1010 = vmatpush1.msra.mxu0 0.0
    %1011 = vmatprep.subr.mxu0 0.0
    %1012 = vmatpush1.msra.mxu0 0.0
    %1013 = vmatprep.subr.mxu0 0.0
    %1014 = vmatpush1.msra.mxu0 0.0
    %1015 = vmatprep.subr.mxu0 0.0
    %1016 = vmatpush1.msra.mxu0 0.0
    %1017 = vmatprep.subr.mxu0 0.0
    %1018 = vmatpush1.msra.mxu0 0.0
    %1019 = vmatprep.subr.mxu0 0.0
    %1020 = vmatpush1.msra.mxu0 0.0
    %1021 = vmatprep.mubr.f32.mxu0 0.0
    %1022 = vmatmul.mubr.f32.gmra.mrb[0].mxu0 %v939
    %v1023 = vpop.f32.mrb[0].mxu0
    %v1024 = vadd.f32 0.0, %v1023
    %v1025 = vpop.f32.mrb[0].mxu0
    %1026 = vdwg.mxu0
    %v1027 = vadd.f32 %v938, %v1024
    %v1028 = vld [vmem:[%s12 + $0x8] sm:$0x3]
    %s1029 = scalar_lea.vmem %s6, 512
    %v1030 = vld [vmem:[%s1029] sm:$0xff]
    %v1031 = vld [vmem:[%s1029 + $0x8] sm:$0xff]
    %v1032 = vld [vmem:[%s1029 + $0x10] sm:$0xff]
    %v1033 = vld [vmem:[%s1029 + $0x18] sm:$0xff]
    %v1034 = vld [vmem:[%s1029 + $0x20] sm:$0xff]
    %v1035 = vld [vmem:[%s1029 + $0x28] sm:$0xff]
    %v1036 = vld [vmem:[%s1029 + $0x30] sm:$0xff]
    %v1037 = vld [vmem:[%s1029 + $0x38] sm:$0xff]
    %v1038 = vld [vmem:[%s1029 + $0x40] sm:$0xff]
    %v1039 = vld [vmem:[%s1029 + $0x48] sm:$0xff]
    %v1040 = vld [vmem:[%s1029 + $0x50] sm:$0xff]
    %v1041 = vld [vmem:[%s1029 + $0x58] sm:$0xff]
    %v1042 = vld [vmem:[%s1029 + $0x60] sm:$0xff]
    %v1043 = vld [vmem:[%s1029 + $0x68] sm:$0xff]
    %v1044 = vld [vmem:[%s1029 + $0x70] sm:$0xff]
    %v1045 = vld [vmem:[%s1029 + $0x78] sm:$0xff]
    %1046 = vmatprep.subr.mxu0 0.0
    %1047 = vmatpush1.msra.mxu0 %v1030
    %1048 = vmatprep.subr.mxu0 0.0
    %1049 = vmatpush1.msra.mxu0 %v1031
    %1050 = vmatprep.subr.mxu0 0.0
    %1051 = vmatpush1.msra.mxu0 %v1032
    %1052 = vmatprep.subr.mxu0 0.0
    %1053 = vmatpush1.msra.mxu0 %v1033
    %1054 = vmatprep.subr.mxu0 0.0
    %1055 = vmatpush1.msra.mxu0 %v1034
    %1056 = vmatprep.subr.mxu0 0.0
    %1057 = vmatpush1.msra.mxu0 %v1035
    %1058 = vmatprep.subr.mxu0 0.0
    %1059 = vmatpush1.msra.mxu0 %v1036
    %1060 = vmatprep.subr.mxu0 0.0
    %1061 = vmatpush1.msra.mxu0 %v1037
    %1062 = vmatprep.subr.mxu0 0.0
    %1063 = vmatpush1.msra.mxu0 %v1038
    %1064 = vmatprep.subr.mxu0 0.0
    %1065 = vmatpush1.msra.mxu0 %v1039
    %1066 = vmatprep.subr.mxu0 0.0
    %1067 = vmatpush1.msra.mxu0 %v1040
    %1068 = vmatprep.subr.mxu0 0.0
    %1069 = vmatpush1.msra.mxu0 %v1041
    %1070 = vmatprep.subr.mxu0 0.0
    %1071 = vmatpush1.msra.mxu0 %v1042
    %1072 = vmatprep.subr.mxu0 0.0
    %1073 = vmatpush1.msra.mxu0 %v1043
    %1074 = vmatprep.subr.mxu0 0.0
    %1075 = vmatpush1.msra.mxu0 %v1044
    %1076 = vmatprep.subr.mxu0 0.0
    %1077 = vmatpush1.msra.mxu0 %v1045
    %1078 = vmatprep.subr.mxu0 0.0
    %1079 = vmatpush1.msra.mxu0 0.0
    %1080 = vmatprep.subr.mxu0 0.0
    %1081 = vmatpush1.msra.mxu0 0.0
    %1082 = vmatprep.subr.mxu0 0.0
    %1083 = vmatpush1.msra.mxu0 0.0
    %1084 = vmatprep.subr.mxu0 0.0
    %1085 = vmatpush1.msra.mxu0 0.0
    %1086 = vmatprep.subr.mxu0 0.0
    %1087 = vmatpush1.msra.mxu0 0.0
    %1088 = vmatprep.subr.mxu0 0.0
    %1089 = vmatpush1.msra.mxu0 0.0
    %1090 = vmatprep.subr.mxu0 0.0
    %1091 = vmatpush1.msra.mxu0 0.0
    %1092 = vmatprep.subr.mxu0 0.0
    %1093 = vmatpush1.msra.mxu0 0.0
    %1094 = vmatprep.subr.mxu0 0.0
    %1095 = vmatpush1.msra.mxu0 0.0
    %1096 = vmatprep.subr.mxu0 0.0
    %1097 = vmatpush1.msra.mxu0 0.0
    %1098 = vmatprep.subr.mxu0 0.0
    %1099 = vmatpush1.msra.mxu0 0.0
    %1100 = vmatprep.subr.mxu0 0.0
    %1101 = vmatpush1.msra.mxu0 0.0
    %1102 = vmatprep.subr.mxu0 0.0
    %1103 = vmatpush1.msra.mxu0 0.0
    %1104 = vmatprep.subr.mxu0 0.0
    %1105 = vmatpush1.msra.mxu0 0.0
    %1106 = vmatprep.subr.mxu0 0.0
    %1107 = vmatpush1.msra.mxu0 0.0
    %1108 = vmatprep.subr.mxu0 0.0
    %1109 = vmatpush1.msra.mxu0 0.0
    %1110 = vmatprep.mubr.f32.mxu0 0.0
    %1111 = vmatmul.mubr.f32.gmra.mrb[0].mxu0 %v1028
    %v1112 = vpop.f32.mrb[0].mxu0
    %v1113 = vadd.f32 0.0, %v1112
    %v1114 = vpop.f32.mrb[0].mxu0
    %1115 = vdwg.mxu0
    %v1116 = vadd.f32 %v1027, %v1113
    %v1117 = vld [vmem:[%s12 + $0xa] sm:$0x3]
    %s1118 = scalar_lea.vmem %s6, 640
    %v1119 = vld [vmem:[%s1118] sm:$0xff]
    %v1120 = vld [vmem:[%s1118 + $0x8] sm:$0xff]
    %v1121 = vld [vmem:[%s1118 + $0x10] sm:$0xff]
    %v1122 = vld [vmem:[%s1118 + $0x18] sm:$0xff]
    %v1123 = vld [vmem:[%s1118 + $0x20] sm:$0xff]
    %v1124 = vld [vmem:[%s1118 + $0x28] sm:$0xff]
    %v1125 = vld [vmem:[%s1118 + $0x30] sm:$0xff]
    %v1126 = vld [vmem:[%s1118 + $0x38] sm:$0xff]
    %v1127 = vld [vmem:[%s1118 + $0x40] sm:$0xff]
    %v1128 = vld [vmem:[%s1118 + $0x48] sm:$0xff]
    %v1129 = vld [vmem:[%s1118 + $0x50] sm:$0xff]
    %v1130 = vld [vmem:[%s1118 + $0x58] sm:$0xff]
    %v1131 = vld [vmem:[%s1118 + $0x60] sm:$0xff]
    %v1132 = vld [vmem:[%s1118 + $0x68] sm:$0xff]
    %v1133 = vld [vmem:[%s1118 + $0x70] sm:$0xff]
    %v1134 = vld [vmem:[%s1118 + $0x78] sm:$0xff]
    %1135 = vmatprep.subr.mxu0 0.0
    %1136 = vmatpush1.msra.mxu0 %v1119
    %1137 = vmatprep.subr.mxu0 0.0
    %1138 = vmatpush1.msra.mxu0 %v1120
    %1139 = vmatprep.subr.mxu0 0.0
    %1140 = vmatpush1.msra.mxu0 %v1121
    %1141 = vmatprep.subr.mxu0 0.0
    %1142 = vmatpush1.msra.mxu0 %v1122
    %1143 = vmatprep.subr.mxu0 0.0
    %1144 = vmatpush1.msra.mxu0 %v1123
    %1145 = vmatprep.subr.mxu0 0.0
    %1146 = vmatpush1.msra.mxu0 %v1124
    %1147 = vmatprep.subr.mxu0 0.0
    %1148 = vmatpush1.msra.mxu0 %v1125
    %1149 = vmatprep.subr.mxu0 0.0
    %1150 = vmatpush1.msra.mxu0 %v1126
    %1151 = vmatprep.subr.mxu0 0.0
    %1152 = vmatpush1.msra.mxu0 %v1127
    %1153 = vmatprep.subr.mxu0 0.0
    %1154 = vmatpush1.msra.mxu0 %v1128
    %1155 = vmatprep.subr.mxu0 0.0
    %1156 = vmatpush1.msra.mxu0 %v1129
    %1157 = vmatprep.subr.mxu0 0.0
    %1158 = vmatpush1.msra.mxu0 %v1130
    %1159 = vmatprep.subr.mxu0 0.0
    %1160 = vmatpush1.msra.mxu0 %v1131
    %1161 = vmatprep.subr.mxu0 0.0
    %1162 = vmatpush1.msra.mxu0 %v1132
    %1163 = vmatprep.subr.mxu0 0.0
    %1164 = vmatpush1.msra.mxu0 %v1133
    %1165 = vmatprep.subr.mxu0 0.0
    %1166 = vmatpush1.msra.mxu0 %v1134
    %1167 = vmatprep.subr.mxu0 0.0
    %1168 = vmatpush1.msra.mxu0 0.0
    %1169 = vmatprep.subr.mxu0 0.0
    %1170 = vmatpush1.msra.mxu0 0.0
    %1171 = vmatprep.subr.mxu0 0.0
    %1172 = vmatpush1.msra.mxu0 0.0
    %1173 = vmatprep.subr.mxu0 0.0
    %1174 = vmatpush1.msra.mxu0 0.0
    %1175 = vmatprep.subr.mxu0 0.0
    %1176 = vmatpush1.msra.mxu0 0.0
    %1177 = vmatprep.subr.mxu0 0.0
    %1178 = vmatpush1.msra.mxu0 0.0
    %1179 = vmatprep.subr.mxu0 0.0
    %1180 = vmatpush1.msra.mxu0 0.0
    %1181 = vmatprep.subr.mxu0 0.0
    %1182 = vmatpush1.msra.mxu0 0.0
    %1183 = vmatprep.subr.mxu0 0.0
    %1184 = vmatpush1.msra.mxu0 0.0
    %1185 = vmatprep.subr.mxu0 0.0
    %1186 = vmatpush1.msra.mxu0 0.0
    %1187 = vmatprep.subr.mxu0 0.0
    %1188 = vmatpush1.msra.mxu0 0.0
    %1189 = vmatprep.subr.mxu0 0.0
    %1190 = vmatpush1.msra.mxu0 0.0
    %1191 = vmatprep.subr.mxu0 0.0
    %1192 = vmatpush1.msra.mxu0 0.0
    %1193 = vmatprep.subr.mxu0 0.0
    %1194 = vmatpush1.msra.mxu0 0.0
    %1195 = vmatprep.subr.mxu0 0.0
    %1196 = vmatpush1.msra.mxu0 0.0
    %1197 = vmatprep.subr.mxu0 0.0
    %1198 = vmatpush1.msra.mxu0 0.0
    %1199 = vmatprep.mubr.f32.mxu0 0.0
    %1200 = vmatmul.mubr.f32.gmra.mrb[0].mxu0 %v1117
    %v1201 = vpop.f32.mrb[0].mxu0
    %v1202 = vadd.f32 0.0, %v1201
    %v1203 = vpop.f32.mrb[0].mxu0
    %1204 = vdwg.mxu0
    %v1205 = vadd.f32 %v1116, %v1202
    %v1206 = vld [vmem:[%s12 + $0xc] sm:$0x3]
    %s1207 = scalar_lea.vmem %s6, 768
    %v1208 = vld [vmem:[%s1207] sm:$0xff]
    %v1209 = vld [vmem:[%s1207 + $0x8] sm:$0xff]
    %v1210 = vld [vmem:[%s1207 + $0x10] sm:$0xff]
    %v1211 = vld [vmem:[%s1207 + $0x18] sm:$0xff]
    %v1212 = vld [vmem:[%s1207 + $0x20] sm:$0xff]
    %v1213 = vld [vmem:[%s1207 + $0x28] sm:$0xff]
    %v1214 = vld [vmem:[%s1207 + $0x30] sm:$0xff]
    %v1215 = vld [vmem:[%s1207 + $0x38] sm:$0xff]
    %v1216 = vld [vmem:[%s1207 + $0x40] sm:$0xff]
    %v1217 = vld [vmem:[%s1207 + $0x48] sm:$0xff]
    %v1218 = vld [vmem:[%s1207 + $0x50] sm:$0xff]
    %v1219 = vld [vmem:[%s1207 + $0x58] sm:$0xff]
    %v1220 = vld [vmem:[%s1207 + $0x60] sm:$0xff]
    %v1221 = vld [vmem:[%s1207 + $0x68] sm:$0xff]
    %v1222 = vld [vmem:[%s1207 + $0x70] sm:$0xff]
    %v1223 = vld [vmem:[%s1207 + $0x78] sm:$0xff]
    %1224 = vmatprep.subr.mxu0 0.0
    %1225 = vmatpush1.msra.mxu0 %v1208
    %1226 = vmatprep.subr.mxu0 0.0
    %1227 = vmatpush1.msra.mxu0 %v1209
    %1228 = vmatprep.subr.mxu0 0.0
    %1229 = vmatpush1.msra.mxu0 %v1210
    %1230 = vmatprep.subr.mxu0 0.0
    %1231 = vmatpush1.msra.mxu0 %v1211
    %1232 = vmatprep.subr.mxu0 0.0
    %1233 = vmatpush1.msra.mxu0 %v1212
    %1234 = vmatprep.subr.mxu0 0.0
    %1235 = vmatpush1.msra.mxu0 %v1213
    %1236 = vmatprep.subr.mxu0 0.0
    %1237 = vmatpush1.msra.mxu0 %v1214
    %1238 = vmatprep.subr.mxu0 0.0
    %1239 = vmatpush1.msra.mxu0 %v1215
    %1240 = vmatprep.subr.mxu0 0.0
    %1241 = vmatpush1.msra.mxu0 %v1216
    %1242 = vmatprep.subr.mxu0 0.0
    %1243 = vmatpush1.msra.mxu0 %v1217
    %1244 = vmatprep.subr.mxu0 0.0
    %1245 = vmatpush1.msra.mxu0 %v1218
    %1246 = vmatprep.subr.mxu0 0.0
    %1247 = vmatpush1.msra.mxu0 %v1219
    %1248 = vmatprep.subr.mxu0 0.0
    %1249 = vmatpush1.msra.mxu0 %v1220
    %1250 = vmatprep.subr.mxu0 0.0
    %1251 = vmatpush1.msra.mxu0 %v1221
    %1252 = vmatprep.subr.mxu0 0.0
    %1253 = vmatpush1.msra.mxu0 %v1222
    %1254 = vmatprep.subr.mxu0 0.0
    %1255 = vmatpush1.msra.mxu0 %v1223
    %1256 = vmatprep.subr.mxu0 0.0
    %1257 = vmatpush1.msra.mxu0 0.0
    %1258 = vmatprep.subr.mxu0 0.0
    %1259 = vmatpush1.msra.mxu0 0.0
    %1260 = vmatprep.subr.mxu0 0.0
    %1261 = vmatpush1.msra.mxu0 0.0
    %1262 = vmatprep.subr.mxu0 0.0
    %1263 = vmatpush1.msra.mxu0 0.0
    %1264 = vmatprep.subr.mxu0 0.0
    %1265 = vmatpush1.msra.mxu0 0.0
    %1266 = vmatprep.subr.mxu0 0.0
    %1267 = vmatpush1.msra.mxu0 0.0
    %1268 = vmatprep.subr.mxu0 0.0
    %1269 = vmatpush1.msra.mxu0 0.0
    %1270 = vmatprep.subr.mxu0 0.0
    %1271 = vmatpush1.msra.mxu0 0.0
    %1272 = vmatprep.subr.mxu0 0.0
    %1273 = vmatpush1.msra.mxu0 0.0
    %1274 = vmatprep.subr.mxu0 0.0
    %1275 = vmatpush1.msra.mxu0 0.0
    %1276 = vmatprep.subr.mxu0 0.0
    %1277 = vmatpush1.msra.mxu0 0.0
    %1278 = vmatprep.subr.mxu0 0.0
    %1279 = vmatpush1.msra.mxu0 0.0
    %1280 = vmatprep.subr.mxu0 0.0
    %1281 = vmatpush1.msra.mxu0 0.0
    %1282 = vmatprep.subr.mxu0 0.0
    %1283 = vmatpush1.msra.mxu0 0.0
    %1284 = vmatprep.subr.mxu0 0.0
    %1285 = vmatpush1.msra.mxu0 0.0
    %1286 = vmatprep.subr.mxu0 0.0
    %1287 = vmatpush1.msra.mxu0 0.0
    %1288 = vmatprep.mubr.f32.mxu0 0.0
    %1289 = vmatmul.mubr.f32.gmra.mrb[0].mxu0 %v1206
    %v1290 = vpop.f32.mrb[0].mxu0
    %v1291 = vadd.f32 0.0, %v1290
    %v1292 = vpop.f32.mrb[0].mxu0
    %1293 = vdwg.mxu0
    %v1294 = vadd.f32 %v1205, %v1291
    %v1295 = vld [vmem:[%s12 + $0xe] sm:$0x3]
    %s1296 = scalar_lea.vmem %s6, 896
    %v1297 = vld [vmem:[%s1296] sm:$0xff]
    %v1298 = vld [vmem:[%s1296 + $0x8] sm:$0xff]
    %v1299 = vld [vmem:[%s1296 + $0x10] sm:$0xff]
    %v1300 = vld [vmem:[%s1296 + $0x18] sm:$0xff]
    %v1301 = vld [vmem:[%s1296 + $0x20] sm:$0xff]
    %v1302 = vld [vmem:[%s1296 + $0x28] sm:$0xff]
    %v1303 = vld [vmem:[%s1296 + $0x30] sm:$0xff]
    %v1304 = vld [vmem:[%s1296 + $0x38] sm:$0xff]
    %v1305 = vld [vmem:[%s1296 + $0x40] sm:$0xff]
    %v1306 = vld [vmem:[%s1296 + $0x48] sm:$0xff]
    %v1307 = vld [vmem:[%s1296 + $0x50] sm:$0xff]
    %v1308 = vld [vmem:[%s1296 + $0x58] sm:$0xff]
    %v1309 = vld [vmem:[%s1296 + $0x60] sm:$0xff]
    %v1310 = vld [vmem:[%s1296 + $0x68] sm:$0xff]
    %v1311 = vld [vmem:[%s1296 + $0x70] sm:$0xff]
    %v1312 = vld [vmem:[%s1296 + $0x78] sm:$0xff]
    %1313 = vmatprep.subr.mxu0 0.0
    %1314 = vmatpush1.msra.mxu0 %v1297
    %1315 = vmatprep.subr.mxu0 0.0
    %1316 = vmatpush1.msra.mxu0 %v1298
    %1317 = vmatprep.subr.mxu0 0.0
    %1318 = vmatpush1.msra.mxu0 %v1299
    %1319 = vmatprep.subr.mxu0 0.0
    %1320 = vmatpush1.msra.mxu0 %v1300
    %1321 = vmatprep.subr.mxu0 0.0
    %1322 = vmatpush1.msra.mxu0 %v1301
    %1323 = vmatprep.subr.mxu0 0.0
    %1324 = vmatpush1.msra.mxu0 %v1302
    %1325 = vmatprep.subr.mxu0 0.0
    %1326 = vmatpush1.msra.mxu0 %v1303
    %1327 = vmatprep.subr.mxu0 0.0
    %1328 = vmatpush1.msra.mxu0 %v1304
    %1329 = vmatprep.subr.mxu0 0.0
    %1330 = vmatpush1.msra.mxu0 %v1305
    %1331 = vmatprep.subr.mxu0 0.0
    %1332 = vmatpush1.msra.mxu0 %v1306
    %1333 = vmatprep.subr.mxu0 0.0
    %1334 = vmatpush1.msra.mxu0 %v1307
    %1335 = vmatprep.subr.mxu0 0.0
    %1336 = vmatpush1.msra.mxu0 %v1308
    %1337 = vmatprep.subr.mxu0 0.0
    %1338 = vmatpush1.msra.mxu0 %v1309
    %1339 = vmatprep.subr.mxu0 0.0
    %1340 = vmatpush1.msra.mxu0 %v1310
    %1341 = vmatprep.subr.mxu0 0.0
    %1342 = vmatpush1.msra.mxu0 %v1311
    %1343 = vmatprep.subr.mxu0 0.0
    %1344 = vmatpush1.msra.mxu0 %v1312
    %1345 = vmatprep.subr.mxu0 0.0
    %1346 = vmatpush1.msra.mxu0 0.0
    %1347 = vmatprep.subr.mxu0 0.0
    %1348 = vmatpush1.msra.mxu0 0.0
    %1349 = vmatprep.subr.mxu0 0.0
    %1350 = vmatpush1.msra.mxu0 0.0
    %1351 = vmatprep.subr.mxu0 0.0
    %1352 = vmatpush1.msra.mxu0 0.0
    %1353 = vmatprep.subr.mxu0 0.0
    %1354 = vmatpush1.msra.mxu0 0.0
    %1355 = vmatprep.subr.mxu0 0.0
    %1356 = vmatpush1.msra.mxu0 0.0
    %1357 = vmatprep.subr.mxu0 0.0
    %1358 = vmatpush1.msra.mxu0 0.0
    %1359 = vmatprep.subr.mxu0 0.0
    %1360 = vmatpush1.msra.mxu0 0.0
    %1361 = vmatprep.subr.mxu0 0.0
    %1362 = vmatpush1.msra.mxu0 0.0
    %1363 = vmatprep.subr.mxu0 0.0
    %1364 = vmatpush1.msra.mxu0 0.0
    %1365 = vmatprep.subr.mxu0 0.0
    %1366 = vmatpush1.msra.mxu0 0.0
    %1367 = vmatprep.subr.mxu0 0.0
    %1368 = vmatpush1.msra.mxu0 0.0
    %1369 = vmatprep.subr.mxu0 0.0
    %1370 = vmatpush1.msra.mxu0 0.0
    %1371 = vmatprep.subr.mxu0 0.0
    %1372 = vmatpush1.msra.mxu0 0.0
    %1373 = vmatprep.subr.mxu0 0.0
    %1374 = vmatpush1.msra.mxu0 0.0
    %1375 = vmatprep.subr.mxu0 0.0
    %1376 = vmatpush1.msra.mxu0 0.0
    %1377 = vmatprep.mubr.f32.mxu0 0.0
    %1378 = vmatmul.mubr.f32.gmra.mrb[0].mxu0 %v1295
    %v1379 = vpop.f32.mrb[0].mxu0
    %v1380 = vadd.f32 0.0, %v1379
    %v1381 = vpop.f32.mrb[0].mxu0
    %1382 = vdwg.mxu0
    %v1383 = vadd.f32 %v1294, %v1380
    %v1384 = vld [vmem:[%s12 + $0x10] sm:$0x3]
    %s1385 = scalar_lea.vmem %s6, 1024
    %v1386 = vld [vmem:[%s1385] sm:$0xff]
    %v1387 = vld [vmem:[%s1385 + $0x8] sm:$0xff]
    %v1388 = vld [vmem:[%s1385 + $0x10] sm:$0xff]
    %v1389 = vld [vmem:[%s1385 + $0x18] sm:$0xff]
    %v1390 = vld [vmem:[%s1385 + $0x20] sm:$0xff]
    %v1391 = vld [vmem:[%s1385 + $0x28] sm:$0xff]
    %v1392 = vld [vmem:[%s1385 + $0x30] sm:$0xff]
    %v1393 = vld [vmem:[%s1385 + $0x38] sm:$0xff]
    %v1394 = vld [vmem:[%s1385 + $0x40] sm:$0xff]
    %v1395 = vld [vmem:[%s1385 + $0x48] sm:$0xff]
    %v1396 = vld [vmem:[%s1385 + $0x50] sm:$0xff]
    %v1397 = vld [vmem:[%s1385 + $0x58] sm:$0xff]
    %v1398 = vld [vmem:[%s1385 + $0x60] sm:$0xff]
    %v1399 = vld [vmem:[%s1385 + $0x68] sm:$0xff]
    %v1400 = vld [vmem:[%s1385 + $0x70] sm:$0xff]
    %v1401 = vld [vmem:[%s1385 + $0x78] sm:$0xff]
    %1402 = vmatprep.subr.mxu0 0.0
    %1403 = vmatpush1.msra.mxu0 %v1386
    %1404 = vmatprep.subr.mxu0 0.0
    %1405 = vmatpush1.msra.mxu0 %v1387
    %1406 = vmatprep.subr.mxu0 0.0
    %1407 = vmatpush1.msra.mxu0 %v1388
    %1408 = vmatprep.subr.mxu0 0.0
    %1409 = vmatpush1.msra.mxu0 %v1389
    %1410 = vmatprep.subr.mxu0 0.0
    %1411 = vmatpush1.msra.mxu0 %v1390
    %1412 = vmatprep.subr.mxu0 0.0
    %1413 = vmatpush1.msra.mxu0 %v1391
    %1414 = vmatprep.subr.mxu0 0.0
    %1415 = vmatpush1.msra.mxu0 %v1392
    %1416 = vmatprep.subr.mxu0 0.0
    %1417 = vmatpush1.msra.mxu0 %v1393
    %1418 = vmatprep.subr.mxu0 0.0
    %1419 = vmatpush1.msra.mxu0 %v1394
    %1420 = vmatprep.subr.mxu0 0.0
    %1421 = vmatpush1.msra.mxu0 %v1395
    %1422 = vmatprep.subr.mxu0 0.0
    %1423 = vmatpush1.msra.mxu0 %v1396
    %1424 = vmatprep.subr.mxu0 0.0
    %1425 = vmatpush1.msra.mxu0 %v1397
    %1426 = vmatprep.subr.mxu0 0.0
    %1427 = vmatpush1.msra.mxu0 %v1398
    %1428 = vmatprep.subr.mxu0 0.0
    %1429 = vmatpush1.msra.mxu0 %v1399
    %1430 = vmatprep.subr.mxu0 0.0
    %1431 = vmatpush1.msra.mxu0 %v1400
    %1432 = vmatprep.subr.mxu0 0.0
    %1433 = vmatpush1.msra.mxu0 %v1401
    %1434 = vmatprep.subr.mxu0 0.0
    %1435 = vmatpush1.msra.mxu0 0.0
    %1436 = vmatprep.subr.mxu0 0.0
    %1437 = vmatpush1.msra.mxu0 0.0
    %1438 = vmatprep.subr.mxu0 0.0
    %1439 = vmatpush1.msra.mxu0 0.0
    %1440 = vmatprep.subr.mxu0 0.0
    %1441 = vmatpush1.msra.mxu0 0.0
    %1442 = vmatprep.subr.mxu0 0.0
    %1443 = vmatpush1.msra.mxu0 0.0
    %1444 = vmatprep.subr.mxu0 0.0
    %1445 = vmatpush1.msra.mxu0 0.0
    %1446 = vmatprep.subr.mxu0 0.0
    %1447 = vmatpush1.msra.mxu0 0.0
    %1448 = vmatprep.subr.mxu0 0.0
    %1449 = vmatpush1.msra.mxu0 0.0
    %1450 = vmatprep.subr.mxu0 0.0
    %1451 = vmatpush1.msra.mxu0 0.0
    %1452 = vmatprep.subr.mxu0 0.0
    %1453 = vmatpush1.msra.mxu0 0.0
    %1454 = vmatprep.subr.mxu0 0.0
    %1455 = vmatpush1.msra.mxu0 0.0
    %1456 = vmatprep.subr.mxu0 0.0
    %1457 = vmatpush1.msra.mxu0 0.0
    %1458 = vmatprep.subr.mxu0 0.0
    %1459 = vmatpush1.msra.mxu0 0.0
    %1460 = vmatprep.subr.mxu0 0.0
    %1461 = vmatpush1.msra.mxu0 0.0
    %1462 = vmatprep.subr.mxu0 0.0
    %1463 = vmatpush1.msra.mxu0 0.0
    %1464 = vmatprep.subr.mxu0 0.0
    %1465 = vmatpush1.msra.mxu0 0.0
    %1466 = vmatprep.mubr.f32.mxu0 0.0
    %1467 = vmatmul.mubr.f32.gmra.mrb[0].mxu0 %v1384
    %v1468 = vpop.f32.mrb[0].mxu0
    %v1469 = vadd.f32 0.0, %v1468
    %v1470 = vpop.f32.mrb[0].mxu0
    %1471 = vdwg.mxu0
    %v1472 = vadd.f32 %v1383, %v1469
    %v1473 = vld [vmem:[%s12 + $0x12] sm:$0x3]
    %s1474 = scalar_lea.vmem %s6, 1152
    %v1475 = vld [vmem:[%s1474] sm:$0xff]
    %v1476 = vld [vmem:[%s1474 + $0x8] sm:$0xff]
    %v1477 = vld [vmem:[%s1474 + $0x10] sm:$0xff]
    %v1478 = vld [vmem:[%s1474 + $0x18] sm:$0xff]
    %v1479 = vld [vmem:[%s1474 + $0x20] sm:$0xff]
    %v1480 = vld [vmem:[%s1474 + $0x28] sm:$0xff]
    %v1481 = vld [vmem:[%s1474 + $0x30] sm:$0xff]
    %v1482 = vld [vmem:[%s1474 + $0x38] sm:$0xff]
    %v1483 = vld [vmem:[%s1474 + $0x40] sm:$0xff]
    %v1484 = vld [vmem:[%s1474 + $0x48] sm:$0xff]
    %v1485 = vld [vmem:[%s1474 + $0x50] sm:$0xff]
    %v1486 = vld [vmem:[%s1474 + $0x58] sm:$0xff]
    %v1487 = vld [vmem:[%s1474 + $0x60] sm:$0xff]
    %v1488 = vld [vmem:[%s1474 + $0x68] sm:$0xff]
    %v1489 = vld [vmem:[%s1474 + $0x70] sm:$0xff]
    %v1490 = vld [vmem:[%s1474 + $0x78] sm:$0xff]
    %1491 = vmatprep.subr.mxu0 0.0
    %1492 = vmatpush1.msra.mxu0 %v1475
    %1493 = vmatprep.subr.mxu0 0.0
    %1494 = vmatpush1.msra.mxu0 %v1476
    %1495 = vmatprep.subr.mxu0 0.0
    %1496 = vmatpush1.msra.mxu0 %v1477
    %1497 = vmatprep.subr.mxu0 0.0
    %1498 = vmatpush1.msra.mxu0 %v1478
    %1499 = vmatprep.subr.mxu0 0.0
    %1500 = vmatpush1.msra.mxu0 %v1479
    %1501 = vmatprep.subr.mxu0 0.0
    %1502 = vmatpush1.msra.mxu0 %v1480
    %1503 = vmatprep.subr.mxu0 0.0
    %1504 = vmatpush1.msra.mxu0 %v1481
    %1505 = vmatprep.subr.mxu0 0.0
    %1506 = vmatpush1.msra.mxu0 %v1482
    %1507 = vmatprep.subr.mxu0 0.0
    %1508 = vmatpush1.msra.mxu0 %v1483
    %1509 = vmatprep.subr.mxu0 0.0
    %1510 = vmatpush1.msra.mxu0 %v1484
    %1511 = vmatprep.subr.mxu0 0.0
    %1512 = vmatpush1.msra.mxu0 %v1485
    %1513 = vmatprep.subr.mxu0 0.0
    %1514 = vmatpush1.msra.mxu0 %v1486
    %1515 = vmatprep.subr.mxu0 0.0
    %1516 = vmatpush1.msra.mxu0 %v1487
    %1517 = vmatprep.subr.mxu0 0.0
    %1518 = vmatpush1.msra.mxu0 %v1488
    %1519 = vmatprep.subr.mxu0 0.0
    %1520 = vmatpush1.msra.mxu0 %v1489
    %1521 = vmatprep.subr.mxu0 0.0
    %1522 = vmatpush1.msra.mxu0 %v1490
    %1523 = vmatprep.subr.mxu0 0.0
    %1524 = vmatpush1.msra.mxu0 0.0
    %1525 = vmatprep.subr.mxu0 0.0
    %1526 = vmatpush1.msra.mxu0 0.0
    %1527 = vmatprep.subr.mxu0 0.0
    %1528 = vmatpush1.msra.mxu0 0.0
    %1529 = vmatprep.subr.mxu0 0.0
    %1530 = vmatpush1.msra.mxu0 0.0
    %1531 = vmatprep.subr.mxu0 0.0
    %1532 = vmatpush1.msra.mxu0 0.0
    %1533 = vmatprep.subr.mxu0 0.0
    %1534 = vmatpush1.msra.mxu0 0.0
    %1535 = vmatprep.subr.mxu0 0.0
    %1536 = vmatpush1.msra.mxu0 0.0
    %1537 = vmatprep.subr.mxu0 0.0
    %1538 = vmatpush1.msra.mxu0 0.0
    %1539 = vmatprep.subr.mxu0 0.0
    %1540 = vmatpush1.msra.mxu0 0.0
    %1541 = vmatprep.subr.mxu0 0.0
    %1542 = vmatpush1.msra.mxu0 0.0
    %1543 = vmatprep.subr.mxu0 0.0
    %1544 = vmatpush1.msra.mxu0 0.0
    %1545 = vmatprep.subr.mxu0 0.0
    %1546 = vmatpush1.msra.mxu0 0.0
    %1547 = vmatprep.subr.mxu0 0.0
    %1548 = vmatpush1.msra.mxu0 0.0
    %1549 = vmatprep.subr.mxu0 0.0
    %1550 = vmatpush1.msra.mxu0 0.0
    %1551 = vmatprep.subr.mxu0 0.0
    %1552 = vmatpush1.msra.mxu0 0.0
    %1553 = vmatprep.subr.mxu0 0.0
    %1554 = vmatpush1.msra.mxu0 0.0
    %1555 = vmatprep.mubr.f32.mxu0 0.0
    %1556 = vmatmul.mubr.f32.gmra.mrb[0].mxu0 %v1473
    %v1557 = vpop.f32.mrb[0].mxu0
    %v1558 = vadd.f32 0.0, %v1557
    %v1559 = vpop.f32.mrb[0].mxu0
    %1560 = vdwg.mxu0
    %v1561 = vadd.f32 %v1472, %v1558
    %v1562 = vld [vmem:[%s12 + $0x14] sm:$0x3]
    %s1563 = scalar_lea.vmem %s6, 1280
    %v1564 = vld [vmem:[%s1563] sm:$0xff]
    %v1565 = vld [vmem:[%s1563 + $0x8] sm:$0xff]
    %v1566 = vld [vmem:[%s1563 + $0x10] sm:$0xff]
    %v1567 = vld [vmem:[%s1563 + $0x18] sm:$0xff]
    %v1568 = vld [vmem:[%s1563 + $0x20] sm:$0xff]
    %v1569 = vld [vmem:[%s1563 + $0x28] sm:$0xff]
    %v1570 = vld [vmem:[%s1563 + $0x30] sm:$0xff]
    %v1571 = vld [vmem:[%s1563 + $0x38] sm:$0xff]
    %v1572 = vld [vmem:[%s1563 + $0x40] sm:$0xff]
    %v1573 = vld [vmem:[%s1563 + $0x48] sm:$0xff]
    %v1574 = vld [vmem:[%s1563 + $0x50] sm:$0xff]
    %v1575 = vld [vmem:[%s1563 + $0x58] sm:$0xff]
    %v1576 = vld [vmem:[%s1563 + $0x60] sm:$0xff]
    %v1577 = vld [vmem:[%s1563 + $0x68] sm:$0xff]
    %v1578 = vld [vmem:[%s1563 + $0x70] sm:$0xff]
    %v1579 = vld [vmem:[%s1563 + $0x78] sm:$0xff]
    %1580 = vmatprep.subr.mxu0 0.0
    %1581 = vmatpush1.msra.mxu0 %v1564
    %1582 = vmatprep.subr.mxu0 0.0
    %1583 = vmatpush1.msra.mxu0 %v1565
    %1584 = vmatprep.subr.mxu0 0.0
    %1585 = vmatpush1.msra.mxu0 %v1566
    %1586 = vmatprep.subr.mxu0 0.0
    %1587 = vmatpush1.msra.mxu0 %v1567
    %1588 = vmatprep.subr.mxu0 0.0
    %1589 = vmatpush1.msra.mxu0 %v1568
    %1590 = vmatprep.subr.mxu0 0.0
    %1591 = vmatpush1.msra.mxu0 %v1569
    %1592 = vmatprep.subr.mxu0 0.0
    %1593 = vmatpush1.msra.mxu0 %v1570
    %1594 = vmatprep.subr.mxu0 0.0
    %1595 = vmatpush1.msra.mxu0 %v1571
    %1596 = vmatprep.subr.mxu0 0.0
    %1597 = vmatpush1.msra.mxu0 %v1572
    %1598 = vmatprep.subr.mxu0 0.0
    %1599 = vmatpush1.msra.mxu0 %v1573
    %1600 = vmatprep.subr.mxu0 0.0
    %1601 = vmatpush1.msra.mxu0 %v1574
    %1602 = vmatprep.subr.mxu0 0.0
    %1603 = vmatpush1.msra.mxu0 %v1575
    %1604 = vmatprep.subr.mxu0 0.0
    %1605 = vmatpush1.msra.mxu0 %v1576
    %1606 = vmatprep.subr.mxu0 0.0
    %1607 = vmatpush1.msra.mxu0 %v1577
    %1608 = vmatprep.subr.mxu0 0.0
    %1609 = vmatpush1.msra.mxu0 %v1578
    %1610 = vmatprep.subr.mxu0 0.0
    %1611 = vmatpush1.msra.mxu0 %v1579
    %1612 = vmatprep.subr.mxu0 0.0
    %1613 = vmatpush1.msra.mxu0 0.0
    %1614 = vmatprep.subr.mxu0 0.0
    %1615 = vmatpush1.msra.mxu0 0.0
    %1616 = vmatprep.subr.mxu0 0.0
    %1617 = vmatpush1.msra.mxu0 0.0
    %1618 = vmatprep.subr.mxu0 0.0
    %1619 = vmatpush1.msra.mxu0 0.0
    %1620 = vmatprep.subr.mxu0 0.0
    %1621 = vmatpush1.msra.mxu0 0.0
    %1622 = vmatprep.subr.mxu0 0.0
    %1623 = vmatpush1.msra.mxu0 0.0
    %1624 = vmatprep.subr.mxu0 0.0
    %1625 = vmatpush1.msra.mxu0 0.0
    %1626 = vmatprep.subr.mxu0 0.0
    %1627 = vmatpush1.msra.mxu0 0.0
    %1628 = vmatprep.subr.mxu0 0.0
    %1629 = vmatpush1.msra.mxu0 0.0
    %1630 = vmatprep.subr.mxu0 0.0
    %1631 = vmatpush1.msra.mxu0 0.0
    %1632 = vmatprep.subr.mxu0 0.0
    %1633 = vmatpush1.msra.mxu0 0.0
    %1634 = vmatprep.subr.mxu0 0.0
    %1635 = vmatpush1.msra.mxu0 0.0
    %1636 = vmatprep.subr.mxu0 0.0
    %1637 = vmatpush1.msra.mxu0 0.0
    %1638 = vmatprep.subr.mxu0 0.0
    %1639 = vmatpush1.msra.mxu0 0.0
    %1640 = vmatprep.subr.mxu0 0.0
    %1641 = vmatpush1.msra.mxu0 0.0
    %1642 = vmatprep.subr.mxu0 0.0
    %1643 = vmatpush1.msra.mxu0 0.0
    %1644 = vmatprep.mubr.f32.mxu0 0.0
    %1645 = vmatmul.mubr.f32.gmra.mrb[0].mxu0 %v1562
    %v1646 = vpop.f32.mrb[0].mxu0
    %v1647 = vadd.f32 0.0, %v1646
    %v1648 = vpop.f32.mrb[0].mxu0
    %1649 = vdwg.mxu0
    %v1650 = vadd.f32 %v1561, %v1647
    %v1651 = vld [vmem:[%s12 + $0x16] sm:$0x3]
    %s1652 = scalar_lea.vmem %s6, 1408
    %v1653 = vld [vmem:[%s1652] sm:$0xff]
    %v1654 = vld [vmem:[%s1652 + $0x8] sm:$0xff]
    %v1655 = vld [vmem:[%s1652 + $0x10] sm:$0xff]
    %v1656 = vld [vmem:[%s1652 + $0x18] sm:$0xff]
    %v1657 = vld [vmem:[%s1652 + $0x20] sm:$0xff]
    %v1658 = vld [vmem:[%s1652 + $0x28] sm:$0xff]
    %v1659 = vld [vmem:[%s1652 + $0x30] sm:$0xff]
    %v1660 = vld [vmem:[%s1652 + $0x38] sm:$0xff]
    %v1661 = vld [vmem:[%s1652 + $0x40] sm:$0xff]
    %v1662 = vld [vmem:[%s1652 + $0x48] sm:$0xff]
    %v1663 = vld [vmem:[%s1652 + $0x50] sm:$0xff]
    %v1664 = vld [vmem:[%s1652 + $0x58] sm:$0xff]
    %v1665 = vld [vmem:[%s1652 + $0x60] sm:$0xff]
    %v1666 = vld [vmem:[%s1652 + $0x68] sm:$0xff]
    %v1667 = vld [vmem:[%s1652 + $0x70] sm:$0xff]
    %v1668 = vld [vmem:[%s1652 + $0x78] sm:$0xff]
    %1669 = vmatprep.subr.mxu0 0.0
    %1670 = vmatpush1.msra.mxu0 %v1653
    %1671 = vmatprep.subr.mxu0 0.0
    %1672 = vmatpush1.msra.mxu0 %v1654
    %1673 = vmatprep.subr.mxu0 0.0
    %1674 = vmatpush1.msra.mxu0 %v1655
    %1675 = vmatprep.subr.mxu0 0.0
    %1676 = vmatpush1.msra.mxu0 %v1656
    %1677 = vmatprep.subr.mxu0 0.0
    %1678 = vmatpush1.msra.mxu0 %v1657
    %1679 = vmatprep.subr.mxu0 0.0
    %1680 = vmatpush1.msra.mxu0 %v1658
    %1681 = vmatprep.subr.mxu0 0.0
    %1682 = vmatpush1.msra.mxu0 %v1659
    %1683 = vmatprep.subr.mxu0 0.0
    %1684 = vmatpush1.msra.mxu0 %v1660
    %1685 = vmatprep.subr.mxu0 0.0
    %1686 = vmatpush1.msra.mxu0 %v1661
    %1687 = vmatprep.subr.mxu0 0.0
    %1688 = vmatpush1.msra.mxu0 %v1662
    %1689 = vmatprep.subr.mxu0 0.0
    %1690 = vmatpush1.msra.mxu0 %v1663
    %1691 = vmatprep.subr.mxu0 0.0
    %1692 = vmatpush1.msra.mxu0 %v1664
    %1693 = vmatprep.subr.mxu0 0.0
    %1694 = vmatpush1.msra.mxu0 %v1665
    %1695 = vmatprep.subr.mxu0 0.0
    %1696 = vmatpush1.msra.mxu0 %v1666
    %1697 = vmatprep.subr.mxu0 0.0
    %1698 = vmatpush1.msra.mxu0 %v1667
    %1699 = vmatprep.subr.mxu0 0.0
    %1700 = vmatpush1.msra.mxu0 %v1668
    %1701 = vmatprep.subr.mxu0 0.0
    %1702 = vmatpush1.msra.mxu0 0.0
    %1703 = vmatprep.subr.mxu0 0.0
    %1704 = vmatpush1.msra.mxu0 0.0
    %1705 = vmatprep.subr.mxu0 0.0
    %1706 = vmatpush1.msra.mxu0 0.0
    %1707 = vmatprep.subr.mxu0 0.0
    %1708 = vmatpush1.msra.mxu0 0.0
    %1709 = vmatprep.subr.mxu0 0.0
    %1710 = vmatpush1.msra.mxu0 0.0
    %1711 = vmatprep.subr.mxu0 0.0
    %1712 = vmatpush1.msra.mxu0 0.0
    %1713 = vmatprep.subr.mxu0 0.0
    %1714 = vmatpush1.msra.mxu0 0.0
    %1715 = vmatprep.subr.mxu0 0.0
    %1716 = vmatpush1.msra.mxu0 0.0
    %1717 = vmatprep.subr.mxu0 0.0
    %1718 = vmatpush1.msra.mxu0 0.0
    %1719 = vmatprep.subr.mxu0 0.0
    %1720 = vmatpush1.msra.mxu0 0.0
    %1721 = vmatprep.subr.mxu0 0.0
    %1722 = vmatpush1.msra.mxu0 0.0
    %1723 = vmatprep.subr.mxu0 0.0
    %1724 = vmatpush1.msra.mxu0 0.0
    %1725 = vmatprep.subr.mxu0 0.0
    %1726 = vmatpush1.msra.mxu0 0.0
    %1727 = vmatprep.subr.mxu0 0.0
    %1728 = vmatpush1.msra.mxu0 0.0
    %1729 = vmatprep.subr.mxu0 0.0
    %1730 = vmatpush1.msra.mxu0 0.0
    %1731 = vmatprep.subr.mxu0 0.0
    %1732 = vmatpush1.msra.mxu0 0.0
    %1733 = vmatprep.mubr.f32.mxu0 0.0
    %1734 = vmatmul.mubr.f32.gmra.mrb[0].mxu0 %v1651
    %v1735 = vpop.f32.mrb[0].mxu0
    %v1736 = vadd.f32 0.0, %v1735
    %v1737 = vpop.f32.mrb[0].mxu0
    %1738 = vdwg.mxu0
    %v1739 = vadd.f32 %v1650, %v1736
    %v1740 = vld [vmem:[%s12 + $0x18] sm:$0x3]
    %s1741 = scalar_lea.vmem %s6, 1536
    %v1742 = vld [vmem:[%s1741] sm:$0xff]
    %v1743 = vld [vmem:[%s1741 + $0x8] sm:$0xff]
    %v1744 = vld [vmem:[%s1741 + $0x10] sm:$0xff]
    %v1745 = vld [vmem:[%s1741 + $0x18] sm:$0xff]
    %v1746 = vld [vmem:[%s1741 + $0x20] sm:$0xff]
    %v1747 = vld [vmem:[%s1741 + $0x28] sm:$0xff]
    %v1748 = vld [vmem:[%s1741 + $0x30] sm:$0xff]
    %v1749 = vld [vmem:[%s1741 + $0x38] sm:$0xff]
    %v1750 = vld [vmem:[%s1741 + $0x40] sm:$0xff]
    %v1751 = vld [vmem:[%s1741 + $0x48] sm:$0xff]
    %v1752 = vld [vmem:[%s1741 + $0x50] sm:$0xff]
    %v1753 = vld [vmem:[%s1741 + $0x58] sm:$0xff]
    %v1754 = vld [vmem:[%s1741 + $0x60] sm:$0xff]
    %v1755 = vld [vmem:[%s1741 + $0x68] sm:$0xff]
    %v1756 = vld [vmem:[%s1741 + $0x70] sm:$0xff]
    %v1757 = vld [vmem:[%s1741 + $0x78] sm:$0xff]
    %1758 = vmatprep.subr.mxu0 0.0
    %1759 = vmatpush1.msra.mxu0 %v1742
    %1760 = vmatprep.subr.mxu0 0.0
    %1761 = vmatpush1.msra.mxu0 %v1743
    %1762 = vmatprep.subr.mxu0 0.0
    %1763 = vmatpush1.msra.mxu0 %v1744
    %1764 = vmatprep.subr.mxu0 0.0
    %1765 = vmatpush1.msra.mxu0 %v1745
    %1766 = vmatprep.subr.mxu0 0.0
    %1767 = vmatpush1.msra.mxu0 %v1746
    %1768 = vmatprep.subr.mxu0 0.0
    %1769 = vmatpush1.msra.mxu0 %v1747
    %1770 = vmatprep.subr.mxu0 0.0
    %1771 = vmatpush1.msra.mxu0 %v1748
    %1772 = vmatprep.subr.mxu0 0.0
    %1773 = vmatpush1.msra.mxu0 %v1749
    %1774 = vmatprep.subr.mxu0 0.0
    %1775 = vmatpush1.msra.mxu0 %v1750
    %1776 = vmatprep.subr.mxu0 0.0
    %1777 = vmatpush1.msra.mxu0 %v1751
    %1778 = vmatprep.subr.mxu0 0.0
    %1779 = vmatpush1.msra.mxu0 %v1752
    %1780 = vmatprep.subr.mxu0 0.0
    %1781 = vmatpush1.msra.mxu0 %v1753
    %1782 = vmatprep.subr.mxu0 0.0
    %1783 = vmatpush1.msra.mxu0 %v1754
    %1784 = vmatprep.subr.mxu0 0.0
    %1785 = vmatpush1.msra.mxu0 %v1755
    %1786 = vmatprep.subr.mxu0 0.0
    %1787 = vmatpush1.msra.mxu0 %v1756
    %1788 = vmatprep.subr.mxu0 0.0
    %1789 = vmatpush1.msra.mxu0 %v1757
    %1790 = vmatprep.subr.mxu0 0.0
    %1791 = vmatpush1.msra.mxu0 0.0
    %1792 = vmatprep.subr.mxu0 0.0
    %1793 = vmatpush1.msra.mxu0 0.0
    %1794 = vmatprep.subr.mxu0 0.0
    %1795 = vmatpush1.msra.mxu0 0.0
    %1796 = vmatprep.subr.mxu0 0.0
    %1797 = vmatpush1.msra.mxu0 0.0
    %1798 = vmatprep.subr.mxu0 0.0
    %1799 = vmatpush1.msra.mxu0 0.0
    %1800 = vmatprep.subr.mxu0 0.0
    %1801 = vmatpush1.msra.mxu0 0.0
    %1802 = vmatprep.subr.mxu0 0.0
    %1803 = vmatpush1.msra.mxu0 0.0
    %1804 = vmatprep.subr.mxu0 0.0
    %1805 = vmatpush1.msra.mxu0 0.0
    %1806 = vmatprep.subr.mxu0 0.0
    %1807 = vmatpush1.msra.mxu0 0.0
    %1808 = vmatprep.subr.mxu0 0.0
    %1809 = vmatpush1.msra.mxu0 0.0
    %1810 = vmatprep.subr.mxu0 0.0
    %1811 = vmatpush1.msra.mxu0 0.0
    %1812 = vmatprep.subr.mxu0 0.0
    %1813 = vmatpush1.msra.mxu0 0.0
    %1814 = vmatprep.subr.mxu0 0.0
    %1815 = vmatpush1.msra.mxu0 0.0
    %1816 = vmatprep.subr.mxu0 0.0
    %1817 = vmatpush1.msra.mxu0 0.0
    %1818 = vmatprep.subr.mxu0 0.0
    %1819 = vmatpush1.msra.mxu0 0.0
    %1820 = vmatprep.subr.mxu0 0.0
    %1821 = vmatpush1.msra.mxu0 0.0
    %1822 = vmatprep.mubr.f32.mxu0 0.0
    %1823 = vmatmul.mubr.f32.gmra.mrb[0].mxu0 %v1740
    %v1824 = vpop.f32.mrb[0].mxu0
    %v1825 = vadd.f32 0.0, %v1824
    %v1826 = vpop.f32.mrb[0].mxu0
    %1827 = vdwg.mxu0
    %v1828 = vadd.f32 %v1739, %v1825
    %v1829 = vld [vmem:[%s12 + $0x1a] sm:$0x3]
    %s1830 = scalar_lea.vmem %s6, 1664
    %v1831 = vld [vmem:[%s1830] sm:$0xff]
    %v1832 = vld [vmem:[%s1830 + $0x8] sm:$0xff]
    %v1833 = vld [vmem:[%s1830 + $0x10] sm:$0xff]
    %v1834 = vld [vmem:[%s1830 + $0x18] sm:$0xff]
    %v1835 = vld [vmem:[%s1830 + $0x20] sm:$0xff]
    %v1836 = vld [vmem:[%s1830 + $0x28] sm:$0xff]
    %v1837 = vld [vmem:[%s1830 + $0x30] sm:$0xff]
    %v1838 = vld [vmem:[%s1830 + $0x38] sm:$0xff]
    %v1839 = vld [vmem:[%s1830 + $0x40] sm:$0xff]
    %v1840 = vld [vmem:[%s1830 + $0x48] sm:$0xff]
    %v1841 = vld [vmem:[%s1830 + $0x50] sm:$0xff]
    %v1842 = vld [vmem:[%s1830 + $0x58] sm:$0xff]
    %v1843 = vld [vmem:[%s1830 + $0x60] sm:$0xff]
    %v1844 = vld [vmem:[%s1830 + $0x68] sm:$0xff]
    %v1845 = vld [vmem:[%s1830 + $0x70] sm:$0xff]
    %v1846 = vld [vmem:[%s1830 + $0x78] sm:$0xff]
    %1847 = vmatprep.subr.mxu0 0.0
    %1848 = vmatpush1.msra.mxu0 %v1831
    %1849 = vmatprep.subr.mxu0 0.0
    %1850 = vmatpush1.msra.mxu0 %v1832
    %1851 = vmatprep.subr.mxu0 0.0
    %1852 = vmatpush1.msra.mxu0 %v1833
    %1853 = vmatprep.subr.mxu0 0.0
    %1854 = vmatpush1.msra.mxu0 %v1834
    %1855 = vmatprep.subr.mxu0 0.0
    %1856 = vmatpush1.msra.mxu0 %v1835
    %1857 = vmatprep.subr.mxu0 0.0
    %1858 = vmatpush1.msra.mxu0 %v1836
    %1859 = vmatprep.subr.mxu0 0.0
    %1860 = vmatpush1.msra.mxu0 %v1837
    %1861 = vmatprep.subr.mxu0 0.0
    %1862 = vmatpush1.msra.mxu0 %v1838
    %1863 = vmatprep.subr.mxu0 0.0
    %1864 = vmatpush1.msra.mxu0 %v1839
    %1865 = vmatprep.subr.mxu0 0.0
    %1866 = vmatpush1.msra.mxu0 %v1840
    %1867 = vmatprep.subr.mxu0 0.0
    %1868 = vmatpush1.msra.mxu0 %v1841
    %1869 = vmatprep.subr.mxu0 0.0
    %1870 = vmatpush1.msra.mxu0 %v1842
    %1871 = vmatprep.subr.mxu0 0.0
    %1872 = vmatpush1.msra.mxu0 %v1843
    %1873 = vmatprep.subr.mxu0 0.0
    %1874 = vmatpush1.msra.mxu0 %v1844
    %1875 = vmatprep.subr.mxu0 0.0
    %1876 = vmatpush1.msra.mxu0 %v1845
    %1877 = vmatprep.subr.mxu0 0.0
    %1878 = vmatpush1.msra.mxu0 %v1846
    %1879 = vmatprep.subr.mxu0 0.0
    %1880 = vmatpush1.msra.mxu0 0.0
    %1881 = vmatprep.subr.mxu0 0.0
    %1882 = vmatpush1.msra.mxu0 0.0
    %1883 = vmatprep.subr.mxu0 0.0
    %1884 = vmatpush1.msra.mxu0 0.0
    %1885 = vmatprep.subr.mxu0 0.0
    %1886 = vmatpush1.msra.mxu0 0.0
    %1887 = vmatprep.subr.mxu0 0.0
    %1888 = vmatpush1.msra.mxu0 0.0
    %1889 = vmatprep.subr.mxu0 0.0
    %1890 = vmatpush1.msra.mxu0 0.0
    %1891 = vmatprep.subr.mxu0 0.0
    %1892 = vmatpush1.msra.mxu0 0.0
    %1893 = vmatprep.subr.mxu0 0.0
    %1894 = vmatpush1.msra.mxu0 0.0
    %1895 = vmatprep.subr.mxu0 0.0
    %1896 = vmatpush1.msra.mxu0 0.0
    %1897 = vmatprep.subr.mxu0 0.0
    %1898 = vmatpush1.msra.mxu0 0.0
    %1899 = vmatprep.subr.mxu0 0.0
    %1900 = vmatpush1.msra.mxu0 0.0
    %1901 = vmatprep.subr.mxu0 0.0
    %1902 = vmatpush1.msra.mxu0 0.0
    %1903 = vmatprep.subr.mxu0 0.0
    %1904 = vmatpush1.msra.mxu0 0.0
    %1905 = vmatprep.subr.mxu0 0.0
    %1906 = vmatpush1.msra.mxu0 0.0
    %1907 = vmatprep.subr.mxu0 0.0
    %1908 = vmatpush1.msra.mxu0 0.0
    %1909 = vmatprep.subr.mxu0 0.0
    %1910 = vmatpush1.msra.mxu0 0.0
    %1911 = vmatprep.mubr.f32.mxu0 0.0
    %1912 = vmatmul.mubr.f32.gmra.mrb[0].mxu0 %v1829
    %v1913 = vpop.f32.mrb[0].mxu0
    %v1914 = vadd.f32 0.0, %v1913
    %v1915 = vpop.f32.mrb[0].mxu0
    %1916 = vdwg.mxu0
    %v1917 = vadd.f32 %v1828, %v1914
    %v1918 = vld [vmem:[%s12 + $0x1c] sm:$0x3]
    %s1919 = scalar_lea.vmem %s6, 1792
    %v1920 = vld [vmem:[%s1919] sm:$0xff]
    %v1921 = vld [vmem:[%s1919 + $0x8] sm:$0xff]
    %v1922 = vld [vmem:[%s1919 + $0x10] sm:$0xff]
    %v1923 = vld [vmem:[%s1919 + $0x18] sm:$0xff]
    %v1924 = vld [vmem:[%s1919 + $0x20] sm:$0xff]
    %v1925 = vld [vmem:[%s1919 + $0x28] sm:$0xff]
    %v1926 = vld [vmem:[%s1919 + $0x30] sm:$0xff]
    %v1927 = vld [vmem:[%s1919 + $0x38] sm:$0xff]
    %v1928 = vld [vmem:[%s1919 + $0x40] sm:$0xff]
    %v1929 = vld [vmem:[%s1919 + $0x48] sm:$0xff]
    %v1930 = vld [vmem:[%s1919 + $0x50] sm:$0xff]
    %v1931 = vld [vmem:[%s1919 + $0x58] sm:$0xff]
    %v1932 = vld [vmem:[%s1919 + $0x60] sm:$0xff]
    %v1933 = vld [vmem:[%s1919 + $0x68] sm:$0xff]
    %v1934 = vld [vmem:[%s1919 + $0x70] sm:$0xff]
    %v1935 = vld [vmem:[%s1919 + $0x78] sm:$0xff]
    %1936 = vmatprep.subr.mxu0 0.0
    %1937 = vmatpush1.msra.mxu0 %v1920
    %1938 = vmatprep.subr.mxu0 0.0
    %1939 = vmatpush1.msra.mxu0 %v1921
    %1940 = vmatprep.subr.mxu0 0.0
    %1941 = vmatpush1.msra.mxu0 %v1922
    %1942 = vmatprep.subr.mxu0 0.0
    %1943 = vmatpush1.msra.mxu0 %v1923
    %1944 = vmatprep.subr.mxu0 0.0
    %1945 = vmatpush1.msra.mxu0 %v1924
    %1946 = vmatprep.subr.mxu0 0.0
    %1947 = vmatpush1.msra.mxu0 %v1925
    %1948 = vmatprep.subr.mxu0 0.0
    %1949 = vmatpush1.msra.mxu0 %v1926
    %1950 = vmatprep.subr.mxu0 0.0
    %1951 = vmatpush1.msra.mxu0 %v1927
    %1952 = vmatprep.subr.mxu0 0.0
    %1953 = vmatpush1.msra.mxu0 %v1928
    %1954 = vmatprep.subr.mxu0 0.0
    %1955 = vmatpush1.msra.mxu0 %v1929
    %1956 = vmatprep.subr.mxu0 0.0
    %1957 = vmatpush1.msra.mxu0 %v1930
    %1958 = vmatprep.subr.mxu0 0.0
    %1959 = vmatpush1.msra.mxu0 %v1931
    %1960 = vmatprep.subr.mxu0 0.0
    %1961 = vmatpush1.msra.mxu0 %v1932
    %1962 = vmatprep.subr.mxu0 0.0
    %1963 = vmatpush1.msra.mxu0 %v1933
    %1964 = vmatprep.subr.mxu0 0.0
    %1965 = vmatpush1.msra.mxu0 %v1934
    %1966 = vmatprep.subr.mxu0 0.0
    %1967 = vmatpush1.msra.mxu0 %v1935
    %1968 = vmatprep.subr.mxu0 0.0
    %1969 = vmatpush1.msra.mxu0 0.0
    %1970 = vmatprep.subr.mxu0 0.0
    %1971 = vmatpush1.msra.mxu0 0.0
    %1972 = vmatprep.subr.mxu0 0.0
    %1973 = vmatpush1.msra.mxu0 0.0
    %1974 = vmatprep.subr.mxu0 0.0
    %1975 = vmatpush1.msra.mxu0 0.0
    %1976 = vmatprep.subr.mxu0 0.0
    %1977 = vmatpush1.msra.mxu0 0.0
    %1978 = vmatprep.subr.mxu0 0.0
    %1979 = vmatpush1.msra.mxu0 0.0
    %1980 = vmatprep.subr.mxu0 0.0
    %1981 = vmatpush1.msra.mxu0 0.0
    %1982 = vmatprep.subr.mxu0 0.0
    %1983 = vmatpush1.msra.mxu0 0.0
    %1984 = vmatprep.subr.mxu0 0.0
    %1985 = vmatpush1.msra.mxu0 0.0
    %1986 = vmatprep.subr.mxu0 0.0
    %1987 = vmatpush1.msra.mxu0 0.0
    %1988 = vmatprep.subr.mxu0 0.0
    %1989 = vmatpush1.msra.mxu0 0.0
    %1990 = vmatprep.subr.mxu0 0.0
    %1991 = vmatpush1.msra.mxu0 0.0
    %1992 = vmatprep.subr.mxu0 0.0
    %1993 = vmatpush1.msra.mxu0 0.0
    %1994 = vmatprep.subr.mxu0 0.0
    %1995 = vmatpush1.msra.mxu0 0.0
    %1996 = vmatprep.subr.mxu0 0.0
    %1997 = vmatpush1.msra.mxu0 0.0
    %1998 = vmatprep.subr.mxu0 0.0
    %1999 = vmatpush1.msra.mxu0 0.0
    %2000 = vmatprep.mubr.f32.mxu0 0.0
    %2001 = vmatmul.mubr.f32.gmra.mrb[0].mxu0 %v1918
    %v2002 = vpop.f32.mrb[0].mxu0
    %v2003 = vadd.f32 0.0, %v2002
    %v2004 = vpop.f32.mrb[0].mxu0
    %2005 = vdwg.mxu0
    %v2006 = vadd.f32 %v1917, %v2003
    %v2007 = vld [vmem:[%s12 + $0x1e] sm:$0x3]
    %s2008 = scalar_lea.vmem %s6, 1920
    %v2009 = vld [vmem:[%s2008] sm:$0xff]
    %v2010 = vld [vmem:[%s2008 + $0x8] sm:$0xff]
    %v2011 = vld [vmem:[%s2008 + $0x10] sm:$0xff]
    %v2012 = vld [vmem:[%s2008 + $0x18] sm:$0xff]
    %v2013 = vld [vmem:[%s2008 + $0x20] sm:$0xff]
    %v2014 = vld [vmem:[%s2008 + $0x28] sm:$0xff]
    %v2015 = vld [vmem:[%s2008 + $0x30] sm:$0xff]
    %v2016 = vld [vmem:[%s2008 + $0x38] sm:$0xff]
    %v2017 = vld [vmem:[%s2008 + $0x40] sm:$0xff]
    %v2018 = vld [vmem:[%s2008 + $0x48] sm:$0xff]
    %v2019 = vld [vmem:[%s2008 + $0x50] sm:$0xff]
    %v2020 = vld [vmem:[%s2008 + $0x58] sm:$0xff]
    %v2021 = vld [vmem:[%s2008 + $0x60] sm:$0xff]
    %v2022 = vld [vmem:[%s2008 + $0x68] sm:$0xff]
    %v2023 = vld [vmem:[%s2008 + $0x70] sm:$0xff]
    %v2024 = vld [vmem:[%s2008 + $0x78] sm:$0xff]
    %2025 = vmatprep.subr.mxu0 0.0
    %2026 = vmatpush1.msra.mxu0 %v2009
    %2027 = vmatprep.subr.mxu0 0.0
    %2028 = vmatpush1.msra.mxu0 %v2010
    %2029 = vmatprep.subr.mxu0 0.0
    %2030 = vmatpush1.msra.mxu0 %v2011
    %2031 = vmatprep.subr.mxu0 0.0
    %2032 = vmatpush1.msra.mxu0 %v2012
    %2033 = vmatprep.subr.mxu0 0.0
    %2034 = vmatpush1.msra.mxu0 %v2013
    %2035 = vmatprep.subr.mxu0 0.0
    %2036 = vmatpush1.msra.mxu0 %v2014
    %2037 = vmatprep.subr.mxu0 0.0
    %2038 = vmatpush1.msra.mxu0 %v2015
    %2039 = vmatprep.subr.mxu0 0.0
    %2040 = vmatpush1.msra.mxu0 %v2016
    %2041 = vmatprep.subr.mxu0 0.0
    %2042 = vmatpush1.msra.mxu0 %v2017
    %2043 = vmatprep.subr.mxu0 0.0
    %2044 = vmatpush1.msra.mxu0 %v2018
    %2045 = vmatprep.subr.mxu0 0.0
    %2046 = vmatpush1.msra.mxu0 %v2019
    %2047 = vmatprep.subr.mxu0 0.0
    %2048 = vmatpush1.msra.mxu0 %v2020
    %2049 = vmatprep.subr.mxu0 0.0
    %2050 = vmatpush1.msra.mxu0 %v2021
    %2051 = vmatprep.subr.mxu0 0.0
    %2052 = vmatpush1.msra.mxu0 %v2022
    %2053 = vmatprep.subr.mxu0 0.0
    %2054 = vmatpush1.msra.mxu0 %v2023
    %2055 = vmatprep.subr.mxu0 0.0
    %2056 = vmatpush1.msra.mxu0 %v2024
    %2057 = vmatprep.subr.mxu0 0.0
    %2058 = vmatpush1.msra.mxu0 0.0
    %2059 = vmatprep.subr.mxu0 0.0
    %2060 = vmatpush1.msra.mxu0 0.0
    %2061 = vmatprep.subr.mxu0 0.0
    %2062 = vmatpush1.msra.mxu0 0.0
    %2063 = vmatprep.subr.mxu0 0.0
    %2064 = vmatpush1.msra.mxu0 0.0
    %2065 = vmatprep.subr.mxu0 0.0
    %2066 = vmatpush1.msra.mxu0 0.0
    %2067 = vmatprep.subr.mxu0 0.0
    %2068 = vmatpush1.msra.mxu0 0.0
    %2069 = vmatprep.subr.mxu0 0.0
    %2070 = vmatpush1.msra.mxu0 0.0
    %2071 = vmatprep.subr.mxu0 0.0
    %2072 = vmatpush1.msra.mxu0 0.0
    %2073 = vmatprep.subr.mxu0 0.0
    %2074 = vmatpush1.msra.mxu0 0.0
    %2075 = vmatprep.subr.mxu0 0.0
    %2076 = vmatpush1.msra.mxu0 0.0
    %2077 = vmatprep.subr.mxu0 0.0
    %2078 = vmatpush1.msra.mxu0 0.0
    %2079 = vmatprep.subr.mxu0 0.0
    %2080 = vmatpush1.msra.mxu0 0.0
    %2081 = vmatprep.subr.mxu0 0.0
    %2082 = vmatpush1.msra.mxu0 0.0
    %2083 = vmatprep.subr.mxu0 0.0
    %2084 = vmatpush1.msra.mxu0 0.0
    %2085 = vmatprep.subr.mxu0 0.0
    %2086 = vmatpush1.msra.mxu0 0.0
    %2087 = vmatprep.subr.mxu0 0.0
    %2088 = vmatpush1.msra.mxu0 0.0
    %2089 = vmatprep.mubr.f32.mxu0 0.0
    %2090 = vmatmul.mubr.f32.gmra.mrb[0].mxu0 %v2007
    %v2091 = vpop.f32.mrb[0].mxu0
    %v2092 = vadd.f32 0.0, %v2091
    %v2093 = vpop.f32.mrb[0].mxu0
    %2094 = vdwg.mxu0
    %v2095 = vadd.f32 %v2006, %v2092
    %v2096 = vld [vmem:[%s12 + $0x20] sm:$0x3]
    %s2097 = scalar_lea.vmem %s6, 2048
    %v2098 = vld [vmem:[%s2097] sm:$0xff]
    %v2099 = vld [vmem:[%s2097 + $0x8] sm:$0xff]
    %v2100 = vld [vmem:[%s2097 + $0x10] sm:$0xff]
    %v2101 = vld [vmem:[%s2097 + $0x18] sm:$0xff]
    %v2102 = vld [vmem:[%s2097 + $0x20] sm:$0xff]
    %v2103 = vld [vmem:[%s2097 + $0x28] sm:$0xff]
    %v2104 = vld [vmem:[%s2097 + $0x30] sm:$0xff]
    %v2105 = vld [vmem:[%s2097 + $0x38] sm:$0xff]
    %v2106 = vld [vmem:[%s2097 + $0x40] sm:$0xff]
    %v2107 = vld [vmem:[%s2097 + $0x48] sm:$0xff]
    %v2108 = vld [vmem:[%s2097 + $0x50] sm:$0xff]
    %v2109 = vld [vmem:[%s2097 + $0x58] sm:$0xff]
    %v2110 = vld [vmem:[%s2097 + $0x60] sm:$0xff]
    %v2111 = vld [vmem:[%s2097 + $0x68] sm:$0xff]
    %v2112 = vld [vmem:[%s2097 + $0x70] sm:$0xff]
    %v2113 = vld [vmem:[%s2097 + $0x78] sm:$0xff]
    %2114 = vmatprep.subr.mxu0 0.0
    %2115 = vmatpush1.msra.mxu0 %v2098
    %2116 = vmatprep.subr.mxu0 0.0
    %2117 = vmatpush1.msra.mxu0 %v2099
    %2118 = vmatprep.subr.mxu0 0.0
    %2119 = vmatpush1.msra.mxu0 %v2100
    %2120 = vmatprep.subr.mxu0 0.0
    %2121 = vmatpush1.msra.mxu0 %v2101
    %2122 = vmatprep.subr.mxu0 0.0
    %2123 = vmatpush1.msra.mxu0 %v2102
    %2124 = vmatprep.subr.mxu0 0.0
    %2125 = vmatpush1.msra.mxu0 %v2103
    %2126 = vmatprep.subr.mxu0 0.0
    %2127 = vmatpush1.msra.mxu0 %v2104
    %2128 = vmatprep.subr.mxu0 0.0
    %2129 = vmatpush1.msra.mxu0 %v2105
    %2130 = vmatprep.subr.mxu0 0.0
    %2131 = vmatpush1.msra.mxu0 %v2106
    %2132 = vmatprep.subr.mxu0 0.0
    %2133 = vmatpush1.msra.mxu0 %v2107
    %2134 = vmatprep.subr.mxu0 0.0
    %2135 = vmatpush1.msra.mxu0 %v2108
    %2136 = vmatprep.subr.mxu0 0.0
    %2137 = vmatpush1.msra.mxu0 %v2109
    %2138 = vmatprep.subr.mxu0 0.0
    %2139 = vmatpush1.msra.mxu0 %v2110
    %2140 = vmatprep.subr.mxu0 0.0
    %2141 = vmatpush1.msra.mxu0 %v2111
    %2142 = vmatprep.subr.mxu0 0.0
    %2143 = vmatpush1.msra.mxu0 %v2112
    %2144 = vmatprep.subr.mxu0 0.0
    %2145 = vmatpush1.msra.mxu0 %v2113
    %2146 = vmatprep.subr.mxu0 0.0
    %2147 = vmatpush1.msra.mxu0 0.0
    %2148 = vmatprep.subr.mxu0 0.0
    %2149 = vmatpush1.msra.mxu0 0.0
    %2150 = vmatprep.subr.mxu0 0.0
    %2151 = vmatpush1.msra.mxu0 0.0
    %2152 = vmatprep.subr.mxu0 0.0
    %2153 = vmatpush1.msra.mxu0 0.0
    %2154 = vmatprep.subr.mxu0 0.0
    %2155 = vmatpush1.msra.mxu0 0.0
    %2156 = vmatprep.subr.mxu0 0.0
    %2157 = vmatpush1.msra.mxu0 0.0
    %2158 = vmatprep.subr.mxu0 0.0
    %2159 = vmatpush1.msra.mxu0 0.0
    %2160 = vmatprep.subr.mxu0 0.0
    %2161 = vmatpush1.msra.mxu0 0.0
    %2162 = vmatprep.subr.mxu0 0.0
    %2163 = vmatpush1.msra.mxu0 0.0
    %2164 = vmatprep.subr.mxu0 0.0
    %2165 = vmatpush1.msra.mxu0 0.0
    %2166 = vmatprep.subr.mxu0 0.0
    %2167 = vmatpush1.msra.mxu0 0.0
    %2168 = vmatprep.subr.mxu0 0.0
    %2169 = vmatpush1.msra.mxu0 0.0
    %2170 = vmatprep.subr.mxu0 0.0
    %2171 = vmatpush1.msra.mxu0 0.0
    %2172 = vmatprep.subr.mxu0 0.0
    %2173 = vmatpush1.msra.mxu0 0.0
    %2174 = vmatprep.subr.mxu0 0.0
    %2175 = vmatpush1.msra.mxu0 0.0
    %2176 = vmatprep.subr.mxu0 0.0
    %2177 = vmatpush1.msra.mxu0 0.0
    %2178 = vmatprep.mubr.f32.mxu0 0.0
    %2179 = vmatmul.mubr.f32.gmra.mrb[0].mxu0 %v2096
    %v2180 = vpop.f32.mrb[0].mxu0
    %v2181 = vadd.f32 0.0, %v2180
    %v2182 = vpop.f32.mrb[0].mxu0
    %2183 = vdwg.mxu0
    %v2184 = vadd.f32 %v2095, %v2181
    %v2185 = vld [vmem:[%s12 + $0x22] sm:$0x3]
    %s2186 = scalar_lea.vmem %s6, 2176
    %v2187 = vld [vmem:[%s2186] sm:$0xff]
    %v2188 = vld [vmem:[%s2186 + $0x8] sm:$0xff]
    %v2189 = vld [vmem:[%s2186 + $0x10] sm:$0xff]
    %v2190 = vld [vmem:[%s2186 + $0x18] sm:$0xff]
    %v2191 = vld [vmem:[%s2186 + $0x20] sm:$0xff]
    %v2192 = vld [vmem:[%s2186 + $0x28] sm:$0xff]
    %v2193 = vld [vmem:[%s2186 + $0x30] sm:$0xff]
    %v2194 = vld [vmem:[%s2186 + $0x38] sm:$0xff]
    %v2195 = vld [vmem:[%s2186 + $0x40] sm:$0xff]
    %v2196 = vld [vmem:[%s2186 + $0x48] sm:$0xff]
    %v2197 = vld [vmem:[%s2186 + $0x50] sm:$0xff]
    %v2198 = vld [vmem:[%s2186 + $0x58] sm:$0xff]
    %v2199 = vld [vmem:[%s2186 + $0x60] sm:$0xff]
    %v2200 = vld [vmem:[%s2186 + $0x68] sm:$0xff]
    %v2201 = vld [vmem:[%s2186 + $0x70] sm:$0xff]
    %v2202 = vld [vmem:[%s2186 + $0x78] sm:$0xff]
    %2203 = vmatprep.subr.mxu0 0.0
    %2204 = vmatpush1.msra.mxu0 %v2187
    %2205 = vmatprep.subr.mxu0 0.0
    %2206 = vmatpush1.msra.mxu0 %v2188
    %2207 = vmatprep.subr.mxu0 0.0
    %2208 = vmatpush1.msra.mxu0 %v2189
    %2209 = vmatprep.subr.mxu0 0.0
    %2210 = vmatpush1.msra.mxu0 %v2190
    %2211 = vmatprep.subr.mxu0 0.0
    %2212 = vmatpush1.msra.mxu0 %v2191
    %2213 = vmatprep.subr.mxu0 0.0
    %2214 = vmatpush1.msra.mxu0 %v2192
    %2215 = vmatprep.subr.mxu0 0.0
    %2216 = vmatpush1.msra.mxu0 %v2193
    %2217 = vmatprep.subr.mxu0 0.0
    %2218 = vmatpush1.msra.mxu0 %v2194
    %2219 = vmatprep.subr.mxu0 0.0
    %2220 = vmatpush1.msra.mxu0 %v2195
    %2221 = vmatprep.subr.mxu0 0.0
    %2222 = vmatpush1.msra.mxu0 %v2196
    %2223 = vmatprep.subr.mxu0 0.0
    %2224 = vmatpush1.msra.mxu0 %v2197
    %2225 = vmatprep.subr.mxu0 0.0
    %2226 = vmatpush1.msra.mxu0 %v2198
    %2227 = vmatprep.subr.mxu0 0.0
    %2228 = vmatpush1.msra.mxu0 %v2199
    %2229 = vmatprep.subr.mxu0 0.0
    %2230 = vmatpush1.msra.mxu0 %v2200
    %2231 = vmatprep.subr.mxu0 0.0
    %2232 = vmatpush1.msra.mxu0 %v2201
    %2233 = vmatprep.subr.mxu0 0.0
    %2234 = vmatpush1.msra.mxu0 %v2202
    %2235 = vmatprep.subr.mxu0 0.0
    %2236 = vmatpush1.msra.mxu0 0.0
    %2237 = vmatprep.subr.mxu0 0.0
    %2238 = vmatpush1.msra.mxu0 0.0
    %2239 = vmatprep.subr.mxu0 0.0
    %2240 = vmatpush1.msra.mxu0 0.0
    %2241 = vmatprep.subr.mxu0 0.0
    %2242 = vmatpush1.msra.mxu0 0.0
    %2243 = vmatprep.subr.mxu0 0.0
    %2244 = vmatpush1.msra.mxu0 0.0
    %2245 = vmatprep.subr.mxu0 0.0
    %2246 = vmatpush1.msra.mxu0 0.0
    %2247 = vmatprep.subr.mxu0 0.0
    %2248 = vmatpush1.msra.mxu0 0.0
    %2249 = vmatprep.subr.mxu0 0.0
    %2250 = vmatpush1.msra.mxu0 0.0
    %2251 = vmatprep.subr.mxu0 0.0
    %2252 = vmatpush1.msra.mxu0 0.0
    %2253 = vmatprep.subr.mxu0 0.0
    %2254 = vmatpush1.msra.mxu0 0.0
    %2255 = vmatprep.subr.mxu0 0.0
    %2256 = vmatpush1.msra.mxu0 0.0
    %2257 = vmatprep.subr.mxu0 0.0
    %2258 = vmatpush1.msra.mxu0 0.0
    %2259 = vmatprep.subr.mxu0 0.0
    %2260 = vmatpush1.msra.mxu0 0.0
    %2261 = vmatprep.subr.mxu0 0.0
    %2262 = vmatpush1.msra.mxu0 0.0
    %2263 = vmatprep.subr.mxu0 0.0
    %2264 = vmatpush1.msra.mxu0 0.0
    %2265 = vmatprep.subr.mxu0 0.0
    %2266 = vmatpush1.msra.mxu0 0.0
    %2267 = vmatprep.mubr.f32.mxu0 0.0
    %2268 = vmatmul.mubr.f32.gmra.mrb[0].mxu0 %v2185
    %v2269 = vpop.f32.mrb[0].mxu0
    %v2270 = vadd.f32 0.0, %v2269
    %v2271 = vpop.f32.mrb[0].mxu0
    %2272 = vdwg.mxu0
    %v2273 = vadd.f32 %v2184, %v2270
    %v2274 = vld [vmem:[%s12 + $0x24] sm:$0x3]
    %s2275 = scalar_lea.vmem %s6, 2304
    %v2276 = vld [vmem:[%s2275] sm:$0xff]
    %v2277 = vld [vmem:[%s2275 + $0x8] sm:$0xff]
    %v2278 = vld [vmem:[%s2275 + $0x10] sm:$0xff]
    %v2279 = vld [vmem:[%s2275 + $0x18] sm:$0xff]
    %v2280 = vld [vmem:[%s2275 + $0x20] sm:$0xff]
    %v2281 = vld [vmem:[%s2275 + $0x28] sm:$0xff]
    %v2282 = vld [vmem:[%s2275 + $0x30] sm:$0xff]
    %v2283 = vld [vmem:[%s2275 + $0x38] sm:$0xff]
    %v2284 = vld [vmem:[%s2275 + $0x40] sm:$0xff]
    %v2285 = vld [vmem:[%s2275 + $0x48] sm:$0xff]
    %v2286 = vld [vmem:[%s2275 + $0x50] sm:$0xff]
    %v2287 = vld [vmem:[%s2275 + $0x58] sm:$0xff]
    %v2288 = vld [vmem:[%s2275 + $0x60] sm:$0xff]
    %v2289 = vld [vmem:[%s2275 + $0x68] sm:$0xff]
    %v2290 = vld [vmem:[%s2275 + $0x70] sm:$0xff]
    %v2291 = vld [vmem:[%s2275 + $0x78] sm:$0xff]
    %2292 = vmatprep.subr.mxu0 0.0
    %2293 = vmatpush1.msra.mxu0 %v2276
    %2294 = vmatprep.subr.mxu0 0.0
    %2295 = vmatpush1.msra.mxu0 %v2277
    %2296 = vmatprep.subr.mxu0 0.0
    %2297 = vmatpush1.msra.mxu0 %v2278
    %2298 = vmatprep.subr.mxu0 0.0
    %2299 = vmatpush1.msra.mxu0 %v2279
    %2300 = vmatprep.subr.mxu0 0.0
    %2301 = vmatpush1.msra.mxu0 %v2280
    %2302 = vmatprep.subr.mxu0 0.0
    %2303 = vmatpush1.msra.mxu0 %v2281
    %2304 = vmatprep.subr.mxu0 0.0
    %2305 = vmatpush1.msra.mxu0 %v2282
    %2306 = vmatprep.subr.mxu0 0.0
    %2307 = vmatpush1.msra.mxu0 %v2283
    %2308 = vmatprep.subr.mxu0 0.0
    %2309 = vmatpush1.msra.mxu0 %v2284
    %2310 = vmatprep.subr.mxu0 0.0
    %2311 = vmatpush1.msra.mxu0 %v2285
    %2312 = vmatprep.subr.mxu0 0.0
    %2313 = vmatpush1.msra.mxu0 %v2286
    %2314 = vmatprep.subr.mxu0 0.0
    %2315 = vmatpush1.msra.mxu0 %v2287
    %2316 = vmatprep.subr.mxu0 0.0
    %2317 = vmatpush1.msra.mxu0 %v2288
    %2318 = vmatprep.subr.mxu0 0.0
    %2319 = vmatpush1.msra.mxu0 %v2289
    %2320 = vmatprep.subr.mxu0 0.0
    %2321 = vmatpush1.msra.mxu0 %v2290
    %2322 = vmatprep.subr.mxu0 0.0
    %2323 = vmatpush1.msra.mxu0 %v2291
    %2324 = vmatprep.subr.mxu0 0.0
    %2325 = vmatpush1.msra.mxu0 0.0
    %2326 = vmatprep.subr.mxu0 0.0
    %2327 = vmatpush1.msra.mxu0 0.0
    %2328 = vmatprep.subr.mxu0 0.0
    %2329 = vmatpush1.msra.mxu0 0.0
    %2330 = vmatprep.subr.mxu0 0.0
    %2331 = vmatpush1.msra.mxu0 0.0
    %2332 = vmatprep.subr.mxu0 0.0
    %2333 = vmatpush1.msra.mxu0 0.0
    %2334 = vmatprep.subr.mxu0 0.0
    %2335 = vmatpush1.msra.mxu0 0.0
    %2336 = vmatprep.subr.mxu0 0.0
    %2337 = vmatpush1.msra.mxu0 0.0
    %2338 = vmatprep.subr.mxu0 0.0
    %2339 = vmatpush1.msra.mxu0 0.0
    %2340 = vmatprep.subr.mxu0 0.0
    %2341 = vmatpush1.msra.mxu0 0.0
    %2342 = vmatprep.subr.mxu0 0.0
    %2343 = vmatpush1.msra.mxu0 0.0
    %2344 = vmatprep.subr.mxu0 0.0
    %2345 = vmatpush1.msra.mxu0 0.0
    %2346 = vmatprep.subr.mxu0 0.0
    %2347 = vmatpush1.msra.mxu0 0.0
    %2348 = vmatprep.subr.mxu0 0.0
    %2349 = vmatpush1.msra.mxu0 0.0
    %2350 = vmatprep.subr.mxu0 0.0
    %2351 = vmatpush1.msra.mxu0 0.0
    %2352 = vmatprep.subr.mxu0 0.0
    %2353 = vmatpush1.msra.mxu0 0.0
    %2354 = vmatprep.subr.mxu0 0.0
    %2355 = vmatpush1.msra.mxu0 0.0
    %2356 = vmatprep.mubr.f32.mxu0 0.0
    %2357 = vmatmul.mubr.f32.gmra.mrb[0].mxu0 %v2274
    %v2358 = vpop.f32.mrb[0].mxu0
    %v2359 = vadd.f32 0.0, %v2358
    %v2360 = vpop.f32.mrb[0].mxu0
    %2361 = vdwg.mxu0
    %v2362 = vadd.f32 %v2273, %v2359
    %v2363 = vld [vmem:[%s12 + $0x26] sm:$0x3]
    %s2364 = scalar_lea.vmem %s6, 2432
    %v2365 = vld [vmem:[%s2364] sm:$0xff]
    %v2366 = vld [vmem:[%s2364 + $0x8] sm:$0xff]
    %v2367 = vld [vmem:[%s2364 + $0x10] sm:$0xff]
    %v2368 = vld [vmem:[%s2364 + $0x18] sm:$0xff]
    %v2369 = vld [vmem:[%s2364 + $0x20] sm:$0xff]
    %v2370 = vld [vmem:[%s2364 + $0x28] sm:$0xff]
    %v2371 = vld [vmem:[%s2364 + $0x30] sm:$0xff]
    %v2372 = vld [vmem:[%s2364 + $0x38] sm:$0xff]
    %v2373 = vld [vmem:[%s2364 + $0x40] sm:$0xff]
    %v2374 = vld [vmem:[%s2364 + $0x48] sm:$0xff]
    %v2375 = vld [vmem:[%s2364 + $0x50] sm:$0xff]
    %v2376 = vld [vmem:[%s2364 + $0x58] sm:$0xff]
    %v2377 = vld [vmem:[%s2364 + $0x60] sm:$0xff]
    %v2378 = vld [vmem:[%s2364 + $0x68] sm:$0xff]
    %v2379 = vld [vmem:[%s2364 + $0x70] sm:$0xff]
    %v2380 = vld [vmem:[%s2364 + $0x78] sm:$0xff]
    %2381 = vmatprep.subr.mxu0 0.0
    %2382 = vmatpush1.msra.mxu0 %v2365
    %2383 = vmatprep.subr.mxu0 0.0
    %2384 = vmatpush1.msra.mxu0 %v2366
    %2385 = vmatprep.subr.mxu0 0.0
    %2386 = vmatpush1.msra.mxu0 %v2367
    %2387 = vmatprep.subr.mxu0 0.0
    %2388 = vmatpush1.msra.mxu0 %v2368
    %2389 = vmatprep.subr.mxu0 0.0
    %2390 = vmatpush1.msra.mxu0 %v2369
    %2391 = vmatprep.subr.mxu0 0.0
    %2392 = vmatpush1.msra.mxu0 %v2370
    %2393 = vmatprep.subr.mxu0 0.0
    %2394 = vmatpush1.msra.mxu0 %v2371
    %2395 = vmatprep.subr.mxu0 0.0
    %2396 = vmatpush1.msra.mxu0 %v2372
    %2397 = vmatprep.subr.mxu0 0.0
    %2398 = vmatpush1.msra.mxu0 %v2373
    %2399 = vmatprep.subr.mxu0 0.0
    %2400 = vmatpush1.msra.mxu0 %v2374
    %2401 = vmatprep.subr.mxu0 0.0
    %2402 = vmatpush1.msra.mxu0 %v2375
    %2403 = vmatprep.subr.mxu0 0.0
    %2404 = vmatpush1.msra.mxu0 %v2376
    %2405 = vmatprep.subr.mxu0 0.0
    %2406 = vmatpush1.msra.mxu0 %v2377
    %2407 = vmatprep.subr.mxu0 0.0
    %2408 = vmatpush1.msra.mxu0 %v2378
    %2409 = vmatprep.subr.mxu0 0.0
    %2410 = vmatpush1.msra.mxu0 %v2379
    %2411 = vmatprep.subr.mxu0 0.0
    %2412 = vmatpush1.msra.mxu0 %v2380
    %2413 = vmatprep.subr.mxu0 0.0
    %2414 = vmatpush1.msra.mxu0 0.0
    %2415 = vmatprep.subr.mxu0 0.0
    %2416 = vmatpush1.msra.mxu0 0.0
    %2417 = vmatprep.subr.mxu0 0.0
    %2418 = vmatpush1.msra.mxu0 0.0
    %2419 = vmatprep.subr.mxu0 0.0
    %2420 = vmatpush1.msra.mxu0 0.0
    %2421 = vmatprep.subr.mxu0 0.0
    %2422 = vmatpush1.msra.mxu0 0.0
    %2423 = vmatprep.subr.mxu0 0.0
    %2424 = vmatpush1.msra.mxu0 0.0
    %2425 = vmatprep.subr.mxu0 0.0
    %2426 = vmatpush1.msra.mxu0 0.0
    %2427 = vmatprep.subr.mxu0 0.0
    %2428 = vmatpush1.msra.mxu0 0.0
    %2429 = vmatprep.subr.mxu0 0.0
    %2430 = vmatpush1.msra.mxu0 0.0
    %2431 = vmatprep.subr.mxu0 0.0
    %2432 = vmatpush1.msra.mxu0 0.0
    %2433 = vmatprep.subr.mxu0 0.0
    %2434 = vmatpush1.msra.mxu0 0.0
    %2435 = vmatprep.subr.mxu0 0.0
    %2436 = vmatpush1.msra.mxu0 0.0
    %2437 = vmatprep.subr.mxu0 0.0
    %2438 = vmatpush1.msra.mxu0 0.0
    %2439 = vmatprep.subr.mxu0 0.0
    %2440 = vmatpush1.msra.mxu0 0.0
    %2441 = vmatprep.subr.mxu0 0.0
    %2442 = vmatpush1.msra.mxu0 0.0
    %2443 = vmatprep.subr.mxu0 0.0
    %2444 = vmatpush1.msra.mxu0 0.0
    %2445 = vmatprep.mubr.f32.mxu0 0.0
    %2446 = vmatmul.mubr.f32.gmra.mrb[0].mxu0 %v2363
    %v2447 = vpop.f32.mrb[0].mxu0
    %v2448 = vadd.f32 0.0, %v2447
    %v2449 = vpop.f32.mrb[0].mxu0
    %2450 = vdwg.mxu0
    %v2451 = vadd.f32 %v2362, %v2448
    %v2452 = vld [vmem:[%s12 + $0x28] sm:$0x3]
    %s2453 = scalar_lea.vmem %s6, 2560
    %v2454 = vld [vmem:[%s2453] sm:$0xff]
    %v2455 = vld [vmem:[%s2453 + $0x8] sm:$0xff]
    %v2456 = vld [vmem:[%s2453 + $0x10] sm:$0xff]
    %v2457 = vld [vmem:[%s2453 + $0x18] sm:$0xff]
    %v2458 = vld [vmem:[%s2453 + $0x20] sm:$0xff]
    %v2459 = vld [vmem:[%s2453 + $0x28] sm:$0xff]
    %v2460 = vld [vmem:[%s2453 + $0x30] sm:$0xff]
    %v2461 = vld [vmem:[%s2453 + $0x38] sm:$0xff]
    %v2462 = vld [vmem:[%s2453 + $0x40] sm:$0xff]
    %v2463 = vld [vmem:[%s2453 + $0x48] sm:$0xff]
    %v2464 = vld [vmem:[%s2453 + $0x50] sm:$0xff]
    %v2465 = vld [vmem:[%s2453 + $0x58] sm:$0xff]
    %v2466 = vld [vmem:[%s2453 + $0x60] sm:$0xff]
    %v2467 = vld [vmem:[%s2453 + $0x68] sm:$0xff]
    %v2468 = vld [vmem:[%s2453 + $0x70] sm:$0xff]
    %v2469 = vld [vmem:[%s2453 + $0x78] sm:$0xff]
    %2470 = vmatprep.subr.mxu0 0.0
    %2471 = vmatpush1.msra.mxu0 %v2454
    %2472 = vmatprep.subr.mxu0 0.0
    %2473 = vmatpush1.msra.mxu0 %v2455
    %2474 = vmatprep.subr.mxu0 0.0
    %2475 = vmatpush1.msra.mxu0 %v2456
    %2476 = vmatprep.subr.mxu0 0.0
    %2477 = vmatpush1.msra.mxu0 %v2457
    %2478 = vmatprep.subr.mxu0 0.0
    %2479 = vmatpush1.msra.mxu0 %v2458
    %2480 = vmatprep.subr.mxu0 0.0
    %2481 = vmatpush1.msra.mxu0 %v2459
    %2482 = vmatprep.subr.mxu0 0.0
    %2483 = vmatpush1.msra.mxu0 %v2460
    %2484 = vmatprep.subr.mxu0 0.0
    %2485 = vmatpush1.msra.mxu0 %v2461
    %2486 = vmatprep.subr.mxu0 0.0
    %2487 = vmatpush1.msra.mxu0 %v2462
    %2488 = vmatprep.subr.mxu0 0.0
    %2489 = vmatpush1.msra.mxu0 %v2463
    %2490 = vmatprep.subr.mxu0 0.0
    %2491 = vmatpush1.msra.mxu0 %v2464
    %2492 = vmatprep.subr.mxu0 0.0
    %2493 = vmatpush1.msra.mxu0 %v2465
    %2494 = vmatprep.subr.mxu0 0.0
    %2495 = vmatpush1.msra.mxu0 %v2466
    %2496 = vmatprep.subr.mxu0 0.0
    %2497 = vmatpush1.msra.mxu0 %v2467
    %2498 = vmatprep.subr.mxu0 0.0
    %2499 = vmatpush1.msra.mxu0 %v2468
    %2500 = vmatprep.subr.mxu0 0.0
    %2501 = vmatpush1.msra.mxu0 %v2469
    %2502 = vmatprep.subr.mxu0 0.0
    %2503 = vmatpush1.msra.mxu0 0.0
    %2504 = vmatprep.subr.mxu0 0.0
    %2505 = vmatpush1.msra.mxu0 0.0
    %2506 = vmatprep.subr.mxu0 0.0
    %2507 = vmatpush1.msra.mxu0 0.0
    %2508 = vmatprep.subr.mxu0 0.0
    %2509 = vmatpush1.msra.mxu0 0.0
    %2510 = vmatprep.subr.mxu0 0.0
    %2511 = vmatpush1.msra.mxu0 0.0
    %2512 = vmatprep.subr.mxu0 0.0
    %2513 = vmatpush1.msra.mxu0 0.0
    %2514 = vmatprep.subr.mxu0 0.0
    %2515 = vmatpush1.msra.mxu0 0.0
    %2516 = vmatprep.subr.mxu0 0.0
    %2517 = vmatpush1.msra.mxu0 0.0
    %2518 = vmatprep.subr.mxu0 0.0
    %2519 = vmatpush1.msra.mxu0 0.0
    %2520 = vmatprep.subr.mxu0 0.0
    %2521 = vmatpush1.msra.mxu0 0.0
    %2522 = vmatprep.subr.mxu0 0.0
    %2523 = vmatpush1.msra.mxu0 0.0
    %2524 = vmatprep.subr.mxu0 0.0
    %2525 = vmatpush1.msra.mxu0 0.0
    %2526 = vmatprep.subr.mxu0 0.0
    %2527 = vmatpush1.msra.mxu0 0.0
    %2528 = vmatprep.subr.mxu0 0.0
    %2529 = vmatpush1.msra.mxu0 0.0
    %2530 = vmatprep.subr.mxu0 0.0
    %2531 = vmatpush1.msra.mxu0 0.0
    %2532 = vmatprep.subr.mxu0 0.0
    %2533 = vmatpush1.msra.mxu0 0.0
    %2534 = vmatprep.mubr.f32.mxu0 0.0
    %2535 = vmatmul.mubr.f32.gmra.mrb[0].mxu0 %v2452
    %v2536 = vpop.f32.mrb[0].mxu0
    %v2537 = vadd.f32 0.0, %v2536
    %v2538 = vpop.f32.mrb[0].mxu0
    %2539 = vdwg.mxu0
    %v2540 = vadd.f32 %v2451, %v2537
    %v2541 = vld [vmem:[%s12 + $0x2a] sm:$0x3]
    %s2542 = scalar_lea.vmem %s6, 2688
    %v2543 = vld [vmem:[%s2542] sm:$0xff]
    %v2544 = vld [vmem:[%s2542 + $0x8] sm:$0xff]
    %v2545 = vld [vmem:[%s2542 + $0x10] sm:$0xff]
    %v2546 = vld [vmem:[%s2542 + $0x18] sm:$0xff]
    %v2547 = vld [vmem:[%s2542 + $0x20] sm:$0xff]
    %v2548 = vld [vmem:[%s2542 + $0x28] sm:$0xff]
    %v2549 = vld [vmem:[%s2542 + $0x30] sm:$0xff]
    %v2550 = vld [vmem:[%s2542 + $0x38] sm:$0xff]
    %v2551 = vld [vmem:[%s2542 + $0x40] sm:$0xff]
    %v2552 = vld [vmem:[%s2542 + $0x48] sm:$0xff]
    %v2553 = vld [vmem:[%s2542 + $0x50] sm:$0xff]
    %v2554 = vld [vmem:[%s2542 + $0x58] sm:$0xff]
    %v2555 = vld [vmem:[%s2542 + $0x60] sm:$0xff]
    %v2556 = vld [vmem:[%s2542 + $0x68] sm:$0xff]
    %v2557 = vld [vmem:[%s2542 + $0x70] sm:$0xff]
    %v2558 = vld [vmem:[%s2542 + $0x78] sm:$0xff]
    %2559 = vmatprep.subr.mxu0 0.0
    %2560 = vmatpush1.msra.mxu0 %v2543
    %2561 = vmatprep.subr.mxu0 0.0
    %2562 = vmatpush1.msra.mxu0 %v2544
    %2563 = vmatprep.subr.mxu0 0.0
    %2564 = vmatpush1.msra.mxu0 %v2545
    %2565 = vmatprep.subr.mxu0 0.0
    %2566 = vmatpush1.msra.mxu0 %v2546
    %2567 = vmatprep.subr.mxu0 0.0
    %2568 = vmatpush1.msra.mxu0 %v2547
    %2569 = vmatprep.subr.mxu0 0.0
    %2570 = vmatpush1.msra.mxu0 %v2548
    %2571 = vmatprep.subr.mxu0 0.0
    %2572 = vmatpush1.msra.mxu0 %v2549
    %2573 = vmatprep.subr.mxu0 0.0
    %2574 = vmatpush1.msra.mxu0 %v2550
    %2575 = vmatprep.subr.mxu0 0.0
    %2576 = vmatpush1.msra.mxu0 %v2551
    %2577 = vmatprep.subr.mxu0 0.0
    %2578 = vmatpush1.msra.mxu0 %v2552
    %2579 = vmatprep.subr.mxu0 0.0
    %2580 = vmatpush1.msra.mxu0 %v2553
    %2581 = vmatprep.subr.mxu0 0.0
    %2582 = vmatpush1.msra.mxu0 %v2554
    %2583 = vmatprep.subr.mxu0 0.0
    %2584 = vmatpush1.msra.mxu0 %v2555
    %2585 = vmatprep.subr.mxu0 0.0
    %2586 = vmatpush1.msra.mxu0 %v2556
    %2587 = vmatprep.subr.mxu0 0.0
    %2588 = vmatpush1.msra.mxu0 %v2557
    %2589 = vmatprep.subr.mxu0 0.0
    %2590 = vmatpush1.msra.mxu0 %v2558
    %2591 = vmatprep.subr.mxu0 0.0
    %2592 = vmatpush1.msra.mxu0 0.0
    %2593 = vmatprep.subr.mxu0 0.0
    %2594 = vmatpush1.msra.mxu0 0.0
    %2595 = vmatprep.subr.mxu0 0.0
    %2596 = vmatpush1.msra.mxu0 0.0
    %2597 = vmatprep.subr.mxu0 0.0
    %2598 = vmatpush1.msra.mxu0 0.0
    %2599 = vmatprep.subr.mxu0 0.0
    %2600 = vmatpush1.msra.mxu0 0.0
    %2601 = vmatprep.subr.mxu0 0.0
    %2602 = vmatpush1.msra.mxu0 0.0
    %2603 = vmatprep.subr.mxu0 0.0
    %2604 = vmatpush1.msra.mxu0 0.0
    %2605 = vmatprep.subr.mxu0 0.0
    %2606 = vmatpush1.msra.mxu0 0.0
    %2607 = vmatprep.subr.mxu0 0.0
    %2608 = vmatpush1.msra.mxu0 0.0
    %2609 = vmatprep.subr.mxu0 0.0
    %2610 = vmatpush1.msra.mxu0 0.0
    %2611 = vmatprep.subr.mxu0 0.0
    %2612 = vmatpush1.msra.mxu0 0.0
    %2613 = vmatprep.subr.mxu0 0.0
    %2614 = vmatpush1.msra.mxu0 0.0
    %2615 = vmatprep.subr.mxu0 0.0
    %2616 = vmatpush1.msra.mxu0 0.0
    %2617 = vmatprep.subr.mxu0 0.0
    %2618 = vmatpush1.msra.mxu0 0.0
    %2619 = vmatprep.subr.mxu0 0.0
    %2620 = vmatpush1.msra.mxu0 0.0
    %2621 = vmatprep.subr.mxu0 0.0
    %2622 = vmatpush1.msra.mxu0 0.0
    %2623 = vmatprep.mubr.f32.mxu0 0.0
    %2624 = vmatmul.mubr.f32.gmra.mrb[0].mxu0 %v2541
    %v2625 = vpop.f32.mrb[0].mxu0
    %v2626 = vadd.f32 0.0, %v2625
    %v2627 = vpop.f32.mrb[0].mxu0
    %2628 = vdwg.mxu0
    %v2629 = vadd.f32 %v2540, %v2626
    %v2630 = vld [vmem:[%s12 + $0x2c] sm:$0x3]
    %s2631 = scalar_lea.vmem %s6, 2816
    %v2632 = vld [vmem:[%s2631] sm:$0xff]
    %v2633 = vld [vmem:[%s2631 + $0x8] sm:$0xff]
    %v2634 = vld [vmem:[%s2631 + $0x10] sm:$0xff]
    %v2635 = vld [vmem:[%s2631 + $0x18] sm:$0xff]
    %v2636 = vld [vmem:[%s2631 + $0x20] sm:$0xff]
    %v2637 = vld [vmem:[%s2631 + $0x28] sm:$0xff]
    %v2638 = vld [vmem:[%s2631 + $0x30] sm:$0xff]
    %v2639 = vld [vmem:[%s2631 + $0x38] sm:$0xff]
    %v2640 = vld [vmem:[%s2631 + $0x40] sm:$0xff]
    %v2641 = vld [vmem:[%s2631 + $0x48] sm:$0xff]
    %v2642 = vld [vmem:[%s2631 + $0x50] sm:$0xff]
    %v2643 = vld [vmem:[%s2631 + $0x58] sm:$0xff]
    %v2644 = vld [vmem:[%s2631 + $0x60] sm:$0xff]
    %v2645 = vld [vmem:[%s2631 + $0x68] sm:$0xff]
    %v2646 = vld [vmem:[%s2631 + $0x70] sm:$0xff]
    %v2647 = vld [vmem:[%s2631 + $0x78] sm:$0xff]
    %2648 = vmatprep.subr.mxu0 0.0
    %2649 = vmatpush1.msra.mxu0 %v2632
    %2650 = vmatprep.subr.mxu0 0.0
    %2651 = vmatpush1.msra.mxu0 %v2633
    %2652 = vmatprep.subr.mxu0 0.0
    %2653 = vmatpush1.msra.mxu0 %v2634
    %2654 = vmatprep.subr.mxu0 0.0
    %2655 = vmatpush1.msra.mxu0 %v2635
    %2656 = vmatprep.subr.mxu0 0.0
    %2657 = vmatpush1.msra.mxu0 %v2636
    %2658 = vmatprep.subr.mxu0 0.0
    %2659 = vmatpush1.msra.mxu0 %v2637
    %2660 = vmatprep.subr.mxu0 0.0
    %2661 = vmatpush1.msra.mxu0 %v2638
    %2662 = vmatprep.subr.mxu0 0.0
    %2663 = vmatpush1.msra.mxu0 %v2639
    %2664 = vmatprep.subr.mxu0 0.0
    %2665 = vmatpush1.msra.mxu0 %v2640
    %2666 = vmatprep.subr.mxu0 0.0
    %2667 = vmatpush1.msra.mxu0 %v2641
    %2668 = vmatprep.subr.mxu0 0.0
    %2669 = vmatpush1.msra.mxu0 %v2642
    %2670 = vmatprep.subr.mxu0 0.0
    %2671 = vmatpush1.msra.mxu0 %v2643
    %2672 = vmatprep.subr.mxu0 0.0
    %2673 = vmatpush1.msra.mxu0 %v2644
    %2674 = vmatprep.subr.mxu0 0.0
    %2675 = vmatpush1.msra.mxu0 %v2645
    %2676 = vmatprep.subr.mxu0 0.0
    %2677 = vmatpush1.msra.mxu0 %v2646
    %2678 = vmatprep.subr.mxu0 0.0
    %2679 = vmatpush1.msra.mxu0 %v2647
    %2680 = vmatprep.subr.mxu0 0.0
    %2681 = vmatpush1.msra.mxu0 0.0
    %2682 = vmatprep.subr.mxu0 0.0
    %2683 = vmatpush1.msra.mxu0 0.0
    %2684 = vmatprep.subr.mxu0 0.0
    %2685 = vmatpush1.msra.mxu0 0.0
    %2686 = vmatprep.subr.mxu0 0.0
    %2687 = vmatpush1.msra.mxu0 0.0
    %2688 = vmatprep.subr.mxu0 0.0
    %2689 = vmatpush1.msra.mxu0 0.0
    %2690 = vmatprep.subr.mxu0 0.0
    %2691 = vmatpush1.msra.mxu0 0.0
    %2692 = vmatprep.subr.mxu0 0.0
    %2693 = vmatpush1.msra.mxu0 0.0
    %2694 = vmatprep.subr.mxu0 0.0
    %2695 = vmatpush1.msra.mxu0 0.0
    %2696 = vmatprep.subr.mxu0 0.0
    %2697 = vmatpush1.msra.mxu0 0.0
    %2698 = vmatprep.subr.mxu0 0.0
    %2699 = vmatpush1.msra.mxu0 0.0
    %2700 = vmatprep.subr.mxu0 0.0
    %2701 = vmatpush1.msra.mxu0 0.0
    %2702 = vmatprep.subr.mxu0 0.0
    %2703 = vmatpush1.msra.mxu0 0.0
    %2704 = vmatprep.subr.mxu0 0.0
    %2705 = vmatpush1.msra.mxu0 0.0
    %2706 = vmatprep.subr.mxu0 0.0
    %2707 = vmatpush1.msra.mxu0 0.0
    %2708 = vmatprep.subr.mxu0 0.0
    %2709 = vmatpush1.msra.mxu0 0.0
    %2710 = vmatprep.subr.mxu0 0.0
    %2711 = vmatpush1.msra.mxu0 0.0
    %2712 = vmatprep.mubr.f32.mxu0 0.0
    %2713 = vmatmul.mubr.f32.gmra.mrb[0].mxu0 %v2630
    %v2714 = vpop.f32.mrb[0].mxu0
    %v2715 = vadd.f32 0.0, %v2714
    %v2716 = vpop.f32.mrb[0].mxu0
    %2717 = vdwg.mxu0
    %v2718 = vadd.f32 %v2629, %v2715
    %v2719 = vld [vmem:[%s12 + $0x2e] sm:$0x3]
    %s2720 = scalar_lea.vmem %s6, 2944
    %v2721 = vld [vmem:[%s2720] sm:$0xff]
    %v2722 = vld [vmem:[%s2720 + $0x8] sm:$0xff]
    %v2723 = vld [vmem:[%s2720 + $0x10] sm:$0xff]
    %v2724 = vld [vmem:[%s2720 + $0x18] sm:$0xff]
    %v2725 = vld [vmem:[%s2720 + $0x20] sm:$0xff]
    %v2726 = vld [vmem:[%s2720 + $0x28] sm:$0xff]
    %v2727 = vld [vmem:[%s2720 + $0x30] sm:$0xff]
    %v2728 = vld [vmem:[%s2720 + $0x38] sm:$0xff]
    %v2729 = vld [vmem:[%s2720 + $0x40] sm:$0xff]
    %v2730 = vld [vmem:[%s2720 + $0x48] sm:$0xff]
    %v2731 = vld [vmem:[%s2720 + $0x50] sm:$0xff]
    %v2732 = vld [vmem:[%s2720 + $0x58] sm:$0xff]
    %v2733 = vld [vmem:[%s2720 + $0x60] sm:$0xff]
    %v2734 = vld [vmem:[%s2720 + $0x68] sm:$0xff]
    %v2735 = vld [vmem:[%s2720 + $0x70] sm:$0xff]
    %v2736 = vld [vmem:[%s2720 + $0x78] sm:$0xff]
    %2737 = vmatprep.subr.mxu0 0.0
    %2738 = vmatpush1.msra.mxu0 %v2721
    %2739 = vmatprep.subr.mxu0 0.0
    %2740 = vmatpush1.msra.mxu0 %v2722
    %2741 = vmatprep.subr.mxu0 0.0
    %2742 = vmatpush1.msra.mxu0 %v2723
    %2743 = vmatprep.subr.mxu0 0.0
    %2744 = vmatpush1.msra.mxu0 %v2724
    %2745 = vmatprep.subr.mxu0 0.0
    %2746 = vmatpush1.msra.mxu0 %v2725
    %2747 = vmatprep.subr.mxu0 0.0
    %2748 = vmatpush1.msra.mxu0 %v2726
    %2749 = vmatprep.subr.mxu0 0.0
    %2750 = vmatpush1.msra.mxu0 %v2727
    %2751 = vmatprep.subr.mxu0 0.0
    %2752 = vmatpush1.msra.mxu0 %v2728
    %2753 = vmatprep.subr.mxu0 0.0
    %2754 = vmatpush1.msra.mxu0 %v2729
    %2755 = vmatprep.subr.mxu0 0.0
    %2756 = vmatpush1.msra.mxu0 %v2730
    %2757 = vmatprep.subr.mxu0 0.0
    %2758 = vmatpush1.msra.mxu0 %v2731
    %2759 = vmatprep.subr.mxu0 0.0
    %2760 = vmatpush1.msra.mxu0 %v2732
    %2761 = vmatprep.subr.mxu0 0.0
    %2762 = vmatpush1.msra.mxu0 %v2733
    %2763 = vmatprep.subr.mxu0 0.0
    %2764 = vmatpush1.msra.mxu0 %v2734
    %2765 = vmatprep.subr.mxu0 0.0
    %2766 = vmatpush1.msra.mxu0 %v2735
    %2767 = vmatprep.subr.mxu0 0.0
    %2768 = vmatpush1.msra.mxu0 %v2736
    %2769 = vmatprep.subr.mxu0 0.0
    %2770 = vmatpush1.msra.mxu0 0.0
    %2771 = vmatprep.subr.mxu0 0.0
    %2772 = vmatpush1.msra.mxu0 0.0
    %2773 = vmatprep.subr.mxu0 0.0
    %2774 = vmatpush1.msra.mxu0 0.0
    %2775 = vmatprep.subr.mxu0 0.0
    %2776 = vmatpush1.msra.mxu0 0.0
    %2777 = vmatprep.subr.mxu0 0.0
    %2778 = vmatpush1.msra.mxu0 0.0
    %2779 = vmatprep.subr.mxu0 0.0
    %2780 = vmatpush1.msra.mxu0 0.0
    %2781 = vmatprep.subr.mxu0 0.0
    %2782 = vmatpush1.msra.mxu0 0.0
    %2783 = vmatprep.subr.mxu0 0.0
    %2784 = vmatpush1.msra.mxu0 0.0
    %2785 = vmatprep.subr.mxu0 0.0
    %2786 = vmatpush1.msra.mxu0 0.0
    %2787 = vmatprep.subr.mxu0 0.0
    %2788 = vmatpush1.msra.mxu0 0.0
    %2789 = vmatprep.subr.mxu0 0.0
    %2790 = vmatpush1.msra.mxu0 0.0
    %2791 = vmatprep.subr.mxu0 0.0
    %2792 = vmatpush1.msra.mxu0 0.0
    %2793 = vmatprep.subr.mxu0 0.0
    %2794 = vmatpush1.msra.mxu0 0.0
    %2795 = vmatprep.subr.mxu0 0.0
    %2796 = vmatpush1.msra.mxu0 0.0
    %2797 = vmatprep.subr.mxu0 0.0
    %2798 = vmatpush1.msra.mxu0 0.0
    %2799 = vmatprep.subr.mxu0 0.0
    %2800 = vmatpush1.msra.mxu0 0.0
    %2801 = vmatprep.mubr.f32.mxu0 0.0
    %2802 = vmatmul.mubr.f32.gmra.mrb[0].mxu0 %v2719
    %v2803 = vpop.f32.mrb[0].mxu0
    %v2804 = vadd.f32 0.0, %v2803
    %v2805 = vpop.f32.mrb[0].mxu0
    %2806 = vdwg.mxu0
    %v2807 = vadd.f32 %v2718, %v2804
    %v2808 = vld [vmem:[%s12 + $0x30] sm:$0x3]
    %s2809 = scalar_lea.vmem %s6, 3072
    %v2810 = vld [vmem:[%s2809] sm:$0xff]
    %v2811 = vld [vmem:[%s2809 + $0x8] sm:$0xff]
    %v2812 = vld [vmem:[%s2809 + $0x10] sm:$0xff]
    %v2813 = vld [vmem:[%s2809 + $0x18] sm:$0xff]
    %v2814 = vld [vmem:[%s2809 + $0x20] sm:$0xff]
    %v2815 = vld [vmem:[%s2809 + $0x28] sm:$0xff]
    %v2816 = vld [vmem:[%s2809 + $0x30] sm:$0xff]
    %v2817 = vld [vmem:[%s2809 + $0x38] sm:$0xff]
    %v2818 = vld [vmem:[%s2809 + $0x40] sm:$0xff]
    %v2819 = vld [vmem:[%s2809 + $0x48] sm:$0xff]
    %v2820 = vld [vmem:[%s2809 + $0x50] sm:$0xff]
    %v2821 = vld [vmem:[%s2809 + $0x58] sm:$0xff]
    %v2822 = vld [vmem:[%s2809 + $0x60] sm:$0xff]
    %v2823 = vld [vmem:[%s2809 + $0x68] sm:$0xff]
    %v2824 = vld [vmem:[%s2809 + $0x70] sm:$0xff]
    %v2825 = vld [vmem:[%s2809 + $0x78] sm:$0xff]
    %2826 = vmatprep.subr.mxu0 0.0
    %2827 = vmatpush1.msra.mxu0 %v2810
    %2828 = vmatprep.subr.mxu0 0.0
    %2829 = vmatpush1.msra.mxu0 %v2811
    %2830 = vmatprep.subr.mxu0 0.0
    %2831 = vmatpush1.msra.mxu0 %v2812
    %2832 = vmatprep.subr.mxu0 0.0
    %2833 = vmatpush1.msra.mxu0 %v2813
    %2834 = vmatprep.subr.mxu0 0.0
    %2835 = vmatpush1.msra.mxu0 %v2814
    %2836 = vmatprep.subr.mxu0 0.0
    %2837 = vmatpush1.msra.mxu0 %v2815
    %2838 = vmatprep.subr.mxu0 0.0
    %2839 = vmatpush1.msra.mxu0 %v2816
    %2840 = vmatprep.subr.mxu0 0.0
    %2841 = vmatpush1.msra.mxu0 %v2817
    %2842 = vmatprep.subr.mxu0 0.0
    %2843 = vmatpush1.msra.mxu0 %v2818
    %2844 = vmatprep.subr.mxu0 0.0
    %2845 = vmatpush1.msra.mxu0 %v2819
    %2846 = vmatprep.subr.mxu0 0.0
    %2847 = vmatpush1.msra.mxu0 %v2820
    %2848 = vmatprep.subr.mxu0 0.0
    %2849 = vmatpush1.msra.mxu0 %v2821
    %2850 = vmatprep.subr.mxu0 0.0
    %2851 = vmatpush1.msra.mxu0 %v2822
    %2852 = vmatprep.subr.mxu0 0.0
    %2853 = vmatpush1.msra.mxu0 %v2823
    %2854 = vmatprep.subr.mxu0 0.0
    %2855 = vmatpush1.msra.mxu0 %v2824
    %2856 = vmatprep.subr.mxu0 0.0
    %2857 = vmatpush1.msra.mxu0 %v2825
    %2858 = vmatprep.subr.mxu0 0.0
    %2859 = vmatpush1.msra.mxu0 0.0
    %2860 = vmatprep.subr.mxu0 0.0
    %2861 = vmatpush1.msra.mxu0 0.0
    %2862 = vmatprep.subr.mxu0 0.0
    %2863 = vmatpush1.msra.mxu0 0.0
    %2864 = vmatprep.subr.mxu0 0.0
    %2865 = vmatpush1.msra.mxu0 0.0
    %2866 = vmatprep.subr.mxu0 0.0
    %2867 = vmatpush1.msra.mxu0 0.0
    %2868 = vmatprep.subr.mxu0 0.0
    %2869 = vmatpush1.msra.mxu0 0.0
    %2870 = vmatprep.subr.mxu0 0.0
    %2871 = vmatpush1.msra.mxu0 0.0
    %2872 = vmatprep.subr.mxu0 0.0
    %2873 = vmatpush1.msra.mxu0 0.0
    %2874 = vmatprep.subr.mxu0 0.0
    %2875 = vmatpush1.msra.mxu0 0.0
    %2876 = vmatprep.subr.mxu0 0.0
    %2877 = vmatpush1.msra.mxu0 0.0
    %2878 = vmatprep.subr.mxu0 0.0
    %2879 = vmatpush1.msra.mxu0 0.0
    %2880 = vmatprep.subr.mxu0 0.0
    %2881 = vmatpush1.msra.mxu0 0.0
    %2882 = vmatprep.subr.mxu0 0.0
    %2883 = vmatpush1.msra.mxu0 0.0
    %2884 = vmatprep.subr.mxu0 0.0
    %2885 = vmatpush1.msra.mxu0 0.0
    %2886 = vmatprep.subr.mxu0 0.0
    %2887 = vmatpush1.msra.mxu0 0.0
    %2888 = vmatprep.subr.mxu0 0.0
    %2889 = vmatpush1.msra.mxu0 0.0
    %2890 = vmatprep.mubr.f32.mxu0 0.0
    %2891 = vmatmul.mubr.f32.gmra.mrb[0].mxu0 %v2808
    %v2892 = vpop.f32.mrb[0].mxu0
    %v2893 = vadd.f32 0.0, %v2892
    %v2894 = vpop.f32.mrb[0].mxu0
    %2895 = vdwg.mxu0
    %v2896 = vadd.f32 %v2807, %v2893
    %v2897 = vld [vmem:[%s7] sm:$0x1]
    %v2899 = vlaneseq
    %v2900 = vshrl.u32 %v2899, 7
    %v2901 = vsub.s32 0, %v2900
    %v2902 = vrot.slane %v2897, %v2901
    %v2904 = vadd.f32 %v2896, %v2902
    %v2905 = vmax.f32 %v2904, 0.0
    %2906 = vst [vmem:[#allocation2] sm:$0x3] %v2905
    %v2907 = vld [vmem:[%s8] sm:$0xff]
    %v2908 = vld [vmem:[%s8 + $0x8] sm:$0xff]
    %v2909 = vld [vmem:[%s8 + $0x10] sm:$0xff]
    %v2910 = vld [vmem:[%s8 + $0x18] sm:$0xff]
    %v2911 = vld [vmem:[%s8 + $0x20] sm:$0xff]
    %v2912 = vld [vmem:[%s8 + $0x28] sm:$0xff]
    %v2913 = vld [vmem:[%s8 + $0x30] sm:$0xff]
    %v2914 = vld [vmem:[%s8 + $0x38] sm:$0xff]
    %v2915 = vld [vmem:[%s8 + $0x40] sm:$0xff]
    %v2916 = vld [vmem:[%s8 + $0x48] sm:$0xff]
    %v2917 = vld [vmem:[%s8 + $0x50] sm:$0xff]
    %v2918 = vld [vmem:[%s8 + $0x58] sm:$0xff]
    %v2919 = vld [vmem:[%s8 + $0x60] sm:$0xff]
    %v2920 = vld [vmem:[%s8 + $0x68] sm:$0xff]
    %v2921 = vld [vmem:[%s8 + $0x70] sm:$0xff]
    %v2922 = vld [vmem:[%s8 + $0x78] sm:$0xff]
    %v2923 = vld [vmem:[%s9] sm:$0x1]
    %v2925 = vlaneseq
    %v2926 = vshrl.u32 %v2925, 7
    %v2927 = vsub.s32 0, %v2926
    %v2928 = vrot.slane %v2923, %v2927
    %2930 = vmatprep.subr.mxu0 0.0
    %2931 = vmatpush1.msra.mxu0 %v2907
    %2932 = vmatprep.subr.mxu0 0.0
    %2933 = vmatpush1.msra.mxu0 %v2908
    %2934 = vmatprep.subr.mxu0 0.0
    %2935 = vmatpush1.msra.mxu0 %v2909
    %2936 = vmatprep.subr.mxu0 0.0
    %2937 = vmatpush1.msra.mxu0 %v2910
    %2938 = vmatprep.subr.mxu0 0.0
    %2939 = vmatpush1.msra.mxu0 %v2911
    %2940 = vmatprep.subr.mxu0 0.0
    %2941 = vmatpush1.msra.mxu0 %v2912
    %2942 = vmatprep.subr.mxu0 0.0
    %2943 = vmatpush1.msra.mxu0 %v2913
    %2944 = vmatprep.subr.mxu0 0.0
    %2945 = vmatpush1.msra.mxu0 %v2914
    %2946 = vmatprep.subr.mxu0 0.0
    %2947 = vmatpush1.msra.mxu0 %v2915
    %2948 = vmatprep.subr.mxu0 0.0
    %2949 = vmatpush1.msra.mxu0 %v2916
    %2950 = vmatprep.subr.mxu0 0.0
    %2951 = vmatpush1.msra.mxu0 %v2917
    %2952 = vmatprep.subr.mxu0 0.0
    %2953 = vmatpush1.msra.mxu0 %v2918
    %2954 = vmatprep.subr.mxu0 0.0
    %2955 = vmatpush1.msra.mxu0 %v2919
    %2956 = vmatprep.subr.mxu0 0.0
    %2957 = vmatpush1.msra.mxu0 %v2920
    %2958 = vmatprep.subr.mxu0 0.0
    %2959 = vmatpush1.msra.mxu0 %v2921
    %2960 = vmatprep.subr.mxu0 0.0
    %2961 = vmatpush1.msra.mxu0 %v2922
    %2962 = vmatprep.subr.mxu0 0.0
    %2963 = vmatpush1.msra.mxu0 0.0
    %2964 = vmatprep.subr.mxu0 0.0
    %2965 = vmatpush1.msra.mxu0 0.0
    %2966 = vmatprep.subr.mxu0 0.0
    %2967 = vmatpush1.msra.mxu0 0.0
    %2968 = vmatprep.subr.mxu0 0.0
    %2969 = vmatpush1.msra.mxu0 0.0
    %2970 = vmatprep.subr.mxu0 0.0
    %2971 = vmatpush1.msra.mxu0 0.0
    %2972 = vmatprep.subr.mxu0 0.0
    %2973 = vmatpush1.msra.mxu0 0.0
    %2974 = vmatprep.subr.mxu0 0.0
    %2975 = vmatpush1.msra.mxu0 0.0
    %2976 = vmatprep.subr.mxu0 0.0
    %2977 = vmatpush1.msra.mxu0 0.0
    %2978 = vmatprep.subr.mxu0 0.0
    %2979 = vmatpush1.msra.mxu0 0.0
    %2980 = vmatprep.subr.mxu0 0.0
    %2981 = vmatpush1.msra.mxu0 0.0
    %2982 = vmatprep.subr.mxu0 0.0
    %2983 = vmatpush1.msra.mxu0 0.0
    %2984 = vmatprep.subr.mxu0 0.0
    %2985 = vmatpush1.msra.mxu0 0.0
    %2986 = vmatprep.subr.mxu0 0.0
    %2987 = vmatpush1.msra.mxu0 0.0
    %2988 = vmatprep.subr.mxu0 0.0
    %2989 = vmatpush1.msra.mxu0 0.0
    %2990 = vmatprep.subr.mxu0 0.0
    %2991 = vmatpush1.msra.mxu0 0.0
    %2992 = vmatprep.subr.mxu0 0.0
    %2993 = vmatpush1.msra.mxu0 0.0
    %2994 = vmatprep.mubr.f32.mxu0 0.0
    %2995 = vmatmul.mubr.f32.gmra.mrb[0].mxu0 %v2905
    %v2996 = vpop.f32.mrb[0].mxu0
    %v2997 = vadd.f32 %v2928, %v2996
    %v2998 = vpop.f32.mrb[0].mxu0
    %2999 = vdwg.mxu0
    %v3000 = vmax.f32 %v2997, 0.0
    %3001 = vst [vmem:[#allocation4] sm:$0x3] %v3000
    %v3002 = vld [vmem:[%s10] sm:$0xff]
    %v3003 = vld [vmem:[%s10 + $0x8] sm:$0xff]
    %v3004 = vld [vmem:[%s10 + $0x10] sm:$0xff]
    %v3005 = vld [vmem:[%s10 + $0x18] sm:$0xff]
    %v3006 = vld [vmem:[%s10 + $0x20] sm:$0xff]
    %v3007 = vld [vmem:[%s10 + $0x28] sm:$0xff]
    %v3008 = vld [vmem:[%s10 + $0x30] sm:$0xff]
    %v3009 = vld [vmem:[%s10 + $0x38] sm:$0xff]
    %v3010 = vld [vmem:[%s10 + $0x40] sm:$0xff]
    %v3011 = vld [vmem:[%s10 + $0x48] sm:$0xff]
    %v3012 = vld [vmem:[%s10 + $0x50] sm:$0xff]
    %v3013 = vld [vmem:[%s10 + $0x58] sm:$0xff]
    %v3014 = vld [vmem:[%s10 + $0x60] sm:$0xff]
    %v3015 = vld [vmem:[%s10 + $0x68] sm:$0xff]
    %v3016 = vld [vmem:[%s10 + $0x70] sm:$0xff]
    %v3017 = vld [vmem:[%s10 + $0x78] sm:$0xff]
    %v3018 = vld [vmem:[%s11] sm:$0x1]
    %v3020 = vlaneseq
    %v3021 = vshrl.u32 %v3020, 7
    %v3022 = vsub.s32 0, %v3021
    %v3023 = vrot.slane %v3018, %v3022
    %3025 = vmatprep.subr.mxu0 0.0
    %3026 = vmatpush1.msra.mxu0 %v3002
    %3027 = vmatprep.subr.mxu0 0.0
    %3028 = vmatpush1.msra.mxu0 %v3003
    %3029 = vmatprep.subr.mxu0 0.0
    %3030 = vmatpush1.msra.mxu0 %v3004
    %3031 = vmatprep.subr.mxu0 0.0
    %3032 = vmatpush1.msra.mxu0 %v3005
    %3033 = vmatprep.subr.mxu0 0.0
    %3034 = vmatpush1.msra.mxu0 %v3006
    %3035 = vmatprep.subr.mxu0 0.0
    %3036 = vmatpush1.msra.mxu0 %v3007
    %3037 = vmatprep.subr.mxu0 0.0
    %3038 = vmatpush1.msra.mxu0 %v3008
    %3039 = vmatprep.subr.mxu0 0.0
    %3040 = vmatpush1.msra.mxu0 %v3009
    %3041 = vmatprep.subr.mxu0 0.0
    %3042 = vmatpush1.msra.mxu0 %v3010
    %3043 = vmatprep.subr.mxu0 0.0
    %3044 = vmatpush1.msra.mxu0 %v3011
    %3045 = vmatprep.subr.mxu0 0.0
    %3046 = vmatpush1.msra.mxu0 %v3012
    %3047 = vmatprep.subr.mxu0 0.0
    %3048 = vmatpush1.msra.mxu0 %v3013
    %3049 = vmatprep.subr.mxu0 0.0
    %3050 = vmatpush1.msra.mxu0 %v3014
    %3051 = vmatprep.subr.mxu0 0.0
    %3052 = vmatpush1.msra.mxu0 %v3015
    %3053 = vmatprep.subr.mxu0 0.0
    %3054 = vmatpush1.msra.mxu0 %v3016
    %3055 = vmatprep.subr.mxu0 0.0
    %3056 = vmatpush1.msra.mxu0 %v3017
    %3057 = vmatprep.subr.mxu0 0.0
    %3058 = vmatpush1.msra.mxu0 0.0
    %3059 = vmatprep.subr.mxu0 0.0
    %3060 = vmatpush1.msra.mxu0 0.0
    %3061 = vmatprep.subr.mxu0 0.0
    %3062 = vmatpush1.msra.mxu0 0.0
    %3063 = vmatprep.subr.mxu0 0.0
    %3064 = vmatpush1.msra.mxu0 0.0
    %3065 = vmatprep.subr.mxu0 0.0
    %3066 = vmatpush1.msra.mxu0 0.0
    %3067 = vmatprep.subr.mxu0 0.0
    %3068 = vmatpush1.msra.mxu0 0.0
    %3069 = vmatprep.subr.mxu0 0.0
    %3070 = vmatpush1.msra.mxu0 0.0
    %3071 = vmatprep.subr.mxu0 0.0
    %3072 = vmatpush1.msra.mxu0 0.0
    %3073 = vmatprep.subr.mxu0 0.0
    %3074 = vmatpush1.msra.mxu0 0.0
    %3075 = vmatprep.subr.mxu0 0.0
    %3076 = vmatpush1.msra.mxu0 0.0
    %3077 = vmatprep.subr.mxu0 0.0
    %3078 = vmatpush1.msra.mxu0 0.0
    %3079 = vmatprep.subr.mxu0 0.0
    %3080 = vmatpush1.msra.mxu0 0.0
    %3081 = vmatprep.subr.mxu0 0.0
    %3082 = vmatpush1.msra.mxu0 0.0
    %3083 = vmatprep.subr.mxu0 0.0
    %3084 = vmatpush1.msra.mxu0 0.0
    %3085 = vmatprep.subr.mxu0 0.0
    %3086 = vmatpush1.msra.mxu0 0.0
    %3087 = vmatprep.subr.mxu0 0.0
    %3088 = vmatpush1.msra.mxu0 0.0
    %3089 = vmatprep.mubr.f32.mxu0 0.0
    %3090 = vmatmul.mubr.f32.gmra.mrb[0].mxu0 %v3000
    %v3091 = vpop.f32.mrb[0].mxu0
    %v3092 = vadd.f32 %v3023, %v3091
    %v3093 = vpop.f32.mrb[0].mxu0
    %3094 = vdwg.mxu0
    %3095 = vst [vmem:[%s15] sm:$0x3] %v3092
    %v3096 = vlaneseq
    %v3097 = vand.u32 %v3096, 127
    %vm3098 = vcmp.lt.s32.totalorder %v3097, 10
    %v3099 = vsel %vm3098, %v3092, -1e+30
    %vm3100 = vcmask 1041408
    %v3101 = vsel %vm3100, %v3099, -inf
    %3102 = vmax.xlane.f32.xlu0 %v3101
    %v3103 = vpop.xlane.xlu0 %3102
    %v3104 = vsub.f32 %v3092, %v3103
    %v3105 = vmul.f32 %v3104, 1.442695
    %v3106 = vpow.pop %v3105
    %v3107 = vsel %vm3098, %v3106, 0.0
    %v3108 = vsel %vm3100, %v3107, 0.0
    %3109 = vadd.xlane.f32.xlu0 %v3108
    %v3110 = vpop.xlane.xlu0 %3109
    %v3111 = vlog2.pop %v3110
    %v3112 = vmul.f32 %v3111, 0.6931472
    %v3113 = vsub.f32 %v3104, %v3112
    %3114 = vst [vmem:[#allocation6] sm:$0x3] %v3113
    // Predicated region
    $region50: #{lenet5_forward.3} parent=1 // pred_check
      _
    $region51: #{lenet5_forward.3} parent=1 // pred_check_branch
      %3116 = sbr.rel (0) target = $region53
    $region52: #{lenet5_forward.3} parent=1 // pred_region
      _
    $region53: #{lenet5_forward.3} parent=1 // pred_fallthru
      _
    // Predicated region
    $region54: #{lenet5_forward.3} parent=1 // pred_check
      _
    $region55: #{lenet5_forward.3} parent=1 // pred_check_branch
      %3118 = sbr.rel (0) target = $region57
    $region56: #{lenet5_forward.3} parent=1 // pred_region
      %s3120 = ssub.s32 32, 32
      %3121 = vsyncadd [#allocation3], %s3120
      %s3123 = sshll.u32 [#allocation2], 4
      %s3124 = int_to_ptr.vmem [resolvable:$true] %s3123
      %3126 = dma.vmem_to_hbm [thread:$0]  %s3124, 32, %s13, [#allocation3]
    $region57: #{lenet5_forward.3} parent=1 // pred_fallthru
      _
    // Predicated region
    $region58: #{lenet5_forward.3} parent=1 // pred_check
      _
    $region59: #{lenet5_forward.3} parent=1 // pred_check_branch
      %3128 = sbr.rel (0) target = $region61
    $region60: #{lenet5_forward.3} parent=1 // pred_region
      %s3130 = ssub.s32 32, 32
      %3131 = vsyncadd [#allocation5], %s3130
      %s3133 = sshll.u32 [#allocation4], 4
      %s3134 = int_to_ptr.vmem [resolvable:$true] %s3133
      %3136 = dma.vmem_to_hbm [thread:$0]  %s3134, 32, %s14, [#allocation5]
    $region61: #{lenet5_forward.3} parent=1 // pred_fallthru
      _
    // Predicated region
    $region62: #{lenet5_forward.3} parent=1 // pred_check
      _
    $region63: #{lenet5_forward.3} parent=1 // pred_check_branch
      %3138 = sbr.rel (0) target = $region65
    $region64: #{lenet5_forward.3} parent=1 // pred_region
      _
    $region65: #{lenet5_forward.3} parent=1 // pred_fallthru
      _
    // Predicated region
    $region66: #{lenet5_forward.3} parent=1 // pred_check
      _
    $region67: #{lenet5_forward.3} parent=1 // pred_check_branch
      %3140 = sbr.rel (0) target = $region69
    $region68: #{lenet5_forward.3} parent=1 // pred_region
      %s3142 = ssub.s32 32, 32
      %3143 = vsyncadd [#allocation5], %s3142
      %s3145 = sshll.u32 [#allocation6], 4
      %s3146 = int_to_ptr.vmem [resolvable:$true] %s3145
      %3148 = dma.vmem_to_hbm [thread:$0]  %s3146, 32, %s16, [#allocation5]
    $region69: #{lenet5_forward.3} parent=1 // pred_fallthru
      _
    // Predicated region
    $region70: #{lenet5_forward.3} parent=1 // pred_check
      _
    $region71: #{lenet5_forward.3} parent=1 // pred_check_branch
      %3150 = sbr.rel (0) target = $region73
    $region72: #{lenet5_forward.3} parent=1 // pred_region
      _
    $region73: #{lenet5_forward.3} parent=1 // pred_fallthru
      _
    // Predicated region
    $region74: #{lenet5_forward.3} parent=1 // pred_check
      _
    $region75: #{lenet5_forward.3} parent=1 // pred_check_branch
      %3152 = sbr.rel (0) target = $region77
    $region76: #{lenet5_forward.3} parent=1 // pred_region
      %3153 = dma.done [#allocation3], 32
    $region77: #{lenet5_forward.3} parent=1 // pred_fallthru
      _
    // Predicated region
    $region78: #{lenet5_forward.3} parent=1 // pred_check
      _
    $region79: #{lenet5_forward.3} parent=1 // pred_check_branch
      %3155 = sbr.rel (0) target = $region81
    $region80: #{lenet5_forward.3} parent=1 // pred_region
      %3156 = dma.done [#allocation5], 32
    $region81: #{lenet5_forward.3} parent=1 // pred_fallthru
      _
    // Predicated region
    $region82: #{lenet5_forward.3} parent=1 // pred_check
      _
    $region83: #{lenet5_forward.3} parent=1 // pred_check_branch
      %3158 = sbr.rel (0) target = $region85
    $region84: #{lenet5_forward.3} parent=1 // pred_region
      _
    $region85: #{lenet5_forward.3} parent=1 // pred_fallthru
      _
    // Predicated region
    $region86: #{lenet5_forward.3} parent=1 // pred_check
      _
    $region87: #{lenet5_forward.3} parent=1 // pred_check_branch
      %3160 = sbr.rel (0) target = $region89
    $region88: #{lenet5_forward.3} parent=1 // pred_region
      %3161 = dma.done [#allocation5], 32
    $region89: #{lenet5_forward.3} parent=1 // pred_fallthru
      _
    %3162 = vsyncpa [#allocation3], 1
    %3163 = vsyncpa [#allocation5], 1

</llo_original>
